<compile_context>
chip_gen: v5e
topology: v5e:2x2
jax: 0.10.0
libtpu: 0.0.40
codegen_flags: <defaults>
</compile_context>

<pallas_src>
import jax
import jax.numpy as jnp
from jax.experimental import pallas as pl
from jax.experimental.pallas import tpu as pltpu

INPUT_SIZE = 8
HIDDEN = 100
HP = 128            # HIDDEN padded to native lane width
STATS = 31
T = 8
B = 4
N_OUT = 14
BN_EPS = 1e-5


# ----------------------------------------------------------------------------
# Single fused kernel: LSTM (unrolled) -> bn0 -> MLP -> softmax.
# No grid; every argument is a full-array VMEM block.
# ----------------------------------------------------------------------------
def net_kernel(len_ref, x_ref, stats_ref,
               wih_ref, whh_ref, bg_ref, s0_ref, t0_ref,
               w1h_ref, w1s_ref, b1_ref, s1_ref, t1_ref,
               w2_ref, b2_ref, s2_ref, t2_ref,
               w3_ref, b3_ref, s3_ref, t3_ref,
               w4_ref, b4_ref, s4_ref, t4_ref,
               w5_ref, b5_ref,
               out_ref):
    f32 = jnp.float32
    bf16 = jnp.bfloat16

    # --- input projection hoisted out of the recurrence: one MXU pass ------
    # x_ref is (T*B, INPUT_SIZE); wih is (INPUT_SIZE, 4*HP) with each gate in
    # an aligned 128-lane block. bg already folds b_ih + b_hh.
    xp = (jnp.dot(x_ref[...].astype(bf16), wih_ref[...],
                  preferred_element_type=f32)
          + bg_ref[...])                                      # (T*B, 4*HP)

    whh = whh_ref[...]                                        # (HP, 4*HP) bf16
    lens = len_ref[...]                                       # (B, 1) int32

    h = jnp.zeros((B, HP), f32)
    c = jnp.zeros((B, HP), f32)

    # --- LSTM recurrence, fully unrolled (T is a small static constant) ----
    for t in range(T):
        gates = xp[t * B:(t + 1) * B, :] + jnp.dot(
            h.astype(bf16), whh, preferred_element_type=f32)  # (B, 4*HP)
        i = jax.nn.sigmoid(gates[:, 0 * HP:1 * HP])
        f = jax.nn.sigmoid(gates[:, 1 * HP:2 * HP])
        g = jnp.tanh(gates[:, 2 * HP:3 * HP])
        o = jax.nn.sigmoid(gates[:, 3 * HP:4 * HP])
        c_new = f * c + i * g
        h_new = o * jnp.tanh(c_new)
        # pack_padded_sequence semantics: freeze state once t >= lengths[b].
        valid = t < lens                                      # (B, 1) bool
        c = jnp.where(valid, c_new, c)
        h = jnp.where(valid, h_new, h)

    # --- bn0 (eval mode) folded to affine --------------------------------
    c_bn = c * s0_ref[...] + t0_ref[...]                      # (B, HP)

    def block(y, w_ref, b_ref, s_ref, t_ref):
        z = jnp.dot(y.astype(bf16), w_ref[...],
                    preferred_element_type=f32) + b_ref[...]
        z = jnp.maximum(z, 0.0)                               # ReLU
        return z * s_ref[...] + t_ref[...]                    # BN (eval) affine
        # (Dropout is identity in eval mode.)

    # --- lin1 with the concat eliminated: two dots into one accumulator ---
    y = (jnp.dot(c_bn.astype(bf16), w1h_ref[...], preferred_element_type=f32)
         + jnp.dot(stats_ref[...].astype(bf16), w1s_ref[...],
                   preferred_element_type=f32)
         + b1_ref[...])
    y = jnp.maximum(y, 0.0)
    y = y * s1_ref[...] + t1_ref[...]

    y = block(y, w2_ref, b2_ref, s2_ref, t2_ref)
    y = block(y, w3_ref, b3_ref, s3_ref, t3_ref)
    y = block(y, w4_ref, b4_ref, s4_ref, t4_ref)

    logits = jnp.dot(y.astype(bf16), w5_ref[...],
                     preferred_element_type=f32) + b5_ref[...]
    m = jnp.max(logits, axis=-1, keepdims=True)
    e = jnp.exp(logits - m)
    inv = pl.reciprocal(jnp.sum(e, axis=-1, keepdims=True), approx=True)
    out_ref[...] = e * inv


def run_net(lengths_2d, x_flat, stats, weight_args):
    args = [lengths_2d, x_flat, stats] + list(weight_args)
    vmem = pl.BlockSpec(memory_space=pltpu.MemorySpace.VMEM)
    return pl.pallas_call(
        net_kernel,
        out_shape=jax.ShapeDtypeStruct((B, N_OUT), jnp.float32),
        in_specs=[vmem] * len(args),
        out_specs=vmem,
    )(*args)


# ----------------------------------------------------------------------------
# Parameter construction (deterministic, PyTorch-style default init),
# laid out in the fused / 128-padded / bf16 form the kernel expects.
# ----------------------------------------------------------------------------
def _uniform(key, shape, k):
    return jax.random.uniform(key, shape, jnp.float32, -k, k)


def _bn_fold(dim, pad_to=None):
    # eval-mode BatchNorm1d (gamma=1, beta=0, running_mean=0, running_var=1)
    gamma = jnp.ones((dim,), jnp.float32)
    beta = jnp.zeros((dim,), jnp.float32)
    mean = jnp.zeros((dim,), jnp.float32)
    var = jnp.ones((dim,), jnp.float32)
    scale = gamma / jnp.sqrt(var + BN_EPS)
    shift = beta - mean * scale
    if pad_to is not None:
        scale = jnp.pad(scale, (0, pad_to - dim))
        shift = jnp.pad(shift, (0, pad_to - dim))
        dim = pad_to
    return scale.reshape(1, dim), shift.reshape(1, dim)


def make_params(key):
    keys = iter(jax.random.split(key, 16))
    p = {}

    # ---- LSTM (gate order i, f, g, o), k = 1/sqrt(hidden) -----------------
    k = 1.0 / jnp.sqrt(HIDDEN)
    w_ih = _uniform(next(keys), (4 * HIDDEN, INPUT_SIZE), k)
    w_hh = _uniform(next(keys), (4 * HIDDEN, HIDDEN), k)
    b_ih = _uniform(next(keys), (4 * HIDDEN,), k)
    b_hh = _uniform(next(keys), (4 * HIDDEN,), k)
    b = b_ih + b_hh

    wih_fused = jnp.zeros((INPUT_SIZE, 4 * HP), jnp.float32)
    whh_fused = jnp.zeros((HP, 4 * HP), jnp.float32)
    bg = jnp.zeros((1, 4 * HP), jnp.float32)
    for gi in range(4):
        src = slice(gi * HIDDEN, (gi + 1) * HIDDEN)
        dst = slice(gi * HP, gi * HP + HIDDEN)
        wih_fused = wih_fused.at[:, dst].set(w_ih[src].T)
        whh_fused = whh_fused.at[:HIDDEN, dst].set(w_hh[src].T)
        bg = bg.at[0, dst].set(b[src])
    p["wih"] = wih_fused.astype(jnp.bfloat16)
    p["whh"] = whh_fused.astype(jnp.bfloat16)
    p["bg"] = bg

    # bn0 folded, padded to HP lanes (padded lanes scale/shift = 0)
    p["s0"], p["t0"] = _bn_fold(HIDDEN, pad_to=HP)

    # ---- lin1 split into hidden part (padded) and stats part --------------
    k1 = 1.0 / jnp.sqrt(HIDDEN + STATS)
    w1 = _uniform(next(keys), (HIDDEN + STATS, 512), k1)
    b1 = _uniform(next(keys), (512,), k1)
    w1h = jnp.zeros((HP, 512), jnp.float32).at[:HIDDEN].set(w1[:HIDDEN])
    p["w1h"] = w1h.astype(jnp.bfloat16)
    p["w1s"] = w1[HIDDEN:].astype(jnp.bfloat16)
    p["b1"] = b1.reshape(1, 512)
    p["s1"], p["t1"] = _bn_fold(512)

    # ---- remaining Linear layers (stored transposed for x @ W) ------------
    dims = [(512, 256), (256, 128), (128, 64), (64, N_OUT)]
    for li, (din, dout) in enumerate(dims, start=2):
        k = 1.0 / jnp.sqrt(din)
        p[f"w{li}"] = _uniform(next(keys), (din, dout), k).astype(jnp.bfloat16)
        p[f"b{li}"] = _uniform(next(keys), (dout,), k).reshape(1, dout)
        if li <= 4:
            p[f"s{li}"], p[f"t{li}"] = _bn_fold(dout)
    return p


# ----------------------------------------------------------------------------
# Full forward pass (single fused pallas_call).
# ----------------------------------------------------------------------------
@jax.jit
def net_forward(stats, time_series, lengths, p):
    # (B, T, I) batch_first -> time-major flat (T*B, I) for the hoisted
    # input projection (tiny XLA transpose/reshape, done once before the call).
    x_flat = jnp.transpose(time_series, (1, 0, 2)).reshape(T * B, INPUT_SIZE)
    lengths_2d = lengths.astype(jnp.int32).reshape(B, 1)

    weight_args = [
        p["wih"], p["whh"], p["bg"], p["s0"], p["t0"],
        p["w1h"], p["w1s"], p["b1"], p["s1"], p["t1"],
        p["w2"], p["b2"], p["s2"], p["t2"],
        p["w3"], p["b3"], p["s3"], p["t3"],
        p["w4"], p["b4"], p["s4"], p["t4"],
        p["w5"], p["b5"],
    ]
    return run_net(lengths_2d, x_flat, stats, weight_args)   # (B, 14) softmax


if __name__ == "__main__":
    key = jax.random.PRNGKey(0)
    kp, ks, kt = jax.random.split(key, 3)

    params = make_params(kp)
    stats = jax.random.normal(ks, (B, STATS), jnp.float32)
    time_series = jax.random.normal(kt, (B, T, INPUT_SIZE), jnp.float32)
    # pack_padded_sequence requires descending lengths (enforce_sorted=True).
    lengths = jnp.array([8, 7, 5, 3], dtype=jnp.int32)

    out = net_forward(stats, time_series, lengths, params)
    out = jax.block_until_ready(out)
    assert out.shape == (B, N_OUT)
    assert bool(jnp.all(jnp.isfinite(out)))
    assert bool(jnp.all(out >= 0.0))
    # rows should sum to ~1 (softmax); tolerance loosened for bf16 weights +
    # approximate EUP reciprocal in the softmax normalization.
    assert bool(jnp.allclose(jnp.sum(out, axis=-1), 1.0, atol=1e-2))
    print("KERNEL_OK")
</pallas_src>

<mosaic_0001>
module attributes {stable_mosaic.version = 11 : i64} {
  func.func @net_kernel(%arg0: memref<4x1xi32, #tpu.memory_space<vmem>>, %arg1: memref<32x8xf32, #tpu.memory_space<vmem>>, %arg2: memref<4x31xf32, #tpu.memory_space<vmem>>, %arg3: memref<8x512xbf16, #tpu.memory_space<vmem>>, %arg4: memref<128x512xbf16, #tpu.memory_space<vmem>>, %arg5: memref<1x512xf32, #tpu.memory_space<vmem>>, %arg6: memref<1x128xf32, #tpu.memory_space<vmem>>, %arg7: memref<1x128xf32, #tpu.memory_space<vmem>>, %arg8: memref<128x512xbf16, #tpu.memory_space<vmem>>, %arg9: memref<31x512xbf16, #tpu.memory_space<vmem>>, %arg10: memref<1x512xf32, #tpu.memory_space<vmem>>, %arg11: memref<1x512xf32, #tpu.memory_space<vmem>>, %arg12: memref<1x512xf32, #tpu.memory_space<vmem>>, %arg13: memref<512x256xbf16, #tpu.memory_space<vmem>>, %arg14: memref<1x256xf32, #tpu.memory_space<vmem>>, %arg15: memref<1x256xf32, #tpu.memory_space<vmem>>, %arg16: memref<1x256xf32, #tpu.memory_space<vmem>>, %arg17: memref<256x128xbf16, #tpu.memory_space<vmem>>, %arg18: memref<1x128xf32, #tpu.memory_space<vmem>>, %arg19: memref<1x128xf32, #tpu.memory_space<vmem>>, %arg20: memref<1x128xf32, #tpu.memory_space<vmem>>, %arg21: memref<128x64xbf16, #tpu.memory_space<vmem>>, %arg22: memref<1x64xf32, #tpu.memory_space<vmem>>, %arg23: memref<1x64xf32, #tpu.memory_space<vmem>>, %arg24: memref<1x64xf32, #tpu.memory_space<vmem>>, %arg25: memref<64x14xbf16, #tpu.memory_space<vmem>>, %arg26: memref<1x14xf32, #tpu.memory_space<vmem>>, %arg27: memref<4x14xf32, #tpu.memory_space<vmem>>) attributes {dimension_semantics = [], scalar_prefetch = 0 : i64, scratch_operands = 0 : i64, tpu.core_type = #tpu.core_type<tc>} {
    %c0 = arith.constant 0 : index
    %c0_0 = arith.constant 0 : index
    %0 = vector.load %arg1[%c0, %c0_0] : memref<32x8xf32, #tpu.memory_space<vmem>>, vector<32x8xf32>
    %1 = arith.truncf %0 : vector<32x8xf32> to vector<32x8xbf16>
    %c0_1 = arith.constant 0 : index
    %c0_2 = arith.constant 0 : index
    %2 = vector.load %arg3[%c0_1, %c0_2] : memref<8x512xbf16, #tpu.memory_space<vmem>>, vector<8x512xbf16>
    %cst = arith.constant dense<0.000000e+00> : vector<32x512xf32>
    %3 = tpu.matmul %1, %2, %cst {dimension_numbers = #tpu.dot_dimension_numbers<[1], [0], [0], [1], [0, 0, 1, 1], [], []>} : vector<32x8xbf16>, vector<8x512xbf16>, vector<32x512xf32> -> vector<32x512xf32>
    %c0_3 = arith.constant 0 : index
    %c0_4 = arith.constant 0 : index
    %4 = vector.load %arg5[%c0_3, %c0_4] : memref<1x512xf32, #tpu.memory_space<vmem>>, vector<1x512xf32>
    %5 = vector.broadcast %4 : vector<1x512xf32> to vector<32x512xf32>
    %6 = arith.addf %3, %5 : vector<32x512xf32>
    %c0_5 = arith.constant 0 : index
    %c0_6 = arith.constant 0 : index
    %7 = vector.load %arg4[%c0_5, %c0_6] : memref<128x512xbf16, #tpu.memory_space<vmem>>, vector<128x512xbf16>
    %c0_7 = arith.constant 0 : index
    %c0_8 = arith.constant 0 : index
    %8 = vector.load %arg0[%c0_7, %c0_8] : memref<4x1xi32, #tpu.memory_space<vmem>>, vector<4x1xi32>
    %cst_9 = arith.constant 0.000000e+00 : f32
    %9 = vector.broadcast %cst_9 : f32 to vector<4x128xf32>
    %cst_10 = arith.constant 0.000000e+00 : f32
    %10 = vector.broadcast %cst_10 : f32 to vector<4x128xf32>
    %11 = vector.extract_strided_slice %6 {offsets = [0, 0], sizes = [4, 512], strides = [1, 1]} : vector<32x512xf32> to vector<4x512xf32>
    %12 = arith.truncf %9 : vector<4x128xf32> to vector<4x128xbf16>
    %cst_11 = arith.constant dense<0.000000e+00> : vector<4x512xf32>
    %13 = tpu.matmul %12, %7, %cst_11 {dimension_numbers = #tpu.dot_dimension_numbers<[1], [0], [0], [1], [0, 0, 1, 1], [], []>} : vector<4x128xbf16>, vector<128x512xbf16>, vector<4x512xf32> -> vector<4x512xf32>
    %14 = arith.addf %11, %13 : vector<4x512xf32>
    %15 = vector.extract_strided_slice %14 {offsets = [0, 0], sizes = [4, 128], strides = [1, 1]} : vector<4x512xf32> to vector<4x128xf32>
    %16 = arith.negf %15 : vector<4x128xf32>
    %17 = math.exp %16 : vector<4x128xf32>
    %cst_12 = arith.constant 1.000000e+00 : f32
    %18 = vector.broadcast %cst_12 : f32 to vector<4x128xf32>
    %19 = arith.addf %18, %17 : vector<4x128xf32>
    %20 = arith.divf %18, %19 : vector<4x128xf32>
    %21 = vector.extract_strided_slice %14 {offsets = [0, 128], sizes = [4, 128], strides = [1, 1]} : vector<4x512xf32> to vector<4x128xf32>
    %22 = arith.negf %21 : vector<4x128xf32>
    %23 = math.exp %22 : vector<4x128xf32>
    %cst_13 = arith.constant 1.000000e+00 : f32
    %24 = vector.broadcast %cst_13 : f32 to vector<4x128xf32>
    %25 = arith.addf %24, %23 : vector<4x128xf32>
    %26 = arith.divf %24, %25 : vector<4x128xf32>
    %27 = vector.extract_strided_slice %14 {offsets = [0, 256], sizes = [4, 128], strides = [1, 1]} : vector<4x512xf32> to vector<4x128xf32>
    %28 = math.tanh %27 : vector<4x128xf32>
    %29 = vector.extract_strided_slice %14 {offsets = [0, 384], sizes = [4, 128], strides = [1, 1]} : vector<4x512xf32> to vector<4x128xf32>
    %30 = arith.negf %29 : vector<4x128xf32>
    %31 = math.exp %30 : vector<4x128xf32>
    %cst_14 = arith.constant 1.000000e+00 : f32
    %32 = vector.broadcast %cst_14 : f32 to vector<4x128xf32>
    %33 = arith.addf %32, %31 : vector<4x128xf32>
    %34 = arith.divf %32, %33 : vector<4x128xf32>
    %35 = arith.mulf %26, %10 : vector<4x128xf32>
    %36 = arith.mulf %20, %28 : vector<4x128xf32>
    %37 = arith.addf %35, %36 : vector<4x128xf32>
    %38 = math.tanh %37 : vector<4x128xf32>
    %39 = arith.mulf %34, %38 : vector<4x128xf32>
    %c0_i32 = arith.constant 0 : i32
    %40 = vector.broadcast %c0_i32 : i32 to vector<4x1xi32>
    %41 = arith.cmpi sgt, %8, %40 : vector<4x1xi32>
    %42 = vector.shape_cast %41 : vector<4x1xi1> to vector<4x1xi1>
    %43 = vector.broadcast %42 : vector<4x1xi1> to vector<4x128xi1>
    %44 = arith.select %43, %37, %10 : vector<4x128xi1>, vector<4x128xf32>
    %45 = vector.shape_cast %41 : vector<4x1xi1> to vector<4x1xi1>
    %46 = vector.broadcast %45 : vector<4x1xi1> to vector<4x128xi1>
    %47 = arith.select %46, %39, %9 : vector<4x128xi1>, vector<4x128xf32>
    %48 = vector.extract_strided_slice %6 {offsets = [4, 0], sizes = [4, 512], strides = [1, 1]} : vector<32x512xf32> to vector<4x512xf32>
    %49 = arith.truncf %47 : vector<4x128xf32> to vector<4x128xbf16>
    %cst_15 = arith.constant dense<0.000000e+00> : vector<4x512xf32>
    %50 = tpu.matmul %49, %7, %cst_15 {dimension_numbers = #tpu.dot_dimension_numbers<[1], [0], [0], [1], [0, 0, 1, 1], [], []>} : vector<4x128xbf16>, vector<128x512xbf16>, vector<4x512xf32> -> vector<4x512xf32>
    %51 = arith.addf %48, %50 : vector<4x512xf32>
    %52 = vector.extract_strided_slice %51 {offsets = [0, 0], sizes = [4, 128], strides = [1, 1]} : vector<4x512xf32> to vector<4x128xf32>
    %53 = arith.negf %52 : vector<4x128xf32>
    %54 = math.exp %53 : vector<4x128xf32>
    %cst_16 = arith.constant 1.000000e+00 : f32
    %55 = vector.broadcast %cst_16 : f32 to vector<4x128xf32>
    %56 = arith.addf %55, %54 : vector<4x128xf32>
    %57 = arith.divf %55, %56 : vector<4x128xf32>
    %58 = vector.extract_strided_slice %51 {offsets = [0, 128], sizes = [4, 128], strides = [1, 1]} : vector<4x512xf32> to vector<4x128xf32>
    %59 = arith.negf %58 : vector<4x128xf32>
    %60 = math.exp %59 : vector<4x128xf32>
    %cst_17 = arith.constant 1.000000e+00 : f32
    %61 = vector.broadcast %cst_17 : f32 to vector<4x128xf32>
    %62 = arith.addf %61, %60 : vector<4x128xf32>
    %63 = arith.divf %61, %62 : vector<4x128xf32>
    %64 = vector.extract_strided_slice %51 {offsets = [0, 256], sizes = [4, 128], strides = [1, 1]} : vector<4x512xf32> to vector<4x128xf32>
    %65 = math.tanh %64 : vector<4x128xf32>
    %66 = vector.extract_strided_slice %51 {offsets = [0, 384], sizes = [4, 128], strides = [1, 1]} : vector<4x512xf32> to vector<4x128xf32>
    %67 = arith.negf %66 : vector<4x128xf32>
    %68 = math.exp %67 : vector<4x128xf32>
    %cst_18 = arith.constant 1.000000e+00 : f32
    %69 = vector.broadcast %cst_18 : f32 to vector<4x128xf32>
    %70 = arith.addf %69, %68 : vector<4x128xf32>
    %71 = arith.divf %69, %70 : vector<4x128xf32>
    %72 = arith.mulf %63, %44 : vector<4x128xf32>
    %73 = arith.mulf %57, %65 : vector<4x128xf32>
    %74 = arith.addf %72, %73 : vector<4x128xf32>
    %75 = math.tanh %74 : vector<4x128xf32>
    %76 = arith.mulf %71, %75 : vector<4x128xf32>
    %c1_i32 = arith.constant 1 : i32
    %77 = vector.broadcast %c1_i32 : i32 to vector<4x1xi32>
    %78 = arith.cmpi sgt, %8, %77 : vector<4x1xi32>
    %79 = vector.shape_cast %78 : vector<4x1xi1> to vector<4x1xi1>
    %80 = vector.broadcast %79 : vector<4x1xi1> to vector<4x128xi1>
    %81 = arith.select %80, %74, %44 : vector<4x128xi1>, vector<4x128xf32>
    %82 = vector.shape_cast %78 : vector<4x1xi1> to vector<4x1xi1>
    %83 = vector.broadcast %82 : vector<4x1xi1> to vector<4x128xi1>
    %84 = arith.select %83, %76, %47 : vector<4x128xi1>, vector<4x128xf32>
    %85 = vector.extract_strided_slice %6 {offsets = [8, 0], sizes = [4, 512], strides = [1, 1]} : vector<32x512xf32> to vector<4x512xf32>
    %86 = arith.truncf %84 : vector<4x128xf32> to vector<4x128xbf16>
    %cst_19 = arith.constant dense<0.000000e+00> : vector<4x512xf32>
    %87 = tpu.matmul %86, %7, %cst_19 {dimension_numbers = #tpu.dot_dimension_numbers<[1], [0], [0], [1], [0, 0, 1, 1], [], []>} : vector<4x128xbf16>, vector<128x512xbf16>, vector<4x512xf32> -> vector<4x512xf32>
    %88 = arith.addf %85, %87 : vector<4x512xf32>
    %89 = vector.extract_strided_slice %88 {offsets = [0, 0], sizes = [4, 128], strides = [1, 1]} : vector<4x512xf32> to vector<4x128xf32>
    %90 = arith.negf %89 : vector<4x128xf32>
    %91 = math.exp %90 : vector<4x128xf32>
    %cst_20 = arith.constant 1.000000e+00 : f32
    %92 = vector.broadcast %cst_20 : f32 to vector<4x128xf32>
    %93 = arith.addf %92, %91 : vector<4x128xf32>
    %94 = arith.divf %92, %93 : vector<4x128xf32>
    %95 = vector.extract_strided_slice %88 {offsets = [0, 128], sizes = [4, 128], strides = [1, 1]} : vector<4x512xf32> to vector<4x128xf32>
    %96 = arith.negf %95 : vector<4x128xf32>
    %97 = math.exp %96 : vector<4x128xf32>
    %cst_21 = arith.constant 1.000000e+00 : f32
    %98 = vector.broadcast %cst_21 : f32 to vector<4x128xf32>
    %99 = arith.addf %98, %97 : vector<4x128xf32>
    %100 = arith.divf %98, %99 : vector<4x128xf32>
    %101 = vector.extract_strided_slice %88 {offsets = [0, 256], sizes = [4, 128], strides = [1, 1]} : vector<4x512xf32> to vector<4x128xf32>
    %102 = math.tanh %101 : vector<4x128xf32>
    %103 = vector.extract_strided_slice %88 {offsets = [0, 384], sizes = [4, 128], strides = [1, 1]} : vector<4x512xf32> to vector<4x128xf32>
    %104 = arith.negf %103 : vector<4x128xf32>
    %105 = math.exp %104 : vector<4x128xf32>
    %cst_22 = arith.constant 1.000000e+00 : f32
    %106 = vector.broadcast %cst_22 : f32 to vector<4x128xf32>
    %107 = arith.addf %106, %105 : vector<4x128xf32>
    %108 = arith.divf %106, %107 : vector<4x128xf32>
    %109 = arith.mulf %100, %81 : vector<4x128xf32>
    %110 = arith.mulf %94, %102 : vector<4x128xf32>
    %111 = arith.addf %109, %110 : vector<4x128xf32>
    %112 = math.tanh %111 : vector<4x128xf32>
    %113 = arith.mulf %108, %112 : vector<4x128xf32>
    %c2_i32 = arith.constant 2 : i32
    %114 = vector.broadcast %c2_i32 : i32 to vector<4x1xi32>
    %115 = arith.cmpi sgt, %8, %114 : vector<4x1xi32>
    %116 = vector.shape_cast %115 : vector<4x1xi1> to vector<4x1xi1>
    %117 = vector.broadcast %116 : vector<4x1xi1> to vector<4x128xi1>
    %118 = arith.select %117, %111, %81 : vector<4x128xi1>, vector<4x128xf32>
    %119 = vector.shape_cast %115 : vector<4x1xi1> to vector<4x1xi1>
    %120 = vector.broadcast %119 : vector<4x1xi1> to vector<4x128xi1>
    %121 = arith.select %120, %113, %84 : vector<4x128xi1>, vector<4x128xf32>
    %122 = vector.extract_strided_slice %6 {offsets = [12, 0], sizes = [4, 512], strides = [1, 1]} : vector<32x512xf32> to vector<4x512xf32>
    %123 = arith.truncf %121 : vector<4x128xf32> to vector<4x128xbf16>
    %cst_23 = arith.constant dense<0.000000e+00> : vector<4x512xf32>
    %124 = tpu.matmul %123, %7, %cst_23 {dimension_numbers = #tpu.dot_dimension_numbers<[1], [0], [0], [1], [0, 0, 1, 1], [], []>} : vector<4x128xbf16>, vector<128x512xbf16>, vector<4x512xf32> -> vector<4x512xf32>
    %125 = arith.addf %122, %124 : vector<4x512xf32>
    %126 = vector.extract_strided_slice %125 {offsets = [0, 0], sizes = [4, 128], strides = [1, 1]} : vector<4x512xf32> to vector<4x128xf32>
    %127 = arith.negf %126 : vector<4x128xf32>
    %128 = math.exp %127 : vector<4x128xf32>
    %cst_24 = arith.constant 1.000000e+00 : f32
    %129 = vector.broadcast %cst_24 : f32 to vector<4x128xf32>
    %130 = arith.addf %129, %128 : vector<4x128xf32>
    %131 = arith.divf %129, %130 : vector<4x128xf32>
    %132 = vector.extract_strided_slice %125 {offsets = [0, 128], sizes = [4, 128], strides = [1, 1]} : vector<4x512xf32> to vector<4x128xf32>
    %133 = arith.negf %132 : vector<4x128xf32>
    %134 = math.exp %133 : vector<4x128xf32>
    %cst_25 = arith.constant 1.000000e+00 : f32
    %135 = vector.broadcast %cst_25 : f32 to vector<4x128xf32>
    %136 = arith.addf %135, %134 : vector<4x128xf32>
    %137 = arith.divf %135, %136 : vector<4x128xf32>
    %138 = vector.extract_strided_slice %125 {offsets = [0, 256], sizes = [4, 128], strides = [1, 1]} : vector<4x512xf32> to vector<4x128xf32>
    %139 = math.tanh %138 : vector<4x128xf32>
    %140 = vector.extract_strided_slice %125 {offsets = [0, 384], sizes = [4, 128], strides = [1, 1]} : vector<4x512xf32> to vector<4x128xf32>
    %141 = arith.negf %140 : vector<4x128xf32>
    %142 = math.exp %141 : vector<4x128xf32>
    %cst_26 = arith.constant 1.000000e+00 : f32
    %143 = vector.broadcast %cst_26 : f32 to vector<4x128xf32>
    %144 = arith.addf %143, %142 : vector<4x128xf32>
    %145 = arith.divf %143, %144 : vector<4x128xf32>
    %146 = arith.mulf %137, %118 : vector<4x128xf32>
    %147 = arith.mulf %131, %139 : vector<4x128xf32>
    %148 = arith.addf %146, %147 : vector<4x128xf32>
    %149 = math.tanh %148 : vector<4x128xf32>
    %150 = arith.mulf %145, %149 : vector<4x128xf32>
    %c3_i32 = arith.constant 3 : i32
    %151 = vector.broadcast %c3_i32 : i32 to vector<4x1xi32>
    %152 = arith.cmpi sgt, %8, %151 : vector<4x1xi32>
    %153 = vector.shape_cast %152 : vector<4x1xi1> to vector<4x1xi1>
    %154 = vector.broadcast %153 : vector<4x1xi1> to vector<4x128xi1>
    %155 = arith.select %154, %148, %118 : vector<4x128xi1>, vector<4x128xf32>
    %156 = vector.shape_cast %152 : vector<4x1xi1> to vector<4x1xi1>
    %157 = vector.broadcast %156 : vector<4x1xi1> to vector<4x128xi1>
    %158 = arith.select %157, %150, %121 : vector<4x128xi1>, vector<4x128xf32>
    %159 = vector.extract_strided_slice %6 {offsets = [16, 0], sizes = [4, 512], strides = [1, 1]} : vector<32x512xf32> to vector<4x512xf32>
    %160 = arith.truncf %158 : vector<4x128xf32> to vector<4x128xbf16>
    %cst_27 = arith.constant dense<0.000000e+00> : vector<4x512xf32>
    %161 = tpu.matmul %160, %7, %cst_27 {dimension_numbers = #tpu.dot_dimension_numbers<[1], [0], [0], [1], [0, 0, 1, 1], [], []>} : vector<4x128xbf16>, vector<128x512xbf16>, vector<4x512xf32> -> vector<4x512xf32>
    %162 = arith.addf %159, %161 : vector<4x512xf32>
    %163 = vector.extract_strided_slice %162 {offsets = [0, 0], sizes = [4, 128], strides = [1, 1]} : vector<4x512xf32> to vector<4x128xf32>
    %164 = arith.negf %163 : vector<4x128xf32>
    %165 = math.exp %164 : vector<4x128xf32>
    %cst_28 = arith.constant 1.000000e+00 : f32
    %166 = vector.broadcast %cst_28 : f32 to vector<4x128xf32>
    %167 = arith.addf %166, %165 : vector<4x128xf32>
    %168 = arith.divf %166, %167 : vector<4x128xf32>
    %169 = vector.extract_strided_slice %162 {offsets = [0, 128], sizes = [4, 128], strides = [1, 1]} : vector<4x512xf32> to vector<4x128xf32>
    %170 = arith.negf %169 : vector<4x128xf32>
    %171 = math.exp %170 : vector<4x128xf32>
    %cst_29 = arith.constant 1.000000e+00 : f32
    %172 = vector.broadcast %cst_29 : f32 to vector<4x128xf32>
    %173 = arith.addf %172, %171 : vector<4x128xf32>
    %174 = arith.divf %172, %173 : vector<4x128xf32>
    %175 = vector.extract_strided_slice %162 {offsets = [0, 256], sizes = [4, 128], strides = [1, 1]} : vector<4x512xf32> to vector<4x128xf32>
    %176 = math.tanh %175 : vector<4x128xf32>
    %177 = vector.extract_strided_slice %162 {offsets = [0, 384], sizes = [4, 128], strides = [1, 1]} : vector<4x512xf32> to vector<4x128xf32>
    %178 = arith.negf %177 : vector<4x128xf32>
    %179 = math.exp %178 : vector<4x128xf32>
    %cst_30 = arith.constant 1.000000e+00 : f32
    %180 = vector.broadcast %cst_30 : f32 to vector<4x128xf32>
    %181 = arith.addf %180, %179 : vector<4x128xf32>
    %182 = arith.divf %180, %181 : vector<4x128xf32>
    %183 = arith.mulf %174, %155 : vector<4x128xf32>
    %184 = arith.mulf %168, %176 : vector<4x128xf32>
    %185 = arith.addf %183, %184 : vector<4x128xf32>
    %186 = math.tanh %185 : vector<4x128xf32>
    %187 = arith.mulf %182, %186 : vector<4x128xf32>
    %c4_i32 = arith.constant 4 : i32
    %188 = vector.broadcast %c4_i32 : i32 to vector<4x1xi32>
    %189 = arith.cmpi sgt, %8, %188 : vector<4x1xi32>
    %190 = vector.shape_cast %189 : vector<4x1xi1> to vector<4x1xi1>
    %191 = vector.broadcast %190 : vector<4x1xi1> to vector<4x128xi1>
    %192 = arith.select %191, %185, %155 : vector<4x128xi1>, vector<4x128xf32>
    %193 = vector.shape_cast %189 : vector<4x1xi1> to vector<4x1xi1>
    %194 = vector.broadcast %193 : vector<4x1xi1> to vector<4x128xi1>
    %195 = arith.select %194, %187, %158 : vector<4x128xi1>, vector<4x128xf32>
    %196 = vector.extract_strided_slice %6 {offsets = [20, 0], sizes = [4, 512], strides = [1, 1]} : vector<32x512xf32> to vector<4x512xf32>
    %197 = arith.truncf %195 : vector<4x128xf32> to vector<4x128xbf16>
    %cst_31 = arith.constant dense<0.000000e+00> : vector<4x512xf32>
    %198 = tpu.matmul %197, %7, %cst_31 {dimension_numbers = #tpu.dot_dimension_numbers<[1], [0], [0], [1], [0, 0, 1, 1], [], []>} : vector<4x128xbf16>, vector<128x512xbf16>, vector<4x512xf32> -> vector<4x512xf32>
    %199 = arith.addf %196, %198 : vector<4x512xf32>
    %200 = vector.extract_strided_slice %199 {offsets = [0, 0], sizes = [4, 128], strides = [1, 1]} : vector<4x512xf32> to vector<4x128xf32>
    %201 = arith.negf %200 : vector<4x128xf32>
    %202 = math.exp %201 : vector<4x128xf32>
    %cst_32 = arith.constant 1.000000e+00 : f32
    %203 = vector.broadcast %cst_32 : f32 to vector<4x128xf32>
    %204 = arith.addf %203, %202 : vector<4x128xf32>
    %205 = arith.divf %203, %204 : vector<4x128xf32>
    %206 = vector.extract_strided_slice %199 {offsets = [0, 128], sizes = [4, 128], strides = [1, 1]} : vector<4x512xf32> to vector<4x128xf32>
    %207 = arith.negf %206 : vector<4x128xf32>
    %208 = math.exp %207 : vector<4x128xf32>
    %cst_33 = arith.constant 1.000000e+00 : f32
    %209 = vector.broadcast %cst_33 : f32 to vector<4x128xf32>
    %210 = arith.addf %209, %208 : vector<4x128xf32>
    %211 = arith.divf %209, %210 : vector<4x128xf32>
    %212 = vector.extract_strided_slice %199 {offsets = [0, 256], sizes = [4, 128], strides = [1, 1]} : vector<4x512xf32> to vector<4x128xf32>
    %213 = math.tanh %212 : vector<4x128xf32>
    %214 = vector.extract_strided_slice %199 {offsets = [0, 384], sizes = [4, 128], strides = [1, 1]} : vector<4x512xf32> to vector<4x128xf32>
    %215 = arith.negf %214 : vector<4x128xf32>
    %216 = math.exp %215 : vector<4x128xf32>
    %cst_34 = arith.constant 1.000000e+00 : f32
    %217 = vector.broadcast %cst_34 : f32 to vector<4x128xf32>
    %218 = arith.addf %217, %216 : vector<4x128xf32>
    %219 = arith.divf %217, %218 : vector<4x128xf32>
    %220 = arith.mulf %211, %192 : vector<4x128xf32>
    %221 = arith.mulf %205, %213 : vector<4x128xf32>
    %222 = arith.addf %220, %221 : vector<4x128xf32>
    %223 = math.tanh %222 : vector<4x128xf32>
    %224 = arith.mulf %219, %223 : vector<4x128xf32>
    %c5_i32 = arith.constant 5 : i32
    %225 = vector.broadcast %c5_i32 : i32 to vector<4x1xi32>
    %226 = arith.cmpi sgt, %8, %225 : vector<4x1xi32>
    %227 = vector.shape_cast %226 : vector<4x1xi1> to vector<4x1xi1>
    %228 = vector.broadcast %227 : vector<4x1xi1> to vector<4x128xi1>
    %229 = arith.select %228, %222, %192 : vector<4x128xi1>, vector<4x128xf32>
    %230 = vector.shape_cast %226 : vector<4x1xi1> to vector<4x1xi1>
    %231 = vector.broadcast %230 : vector<4x1xi1> to vector<4x128xi1>
    %232 = arith.select %231, %224, %195 : vector<4x128xi1>, vector<4x128xf32>
    %233 = vector.extract_strided_slice %6 {offsets = [24, 0], sizes = [4, 512], strides = [1, 1]} : vector<32x512xf32> to vector<4x512xf32>
    %234 = arith.truncf %232 : vector<4x128xf32> to vector<4x128xbf16>
    %cst_35 = arith.constant dense<0.000000e+00> : vector<4x512xf32>
    %235 = tpu.matmul %234, %7, %cst_35 {dimension_numbers = #tpu.dot_dimension_numbers<[1], [0], [0], [1], [0, 0, 1, 1], [], []>} : vector<4x128xbf16>, vector<128x512xbf16>, vector<4x512xf32> -> vector<4x512xf32>
    %236 = arith.addf %233, %235 : vector<4x512xf32>
    %237 = vector.extract_strided_slice %236 {offsets = [0, 0], sizes = [4, 128], strides = [1, 1]} : vector<4x512xf32> to vector<4x128xf32>
    %238 = arith.negf %237 : vector<4x128xf32>
    %239 = math.exp %238 : vector<4x128xf32>
    %cst_36 = arith.constant 1.000000e+00 : f32
    %240 = vector.broadcast %cst_36 : f32 to vector<4x128xf32>
    %241 = arith.addf %240, %239 : vector<4x128xf32>
    %242 = arith.divf %240, %241 : vector<4x128xf32>
    %243 = vector.extract_strided_slice %236 {offsets = [0, 128], sizes = [4, 128], strides = [1, 1]} : vector<4x512xf32> to vector<4x128xf32>
    %244 = arith.negf %243 : vector<4x128xf32>
    %245 = math.exp %244 : vector<4x128xf32>
    %cst_37 = arith.constant 1.000000e+00 : f32
    %246 = vector.broadcast %cst_37 : f32 to vector<4x128xf32>
    %247 = arith.addf %246, %245 : vector<4x128xf32>
    %248 = arith.divf %246, %247 : vector<4x128xf32>
    %249 = vector.extract_strided_slice %236 {offsets = [0, 256], sizes = [4, 128], strides = [1, 1]} : vector<4x512xf32> to vector<4x128xf32>
    %250 = math.tanh %249 : vector<4x128xf32>
    %251 = vector.extract_strided_slice %236 {offsets = [0, 384], sizes = [4, 128], strides = [1, 1]} : vector<4x512xf32> to vector<4x128xf32>
    %252 = arith.negf %251 : vector<4x128xf32>
    %253 = math.exp %252 : vector<4x128xf32>
    %cst_38 = arith.constant 1.000000e+00 : f32
    %254 = vector.broadcast %cst_38 : f32 to vector<4x128xf32>
    %255 = arith.addf %254, %253 : vector<4x128xf32>
    %256 = arith.divf %254, %255 : vector<4x128xf32>
    %257 = arith.mulf %248, %229 : vector<4x128xf32>
    %258 = arith.mulf %242, %250 : vector<4x128xf32>
    %259 = arith.addf %257, %258 : vector<4x128xf32>
    %260 = math.tanh %259 : vector<4x128xf32>
    %261 = arith.mulf %256, %260 : vector<4x128xf32>
    %c6_i32 = arith.constant 6 : i32
    %262 = vector.broadcast %c6_i32 : i32 to vector<4x1xi32>
    %263 = arith.cmpi sgt, %8, %262 : vector<4x1xi32>
    %264 = vector.shape_cast %263 : vector<4x1xi1> to vector<4x1xi1>
    %265 = vector.broadcast %264 : vector<4x1xi1> to vector<4x128xi1>
    %266 = arith.select %265, %259, %229 : vector<4x128xi1>, vector<4x128xf32>
    %267 = vector.shape_cast %263 : vector<4x1xi1> to vector<4x1xi1>
    %268 = vector.broadcast %267 : vector<4x1xi1> to vector<4x128xi1>
    %269 = arith.select %268, %261, %232 : vector<4x128xi1>, vector<4x128xf32>
    %270 = vector.extract_strided_slice %6 {offsets = [28, 0], sizes = [4, 512], strides = [1, 1]} : vector<32x512xf32> to vector<4x512xf32>
    %271 = arith.truncf %269 : vector<4x128xf32> to vector<4x128xbf16>
    %cst_39 = arith.constant dense<0.000000e+00> : vector<4x512xf32>
    %272 = tpu.matmul %271, %7, %cst_39 {dimension_numbers = #tpu.dot_dimension_numbers<[1], [0], [0], [1], [0, 0, 1, 1], [], []>} : vector<4x128xbf16>, vector<128x512xbf16>, vector<4x512xf32> -> vector<4x512xf32>
    %273 = arith.addf %270, %272 : vector<4x512xf32>
    %274 = vector.extract_strided_slice %273 {offsets = [0, 0], sizes = [4, 128], strides = [1, 1]} : vector<4x512xf32> to vector<4x128xf32>
    %275 = arith.negf %274 : vector<4x128xf32>
    %276 = math.exp %275 : vector<4x128xf32>
    %cst_40 = arith.constant 1.000000e+00 : f32
    %277 = vector.broadcast %cst_40 : f32 to vector<4x128xf32>
    %278 = arith.addf %277, %276 : vector<4x128xf32>
    %279 = arith.divf %277, %278 : vector<4x128xf32>
    %280 = vector.extract_strided_slice %273 {offsets = [0, 128], sizes = [4, 128], strides = [1, 1]} : vector<4x512xf32> to vector<4x128xf32>
    %281 = arith.negf %280 : vector<4x128xf32>
    %282 = math.exp %281 : vector<4x128xf32>
    %cst_41 = arith.constant 1.000000e+00 : f32
    %283 = vector.broadcast %cst_41 : f32 to vector<4x128xf32>
    %284 = arith.addf %283, %282 : vector<4x128xf32>
    %285 = arith.divf %283, %284 : vector<4x128xf32>
    %286 = vector.extract_strided_slice %273 {offsets = [0, 256], sizes = [4, 128], strides = [1, 1]} : vector<4x512xf32> to vector<4x128xf32>
    %287 = math.tanh %286 : vector<4x128xf32>
    %288 = arith.mulf %285, %266 : vector<4x128xf32>
    %289 = arith.mulf %279, %287 : vector<4x128xf32>
    %290 = arith.addf %288, %289 : vector<4x128xf32>
    %c7_i32 = arith.constant 7 : i32
    %291 = vector.broadcast %c7_i32 : i32 to vector<4x1xi32>
    %292 = arith.cmpi sgt, %8, %291 : vector<4x1xi32>
    %293 = vector.shape_cast %292 : vector<4x1xi1> to vector<4x1xi1>
    %294 = vector.broadcast %293 : vector<4x1xi1> to vector<4x128xi1>
    %295 = arith.select %294, %290, %266 : vector<4x128xi1>, vector<4x128xf32>
    %c0_42 = arith.constant 0 : index
    %c0_43 = arith.constant 0 : index
    %296 = vector.load %arg6[%c0_42, %c0_43] : memref<1x128xf32, #tpu.memory_space<vmem>>, vector<1x128xf32>
    %297 = vector.broadcast %296 : vector<1x128xf32> to vector<4x128xf32>
    %298 = arith.mulf %295, %297 : vector<4x128xf32>
    %c0_44 = arith.constant 0 : index
    %c0_45 = arith.constant 0 : index
    %299 = vector.load %arg7[%c0_44, %c0_45] : memref<1x128xf32, #tpu.memory_space<vmem>>, vector<1x128xf32>
    %300 = vector.broadcast %299 : vector<1x128xf32> to vector<4x128xf32>
    %301 = arith.addf %298, %300 : vector<4x128xf32>
    %302 = arith.truncf %301 : vector<4x128xf32> to vector<4x128xbf16>
    %c0_46 = arith.constant 0 : index
    %c0_47 = arith.constant 0 : index
    %303 = vector.load %arg8[%c0_46, %c0_47] : memref<128x512xbf16, #tpu.memory_space<vmem>>, vector<128x512xbf16>
    %cst_48 = arith.constant dense<0.000000e+00> : vector<4x512xf32>
    %304 = tpu.matmul %302, %303, %cst_48 {dimension_numbers = #tpu.dot_dimension_numbers<[1], [0], [0], [1], [0, 0, 1, 1], [], []>} : vector<4x128xbf16>, vector<128x512xbf16>, vector<4x512xf32> -> vector<4x512xf32>
    %c0_49 = arith.constant 0 : index
    %c0_50 = arith.constant 0 : index
    %305 = vector.load %arg2[%c0_49, %c0_50] : memref<4x31xf32, #tpu.memory_space<vmem>>, vector<4x31xf32>
    %306 = arith.truncf %305 : vector<4x31xf32> to vector<4x31xbf16>
    %c0_51 = arith.constant 0 : index
    %c0_52 = arith.constant 0 : index
    %307 = vector.load %arg9[%c0_51, %c0_52] : memref<31x512xbf16, #tpu.memory_space<vmem>>, vector<31x512xbf16>
    %cst_53 = arith.constant dense<0.000000e+00> : vector<4x512xf32>
    %308 = tpu.matmul %306, %307, %cst_53 {dimension_numbers = #tpu.dot_dimension_numbers<[1], [0], [0], [1], [0, 0, 1, 1], [], []>} : vector<4x31xbf16>, vector<31x512xbf16>, vector<4x512xf32> -> vector<4x512xf32>
    %309 = arith.addf %304, %308 : vector<4x512xf32>
    %c0_54 = arith.constant 0 : index
    %c0_55 = arith.constant 0 : index
    %310 = vector.load %arg10[%c0_54, %c0_55] : memref<1x512xf32, #tpu.memory_space<vmem>>, vector<1x512xf32>
    %311 = vector.broadcast %310 : vector<1x512xf32> to vector<4x512xf32>
    %312 = arith.addf %309, %311 : vector<4x512xf32>
    %cst_56 = arith.constant 0.000000e+00 : f32
    %313 = vector.broadcast %cst_56 : f32 to vector<4x512xf32>
    %314 = arith.maximumf %312, %313 : vector<4x512xf32>
    %c0_57 = arith.constant 0 : index
    %c0_58 = arith.constant 0 : index
    %315 = vector.load %arg11[%c0_57, %c0_58] : memref<1x512xf32, #tpu.memory_space<vmem>>, vector<1x512xf32>
    %316 = vector.broadcast %315 : vector<1x512xf32> to vector<4x512xf32>
    %317 = arith.mulf %314, %316 : vector<4x512xf32>
    %c0_59 = arith.constant 0 : index
    %c0_60 = arith.constant 0 : index
    %318 = vector.load %arg12[%c0_59, %c0_60] : memref<1x512xf32, #tpu.memory_space<vmem>>, vector<1x512xf32>
    %319 = vector.broadcast %318 : vector<1x512xf32> to vector<4x512xf32>
    %320 = arith.addf %317, %319 : vector<4x512xf32>
    %321 = arith.truncf %320 : vector<4x512xf32> to vector<4x512xbf16>
    %c0_61 = arith.constant 0 : index
    %c0_62 = arith.constant 0 : index
    %322 = vector.load %arg13[%c0_61, %c0_62] : memref<512x256xbf16, #tpu.memory_space<vmem>>, vector<512x256xbf16>
    %cst_63 = arith.constant dense<0.000000e+00> : vector<4x256xf32>
    %323 = tpu.matmul %321, %322, %cst_63 {dimension_numbers = #tpu.dot_dimension_numbers<[1], [0], [0], [1], [0, 0, 1, 1], [], []>} : vector<4x512xbf16>, vector<512x256xbf16>, vector<4x256xf32> -> vector<4x256xf32>
    %c0_64 = arith.constant 0 : index
    %c0_65 = arith.constant 0 : index
    %324 = vector.load %arg14[%c0_64, %c0_65] : memref<1x256xf32, #tpu.memory_space<vmem>>, vector<1x256xf32>
    %325 = vector.broadcast %324 : vector<1x256xf32> to vector<4x256xf32>
    %326 = arith.addf %323, %325 : vector<4x256xf32>
    %cst_66 = arith.constant 0.000000e+00 : f32
    %327 = vector.broadcast %cst_66 : f32 to vector<4x256xf32>
    %328 = arith.maximumf %326, %327 : vector<4x256xf32>
    %c0_67 = arith.constant 0 : index
    %c0_68 = arith.constant 0 : index
    %329 = vector.load %arg15[%c0_67, %c0_68] : memref<1x256xf32, #tpu.memory_space<vmem>>, vector<1x256xf32>
    %330 = vector.broadcast %329 : vector<1x256xf32> to vector<4x256xf32>
    %331 = arith.mulf %328, %330 : vector<4x256xf32>
    %c0_69 = arith.constant 0 : index
    %c0_70 = arith.constant 0 : index
    %332 = vector.load %arg16[%c0_69, %c0_70] : memref<1x256xf32, #tpu.memory_space<vmem>>, vector<1x256xf32>
    %333 = vector.broadcast %332 : vector<1x256xf32> to vector<4x256xf32>
    %334 = arith.addf %331, %333 : vector<4x256xf32>
    %335 = arith.truncf %334 : vector<4x256xf32> to vector<4x256xbf16>
    %c0_71 = arith.constant 0 : index
    %c0_72 = arith.constant 0 : index
    %336 = vector.load %arg17[%c0_71, %c0_72] : memref<256x128xbf16, #tpu.memory_space<vmem>>, vector<256x128xbf16>
    %cst_73 = arith.constant dense<0.000000e+00> : vector<4x128xf32>
    %337 = tpu.matmul %335, %336, %cst_73 {dimension_numbers = #tpu.dot_dimension_numbers<[1], [0], [0], [1], [0, 0, 1, 1], [], []>} : vector<4x256xbf16>, vector<256x128xbf16>, vector<4x128xf32> -> vector<4x128xf32>
    %c0_74 = arith.constant 0 : index
    %c0_75 = arith.constant 0 : index
    %338 = vector.load %arg18[%c0_74, %c0_75] : memref<1x128xf32, #tpu.memory_space<vmem>>, vector<1x128xf32>
    %339 = vector.broadcast %338 : vector<1x128xf32> to vector<4x128xf32>
    %340 = arith.addf %337, %339 : vector<4x128xf32>
    %cst_76 = arith.constant 0.000000e+00 : f32
    %341 = vector.broadcast %cst_76 : f32 to vector<4x128xf32>
    %342 = arith.maximumf %340, %341 : vector<4x128xf32>
    %c0_77 = arith.constant 0 : index
    %c0_78 = arith.constant 0 : index
    %343 = vector.load %arg19[%c0_77, %c0_78] : memref<1x128xf32, #tpu.memory_space<vmem>>, vector<1x128xf32>
    %344 = vector.broadcast %343 : vector<1x128xf32> to vector<4x128xf32>
    %345 = arith.mulf %342, %344 : vector<4x128xf32>
    %c0_79 = arith.constant 0 : index
    %c0_80 = arith.constant 0 : index
    %346 = vector.load %arg20[%c0_79, %c0_80] : memref<1x128xf32, #tpu.memory_space<vmem>>, vector<1x128xf32>
    %347 = vector.broadcast %346 : vector<1x128xf32> to vector<4x128xf32>
    %348 = arith.addf %345, %347 : vector<4x128xf32>
    %349 = arith.truncf %348 : vector<4x128xf32> to vector<4x128xbf16>
    %c0_81 = arith.constant 0 : index
    %c0_82 = arith.constant 0 : index
    %350 = vector.load %arg21[%c0_81, %c0_82] : memref<128x64xbf16, #tpu.memory_space<vmem>>, vector<128x64xbf16>
    %cst_83 = arith.constant dense<0.000000e+00> : vector<4x64xf32>
    %351 = tpu.matmul %349, %350, %cst_83 {dimension_numbers = #tpu.dot_dimension_numbers<[1], [0], [0], [1], [0, 0, 1, 1], [], []>} : vector<4x128xbf16>, vector<128x64xbf16>, vector<4x64xf32> -> vector<4x64xf32>
    %c0_84 = arith.constant 0 : index
    %c0_85 = arith.constant 0 : index
    %352 = vector.load %arg22[%c0_84, %c0_85] : memref<1x64xf32, #tpu.memory_space<vmem>>, vector<1x64xf32>
    %353 = vector.broadcast %352 : vector<1x64xf32> to vector<4x64xf32>
    %354 = arith.addf %351, %353 : vector<4x64xf32>
    %cst_86 = arith.constant 0.000000e+00 : f32
    %355 = vector.broadcast %cst_86 : f32 to vector<4x64xf32>
    %356 = arith.maximumf %354, %355 : vector<4x64xf32>
    %c0_87 = arith.constant 0 : index
    %c0_88 = arith.constant 0 : index
    %357 = vector.load %arg23[%c0_87, %c0_88] : memref<1x64xf32, #tpu.memory_space<vmem>>, vector<1x64xf32>
    %358 = vector.broadcast %357 : vector<1x64xf32> to vector<4x64xf32>
    %359 = arith.mulf %356, %358 : vector<4x64xf32>
    %c0_89 = arith.constant 0 : index
    %c0_90 = arith.constant 0 : index
    %360 = vector.load %arg24[%c0_89, %c0_90] : memref<1x64xf32, #tpu.memory_space<vmem>>, vector<1x64xf32>
    %361 = vector.broadcast %360 : vector<1x64xf32> to vector<4x64xf32>
    %362 = arith.addf %359, %361 : vector<4x64xf32>
    %363 = arith.truncf %362 : vector<4x64xf32> to vector<4x64xbf16>
    %c0_91 = arith.constant 0 : index
    %c0_92 = arith.constant 0 : index
    %364 = vector.load %arg25[%c0_91, %c0_92] : memref<64x14xbf16, #tpu.memory_space<vmem>>, vector<64x14xbf16>
    %cst_93 = arith.constant dense<0.000000e+00> : vector<4x14xf32>
    %365 = tpu.matmul %363, %364, %cst_93 {dimension_numbers = #tpu.dot_dimension_numbers<[1], [0], [0], [1], [0, 0, 1, 1], [], []>} : vector<4x64xbf16>, vector<64x14xbf16>, vector<4x14xf32> -> vector<4x14xf32>
    %c0_94 = arith.constant 0 : index
    %c0_95 = arith.constant 0 : index
    %366 = vector.load %arg26[%c0_94, %c0_95] : memref<1x14xf32, #tpu.memory_space<vmem>>, vector<1x14xf32>
    %367 = vector.broadcast %366 : vector<1x14xf32> to vector<4x14xf32>
    %368 = arith.addf %365, %367 : vector<4x14xf32>
    %cst_96 = arith.constant dense<0xFF800000> : vector<4xf32>
    %369 = vector.multi_reduction <maximumf>, %368, %cst_96 [1] : vector<4x14xf32> to vector<4xf32>
    %370 = vector.shape_cast %369 : vector<4xf32> to vector<4x1xf32>
    %371 = vector.broadcast %370 : vector<4x1xf32> to vector<4x14xf32>
    %372 = arith.subf %368, %371 : vector<4x14xf32>
    %373 = math.exp %372 : vector<4x14xf32>
    %cst_97 = arith.constant dense<0.000000e+00> : vector<4xf32>
    %374 = vector.multi_reduction <add>, %373, %cst_97 [1] : vector<4x14xf32> to vector<4xf32>
    %375 = vector.shape_cast %374 : vector<4xf32> to vector<4x1xf32>
    %376 = tpu.reciprocal %375 {approx = true} : vector<4x1xf32> -> vector<4x1xf32>
    %377 = vector.broadcast %376 : vector<4x1xf32> to vector<4x14xf32>
    %378 = arith.mulf %373, %377 : vector<4x14xf32>
    %c0_98 = arith.constant 0 : index
    %c0_99 = arith.constant 0 : index
    %379 = vector.load %arg27[%c0_98, %c0_99] : memref<4x14xf32, #tpu.memory_space<vmem>>, vector<4x14xf32>
    tpu.vector_store %arg27[%c0_98, %c0_99], %378 {strides = array<i32>} : memref<4x14xf32, #tpu.memory_space<vmem>>, vector<4x14xf32>,
    return
  }
}

</mosaic_0001>

<llo_original>
// kernel: net_forward.1
$region0: #{net_forward.1}
  #allocation0 [shape = 'u32[]', space=smem, size = 0x4, offset = 0x4, fixed_abs, tag = 'smem constant byte address 0x4 - core index']
  #allocation1 [shape = 'u32[72,128]{1,0:T(1,128)}', space=vmem, size = 0x9000, scoped, tag = 'internal scratch']
  %s0 = inlined_call_operand.vmem [shape: s32[4,1], index: 0, kind: input, shape index: {}]
  %s1 = inlined_call_operand.vmem [shape: f32[32,8], index: 1, kind: input, shape index: {}]
  %s2 = inlined_call_operand.vmem [shape: f32[4,31], index: 2, kind: input, shape index: {}]
  %s3 = inlined_call_operand.vmem [shape: bf16[8,512], index: 3, kind: input, shape index: {}]
  %s4 = inlined_call_operand.hbm [shape: bf16[128,512], index: 4, kind: input, shape index: {}]
  %s5 = inlined_call_operand.vmem [shape: f32[1,512], index: 5, kind: input, shape index: {}]
  %s6 = inlined_call_operand.vmem [shape: f32[1,128], index: 6, kind: input, shape index: {}]
  %s7 = inlined_call_operand.vmem [shape: f32[1,128], index: 7, kind: input, shape index: {}]
  %s8 = inlined_call_operand.hbm [shape: bf16[128,512], index: 8, kind: input, shape index: {}]
  %s9 = inlined_call_operand.vmem [shape: bf16[31,512], index: 9, kind: input, shape index: {}]
  %s10 = inlined_call_operand.vmem [shape: f32[1,512], index: 10, kind: input, shape index: {}]
  %s11 = inlined_call_operand.vmem [shape: f32[1,512], index: 11, kind: input, shape index: {}]
  %s12 = inlined_call_operand.vmem [shape: f32[1,512], index: 12, kind: input, shape index: {}]
  %s13 = inlined_call_operand.hbm [shape: bf16[512,256], index: 13, kind: input, shape index: {}]
  %s14 = inlined_call_operand.vmem [shape: f32[1,256], index: 14, kind: input, shape index: {}]
  %s15 = inlined_call_operand.vmem [shape: f32[1,256], index: 15, kind: input, shape index: {}]
  %s16 = inlined_call_operand.vmem [shape: f32[1,256], index: 16, kind: input, shape index: {}]
  %s17 = inlined_call_operand.hbm [shape: bf16[256,128], index: 17, kind: input, shape index: {}]
  %s18 = inlined_call_operand.vmem [shape: f32[1,128], index: 18, kind: input, shape index: {}]
  %s19 = inlined_call_operand.vmem [shape: f32[1,128], index: 19, kind: input, shape index: {}]
  %s20 = inlined_call_operand.vmem [shape: f32[1,128], index: 20, kind: input, shape index: {}]
  %s21 = inlined_call_operand.vmem [shape: bf16[128,64], index: 21, kind: input, shape index: {}]
  %s22 = inlined_call_operand.vmem [shape: f32[1,64], index: 22, kind: input, shape index: {}]
  %s23 = inlined_call_operand.vmem [shape: f32[1,64], index: 23, kind: input, shape index: {}]
  %s24 = inlined_call_operand.vmem [shape: f32[1,64], index: 24, kind: input, shape index: {}]
  %s25 = inlined_call_operand.vmem [shape: bf16[64,14], index: 25, kind: input, shape index: {}]
  %s26 = inlined_call_operand.vmem [shape: f32[1,14], index: 26, kind: input, shape index: {}]
  %s27 = inlined_call_operand.hbm [shape: f32[4,14], index: 27, kind: output, shape index: {}]
  %s28 = sld [smem:[#allocation0]]
  $region134: #{net_forward.1} parent=0
    _
  %s30 = ssub.s32 1, %s28
  %s31 = scalar_select 0, %s30, %s28
  $region1: #{net_forward.1} parent=0
    #allocation2 [shape = 'u8[131072]{0}', space=vmem, size = 0x20000, scoped, tag = 'input window, operand 4, single buffered']
    #allocation3 [shape = 's32[1]{0}', space=sflag, size = 0x4, scoped, tag = 'scoped memory for net_forward.1']
    #allocation4 [shape = 's32[1]{0}', space=sflag, size = 0x4, scoped, tag = 'scoped memory for net_forward.1']
    #allocation5 [shape = 'u8[131072]{0}', space=vmem, size = 0x20000, scoped, tag = 'input window, operand 8, single buffered']
    #allocation6 [shape = 's32[1]{0}', space=sflag, size = 0x4, scoped, tag = 'scoped memory for net_forward.1']
    #allocation7 [shape = 'u8[262144]{0}', space=vmem, size = 0x40000, scoped, tag = 'input window, operand 13, single buffered']
    #allocation8 [shape = 'u8[65536]{0}', space=vmem, size = 0x10000, scoped, tag = 'input window, operand 17, single buffered']
    #allocation9 [shape = 's32[1]{0}', space=sflag, size = 0x4, scoped, tag = 'scoped memory for net_forward.1']
    #allocation10 [shape = 'u8[2048]{0}', space=vmem, size = 0x800, scoped, tag = 'output window, operand 0, single buffered']
    %32 = vsyncpa [#allocation3], 0
    %33 = vsyncpa [#allocation6], 0
    %34 = vsyncpa [#allocation9], 0
    %35 = vsyncpa [#allocation4], 0
    // Predicated region
    $region2: #{net_forward.1} parent=1 // pred_check
      _
    $region3: #{net_forward.1} parent=1 // pred_check_branch
      %37 = sbr.rel (0) target = $region5
    $region4: #{net_forward.1} parent=1 // pred_region
      _
    $region5: #{net_forward.1} parent=1 // pred_fallthru
      _
    // Predicated region
    $region6: #{net_forward.1} parent=1 // pred_check
      _
    $region7: #{net_forward.1} parent=1 // pred_check_branch
      %39 = sbr.rel (0) target = $region9
    $region8: #{net_forward.1} parent=1 // pred_region
      _
    $region9: #{net_forward.1} parent=1 // pred_fallthru
      _
    // Predicated region
    $region10: #{net_forward.1} parent=1 // pred_check
      _
    $region11: #{net_forward.1} parent=1 // pred_check_branch
      %41 = sbr.rel (0) target = $region13
    $region12: #{net_forward.1} parent=1 // pred_region
      _
    $region13: #{net_forward.1} parent=1 // pred_fallthru
      _
    // Predicated region
    $region14: #{net_forward.1} parent=1 // pred_check
      _
    $region15: #{net_forward.1} parent=1 // pred_check_branch
      %43 = sbr.rel (0) target = $region17
    $region16: #{net_forward.1} parent=1 // pred_region
      _
    $region17: #{net_forward.1} parent=1 // pred_fallthru
      _
    // Predicated region
    $region18: #{net_forward.1} parent=1 // pred_check
      _
    $region19: #{net_forward.1} parent=1 // pred_check_branch
      %45 = sbr.rel (0) target = $region21
    $region20: #{net_forward.1} parent=1 // pred_region
      %47 = vsyncadd [#allocation3], 0
      %s48 = sshll.u32 %s4, 4
      %s49 = int_to_ptr.hbm [resolvable:$true] %s48
      %s50 = sshll.u32 [#allocation2], 4
      %s51 = int_to_ptr.vmem [resolvable:$true] %s50
      %56 = dma.hbm_to_vmem [thread:$0]  %s49, 4096, %s51, [#allocation3], 256, 256, 16
    $region21: #{net_forward.1} parent=1 // pred_fallthru
      _
    // Predicated region
    $region22: #{net_forward.1} parent=1 // pred_check
      _
    $region23: #{net_forward.1} parent=1 // pred_check_branch
      %58 = sbr.rel (0) target = $region25
    $region24: #{net_forward.1} parent=1 // pred_region
      _
    $region25: #{net_forward.1} parent=1 // pred_fallthru
      _
    // Predicated region
    $region26: #{net_forward.1} parent=1 // pred_check
      _
    $region27: #{net_forward.1} parent=1 // pred_check_branch
      %60 = sbr.rel (0) target = $region29
    $region28: #{net_forward.1} parent=1 // pred_region
      _
    $region29: #{net_forward.1} parent=1 // pred_fallthru
      _
    // Predicated region
    $region30: #{net_forward.1} parent=1 // pred_check
      _
    $region31: #{net_forward.1} parent=1 // pred_check_branch
      %62 = sbr.rel (0) target = $region33
    $region32: #{net_forward.1} parent=1 // pred_region
      _
    $region33: #{net_forward.1} parent=1 // pred_fallthru
      _
    // Predicated region
    $region34: #{net_forward.1} parent=1 // pred_check
      _
    $region35: #{net_forward.1} parent=1 // pred_check_branch
      %64 = sbr.rel (0) target = $region37
    $region36: #{net_forward.1} parent=1 // pred_region
      %66 = vsyncadd [#allocation6], 0
      %s67 = sshll.u32 %s8, 4
      %s68 = int_to_ptr.hbm [resolvable:$true] %s67
      %s69 = sshll.u32 [#allocation5], 4
      %s70 = int_to_ptr.vmem [resolvable:$true] %s69
      %75 = dma.hbm_to_vmem [thread:$0]  %s68, 4096, %s70, [#allocation6], 256, 256, 16
    $region37: #{net_forward.1} parent=1 // pred_fallthru
      _
    // Predicated region
    $region38: #{net_forward.1} parent=1 // pred_check
      _
    $region39: #{net_forward.1} parent=1 // pred_check_branch
      %77 = sbr.rel (0) target = $region41
    $region40: #{net_forward.1} parent=1 // pred_region
      _
    $region41: #{net_forward.1} parent=1 // pred_fallthru
      _
    // Predicated region
    $region42: #{net_forward.1} parent=1 // pred_check
      _
    $region43: #{net_forward.1} parent=1 // pred_check_branch
      %79 = sbr.rel (0) target = $region45
    $region44: #{net_forward.1} parent=1 // pred_region
      _
    $region45: #{net_forward.1} parent=1 // pred_fallthru
      _
    // Predicated region
    $region46: #{net_forward.1} parent=1 // pred_check
      _
    $region47: #{net_forward.1} parent=1 // pred_check_branch
      %81 = sbr.rel (0) target = $region49
    $region48: #{net_forward.1} parent=1 // pred_region
      _
    $region49: #{net_forward.1} parent=1 // pred_fallthru
      _
    // Predicated region
    $region50: #{net_forward.1} parent=1 // pred_check
      _
    $region51: #{net_forward.1} parent=1 // pred_check_branch
      %83 = sbr.rel (0) target = $region53
    $region52: #{net_forward.1} parent=1 // pred_region
      _
    $region53: #{net_forward.1} parent=1 // pred_fallthru
      _
    // Predicated region
    $region54: #{net_forward.1} parent=1 // pred_check
      _
    $region55: #{net_forward.1} parent=1 // pred_check_branch
      %85 = sbr.rel (0) target = $region57
    $region56: #{net_forward.1} parent=1 // pred_region
      %87 = vsyncadd [#allocation6], 0
      %s88 = sshll.u32 %s13, 4
      %s89 = int_to_ptr.hbm [resolvable:$true] %s88
      %s90 = sshll.u32 [#allocation7], 4
      %s91 = int_to_ptr.vmem [resolvable:$true] %s90
      %96 = dma.hbm_to_vmem [thread:$0]  %s89, 8192, %s91, [#allocation6], 128, 128, 8
    $region57: #{net_forward.1} parent=1 // pred_fallthru
      _
    // Predicated region
    $region58: #{net_forward.1} parent=1 // pred_check
      _
    $region59: #{net_forward.1} parent=1 // pred_check_branch
      %98 = sbr.rel (0) target = $region61
    $region60: #{net_forward.1} parent=1 // pred_region
      _
    $region61: #{net_forward.1} parent=1 // pred_fallthru
      _
    // Predicated region
    $region62: #{net_forward.1} parent=1 // pred_check
      _
    $region63: #{net_forward.1} parent=1 // pred_check_branch
      %100 = sbr.rel (0) target = $region65
    $region64: #{net_forward.1} parent=1 // pred_region
      _
    $region65: #{net_forward.1} parent=1 // pred_fallthru
      _
    // Predicated region
    $region66: #{net_forward.1} parent=1 // pred_check
      _
    $region67: #{net_forward.1} parent=1 // pred_check_branch
      %102 = sbr.rel (0) target = $region69
    $region68: #{net_forward.1} parent=1 // pred_region
      _
    $region69: #{net_forward.1} parent=1 // pred_fallthru
      _
    // Predicated region
    $region70: #{net_forward.1} parent=1 // pred_check
      _
    $region71: #{net_forward.1} parent=1 // pred_check_branch
      %104 = sbr.rel (0) target = $region73
    $region72: #{net_forward.1} parent=1 // pred_region
      %106 = vsyncadd [#allocation9], 0
      %s107 = sshll.u32 %s17, 4
      %s108 = int_to_ptr.hbm [resolvable:$true] %s107
      %s109 = sshll.u32 [#allocation8], 4
      %s110 = int_to_ptr.vmem [resolvable:$true] %s109
      %115 = dma.hbm_to_vmem [thread:$0]  %s108, 2048, %s110, [#allocation9], 64, 64, 4
    $region73: #{net_forward.1} parent=1 // pred_fallthru
      _
    // Predicated region
    $region74: #{net_forward.1} parent=1 // pred_check
      _
    $region75: #{net_forward.1} parent=1 // pred_check_branch
      %117 = sbr.rel (0) target = $region77
    $region76: #{net_forward.1} parent=1 // pred_region
      _
    $region77: #{net_forward.1} parent=1 // pred_fallthru
      _
    // Predicated region
    $region78: #{net_forward.1} parent=1 // pred_check
      _
    $region79: #{net_forward.1} parent=1 // pred_check_branch
      %119 = sbr.rel (0) target = $region81
    $region80: #{net_forward.1} parent=1 // pred_region
      _
    $region81: #{net_forward.1} parent=1 // pred_fallthru
      _
    // Predicated region
    $region82: #{net_forward.1} parent=1 // pred_check
      _
    $region83: #{net_forward.1} parent=1 // pred_check_branch
      %121 = sbr.rel (0) target = $region85
    $region84: #{net_forward.1} parent=1 // pred_region
      _
    $region85: #{net_forward.1} parent=1 // pred_fallthru
      _
    // Predicated region
    $region86: #{net_forward.1} parent=1 // pred_check
      _
    $region87: #{net_forward.1} parent=1 // pred_check_branch
      %123 = sbr.rel (0) target = $region89
    $region88: #{net_forward.1} parent=1 // pred_region
      _
    $region89: #{net_forward.1} parent=1 // pred_fallthru
      _
    // Predicated region
    $region90: #{net_forward.1} parent=1 // pred_check
      _
    $region91: #{net_forward.1} parent=1 // pred_check_branch
      %125 = sbr.rel (0) target = $region93
    $region92: #{net_forward.1} parent=1 // pred_region
      _
    $region93: #{net_forward.1} parent=1 // pred_fallthru
      _
    // Predicated region
    $region94: #{net_forward.1} parent=1 // pred_check
      _
    $region95: #{net_forward.1} parent=1 // pred_check_branch
      %127 = sbr.rel (0) target = $region97
    $region96: #{net_forward.1} parent=1 // pred_region
      _
    $region97: #{net_forward.1} parent=1 // pred_fallthru
      _
    // Predicated region
    $region98: #{net_forward.1} parent=1 // pred_check
      _
    $region99: #{net_forward.1} parent=1 // pred_check_branch
      %129 = sbr.rel (0) target = $region101
    $region100: #{net_forward.1} parent=1 // pred_region
      _
    $region101: #{net_forward.1} parent=1 // pred_fallthru
      _
    // Predicated region
    $region102: #{net_forward.1} parent=1 // pred_check
      _
    $region103: #{net_forward.1} parent=1 // pred_check_branch
      %131 = sbr.rel (0) target = $region105
    $region104: #{net_forward.1} parent=1 // pred_region
      _
    $region105: #{net_forward.1} parent=1 // pred_fallthru
      _
    // Predicated region
    $region106: #{net_forward.1} parent=1 // pred_check
      _
    $region107: #{net_forward.1} parent=1 // pred_check_branch
      %133 = sbr.rel (0) target = $region109
    $region108: #{net_forward.1} parent=1 // pred_region
      _
    $region109: #{net_forward.1} parent=1 // pred_fallthru
      _
    // Predicated region
    $region110: #{net_forward.1} parent=1 // pred_check
      _
    $region111: #{net_forward.1} parent=1 // pred_check_branch
      %135 = sbr.rel (0) target = $region113
    $region112: #{net_forward.1} parent=1 // pred_region
      %137 = dma.done [#allocation3], 4096
    $region113: #{net_forward.1} parent=1 // pred_fallthru
      _
    // Predicated region
    $region114: #{net_forward.1} parent=1 // pred_check
      _
    $region115: #{net_forward.1} parent=1 // pred_check_branch
      %139 = sbr.rel (0) target = $region117
    $region116: #{net_forward.1} parent=1 // pred_region
      %141 = dma.done [#allocation6], 4096
    $region117: #{net_forward.1} parent=1 // pred_fallthru
      _
    // Predicated region
    $region118: #{net_forward.1} parent=1 // pred_check
      _
    $region119: #{net_forward.1} parent=1 // pred_check_branch
      %143 = sbr.rel (0) target = $region121
    $region120: #{net_forward.1} parent=1 // pred_region
      %145 = dma.done [#allocation6], 8192
    $region121: #{net_forward.1} parent=1 // pred_fallthru
      _
    // Predicated region
    $region122: #{net_forward.1} parent=1 // pred_check
      _
    $region123: #{net_forward.1} parent=1 // pred_check_branch
      %147 = sbr.rel (0) target = $region125
    $region124: #{net_forward.1} parent=1 // pred_region
      %149 = dma.done [#allocation9], 2048
    $region125: #{net_forward.1} parent=1 // pred_fallthru
      _
    %v151 = vld [vmem:[%s1] sm:$0xff]
    %v152 = vld [vmem:[%s1 + $0x8] sm:$0xff]
    %v153 = vld [vmem:[%s1 + $0x10] sm:$0xff]
    %v154 = vld [vmem:[%s1 + $0x18] sm:$0xff]
    %v155 = vpack.c.bf16 %v152, %v151
    %v156 = vpack.c.bf16 %v154, %v153
    %v157 = vld [vmem:[%s3] sm:$0xff]
    %v158 = vld [vmem:[%s3 + $0x8] sm:$0xff]
    %v159 = vld [vmem:[%s5] sm:$0xf]
    %v161 = vperm.slane %v159, 0
    %v162 = vperm.slane %v159, 1
    %v163 = vperm.slane %v159, 2
    %v164 = vperm.slane %v159, 3
    %v171 = vunpack.c.l.b16 %v157
    %v172 = vunpack.c.h.b16 %v157
    %v173 = vunpack.c.l.b16 %v158
    %v174 = vunpack.c.h.b16 %v158
    %v175 = vpack.c.b16 %v171, %v171
    %v176 = vpack.c.b16 %v172, %v172
    %v177 = vpack.c.b16 %v173, %v173
    %v178 = vpack.c.b16 %v174, %v174
    %vm179 = vcmask 64512
    %v181 = vsel %vm179, %v155, 0
    %v184 = vsel %vm179, %v156, 0
    %vm186 = vcmask 1043456
    %v188 = vsel %vm186, %v175, 0
    %v191 = vsel %vm186, %v176, 0
    %v194 = vsel %vm186, %v177, 0
    %v197 = vsel %vm186, %v178, 0
    %199 = vmatpush.bf16.msra.mxu0 0
    %200 = vmatpush.bf16.msra.mxu0 0
    %201 = vmatpush.bf16.msra.mxu0 0
    %202 = vmatpush.bf16.msra.mxu0 0
    %203 = vmatpush.bf16.msra.mxu0 0
    %204 = vmatpush.bf16.msra.mxu0 0
    %205 = vmatpush.bf16.msra.mxu0 0
    %206 = vmatpush.bf16.msra.mxu0 %v188
    %207 = vmatmul.bf16.gmra.mxu0 %v181
    %v208 = vpop.f32.mrf.mxu0
    %v209 = vadd.f32 %v161, %v208
    %v210 = vpop.f32.mrf.mxu0
    %v211 = vadd.f32 %v161, %v210
    %212 = vmatmul.bf16.gmra.mxu0 %v184
    %v213 = vpop.f32.mrf.mxu0
    %v214 = vadd.f32 %v161, %v213
    %v215 = vpop.f32.mrf.mxu0
    %v216 = vadd.f32 %v161, %v215
    %217 = vdwg.mxu0
    %218 = vmatpush.bf16.msra.mxu0 0
    %219 = vmatpush.bf16.msra.mxu0 0
    %220 = vmatpush.bf16.msra.mxu0 0
    %221 = vmatpush.bf16.msra.mxu0 0
    %222 = vmatpush.bf16.msra.mxu0 0
    %223 = vmatpush.bf16.msra.mxu0 0
    %224 = vmatpush.bf16.msra.mxu0 0
    %225 = vmatpush.bf16.msra.mxu0 %v191
    %226 = vmatmul.bf16.gmra.mxu0 %v181
    %v227 = vpop.f32.mrf.mxu0
    %v228 = vadd.f32 %v162, %v227
    %v229 = vpop.f32.mrf.mxu0
    %v230 = vadd.f32 %v162, %v229
    %231 = vmatmul.bf16.gmra.mxu0 %v184
    %v232 = vpop.f32.mrf.mxu0
    %v233 = vadd.f32 %v162, %v232
    %v234 = vpop.f32.mrf.mxu0
    %v235 = vadd.f32 %v162, %v234
    %236 = vdwg.mxu0
    %237 = vmatpush.bf16.msra.mxu0 0
    %238 = vmatpush.bf16.msra.mxu0 0
    %239 = vmatpush.bf16.msra.mxu0 0
    %240 = vmatpush.bf16.msra.mxu0 0
    %241 = vmatpush.bf16.msra.mxu0 0
    %242 = vmatpush.bf16.msra.mxu0 0
    %243 = vmatpush.bf16.msra.mxu0 0
    %244 = vmatpush.bf16.msra.mxu0 %v194
    %245 = vmatmul.bf16.gmra.mxu0 %v181
    %v246 = vpop.f32.mrf.mxu0
    %v247 = vadd.f32 %v163, %v246
    %v248 = vpop.f32.mrf.mxu0
    %v249 = vadd.f32 %v163, %v248
    %250 = vmatmul.bf16.gmra.mxu0 %v184
    %v251 = vpop.f32.mrf.mxu0
    %v252 = vadd.f32 %v163, %v251
    %v253 = vpop.f32.mrf.mxu0
    %v254 = vadd.f32 %v163, %v253
    %255 = vdwg.mxu0
    %256 = vmatpush.bf16.msra.mxu0 0
    %257 = vmatpush.bf16.msra.mxu0 0
    %258 = vmatpush.bf16.msra.mxu0 0
    %259 = vmatpush.bf16.msra.mxu0 0
    %260 = vmatpush.bf16.msra.mxu0 0
    %261 = vmatpush.bf16.msra.mxu0 0
    %262 = vmatpush.bf16.msra.mxu0 0
    %263 = vmatpush.bf16.msra.mxu0 %v197
    %264 = vmatmul.bf16.gmra.mxu0 %v181
    %v265 = vpop.f32.mrf.mxu0
    %v266 = vadd.f32 %v164, %v265
    %v267 = vpop.f32.mrf.mxu0
    %v268 = vadd.f32 %v164, %v267
    %269 = vmatmul.bf16.gmra.mxu0 %v184
    %v270 = vpop.f32.mrf.mxu0
    %v271 = vadd.f32 %v164, %v270
    %v272 = vpop.f32.mrf.mxu0
    %v273 = vadd.f32 %v164, %v272
    %274 = vdwg.mxu0
    %v275 = vld [vmem:[#allocation2] sm:$0xff]
    %v276 = vld [vmem:[#allocation2 + $0x8] sm:$0xff]
    %v277 = vld [vmem:[#allocation2 + $0x10] sm:$0xff]
    %v278 = vld [vmem:[#allocation2 + $0x18] sm:$0xff]
    %v279 = vld [vmem:[#allocation2 + $0x20] sm:$0xff]
    %v280 = vld [vmem:[#allocation2 + $0x28] sm:$0xff]
    %v281 = vld [vmem:[#allocation2 + $0x30] sm:$0xff]
    %v282 = vld [vmem:[#allocation2 + $0x38] sm:$0xff]
    %v283 = vld [vmem:[#allocation2 + $0x40] sm:$0xff]
    %v284 = vld [vmem:[#allocation2 + $0x48] sm:$0xff]
    %v285 = vld [vmem:[#allocation2 + $0x50] sm:$0xff]
    %v286 = vld [vmem:[#allocation2 + $0x58] sm:$0xff]
    %v287 = vld [vmem:[#allocation2 + $0x60] sm:$0xff]
    %v288 = vld [vmem:[#allocation2 + $0x68] sm:$0xff]
    %v289 = vld [vmem:[#allocation2 + $0x70] sm:$0xff]
    %v290 = vld [vmem:[#allocation2 + $0x78] sm:$0xff]
    %v291 = vld [vmem:[#allocation2 + $0x80] sm:$0xff]
    %v292 = vld [vmem:[#allocation2 + $0x88] sm:$0xff]
    %v293 = vld [vmem:[#allocation2 + $0x90] sm:$0xff]
    %v294 = vld [vmem:[#allocation2 + $0x98] sm:$0xff]
    %v295 = vld [vmem:[#allocation2 + $0xa0] sm:$0xff]
    %v296 = vld [vmem:[#allocation2 + $0xa8] sm:$0xff]
    %v297 = vld [vmem:[#allocation2 + $0xb0] sm:$0xff]
    %v298 = vld [vmem:[#allocation2 + $0xb8] sm:$0xff]
    %v299 = vld [vmem:[#allocation2 + $0xc0] sm:$0xff]
    %v300 = vld [vmem:[#allocation2 + $0xc8] sm:$0xff]
    %v301 = vld [vmem:[#allocation2 + $0xd0] sm:$0xff]
    %v302 = vld [vmem:[#allocation2 + $0xd8] sm:$0xff]
    %v303 = vld [vmem:[#allocation2 + $0xe0] sm:$0xff]
    %v304 = vld [vmem:[#allocation2 + $0xe8] sm:$0xff]
    %v305 = vld [vmem:[#allocation2 + $0xf0] sm:$0xff]
    %v306 = vld [vmem:[#allocation2 + $0xf8] sm:$0xff]
    %v307 = vld [vmem:[%s0] sm:$0xf]
    %v340 = vunpack.c.l.b16 %v275
    %v341 = vunpack.c.h.b16 %v275
    %v342 = vunpack.c.l.b16 %v276
    %v343 = vunpack.c.h.b16 %v276
    %v344 = vunpack.c.l.b16 %v277
    %v345 = vunpack.c.h.b16 %v277
    %v346 = vunpack.c.l.b16 %v278
    %v347 = vunpack.c.h.b16 %v278
    %v348 = vunpack.c.l.b16 %v279
    %v349 = vunpack.c.h.b16 %v279
    %v350 = vunpack.c.l.b16 %v280
    %v351 = vunpack.c.h.b16 %v280
    %v352 = vunpack.c.l.b16 %v281
    %v353 = vunpack.c.h.b16 %v281
    %v354 = vunpack.c.l.b16 %v282
    %v355 = vunpack.c.h.b16 %v282
    %v356 = vunpack.c.l.b16 %v283
    %v357 = vunpack.c.h.b16 %v283
    %v358 = vunpack.c.l.b16 %v284
    %v359 = vunpack.c.h.b16 %v284
    %v360 = vunpack.c.l.b16 %v285
    %v361 = vunpack.c.h.b16 %v285
    %v362 = vunpack.c.l.b16 %v286
    %v363 = vunpack.c.h.b16 %v286
    %v364 = vunpack.c.l.b16 %v287
    %v365 = vunpack.c.h.b16 %v287
    %v366 = vunpack.c.l.b16 %v288
    %v367 = vunpack.c.h.b16 %v288
    %v368 = vunpack.c.l.b16 %v289
    %v369 = vunpack.c.h.b16 %v289
    %v370 = vunpack.c.l.b16 %v290
    %v371 = vunpack.c.h.b16 %v290
    %v372 = vunpack.c.l.b16 %v291
    %v373 = vunpack.c.h.b16 %v291
    %v374 = vunpack.c.l.b16 %v292
    %v375 = vunpack.c.h.b16 %v292
    %v376 = vunpack.c.l.b16 %v293
    %v377 = vunpack.c.h.b16 %v293
    %v378 = vunpack.c.l.b16 %v294
    %v379 = vunpack.c.h.b16 %v294
    %v380 = vunpack.c.l.b16 %v295
    %v381 = vunpack.c.h.b16 %v295
    %v382 = vunpack.c.l.b16 %v296
    %v383 = vunpack.c.h.b16 %v296
    %v384 = vunpack.c.l.b16 %v297
    %v385 = vunpack.c.h.b16 %v297
    %v386 = vunpack.c.l.b16 %v298
    %v387 = vunpack.c.h.b16 %v298
    %v388 = vunpack.c.l.b16 %v299
    %v389 = vunpack.c.h.b16 %v299
    %v390 = vunpack.c.l.b16 %v300
    %v391 = vunpack.c.h.b16 %v300
    %v392 = vunpack.c.l.b16 %v301
    %v393 = vunpack.c.h.b16 %v301
    %v394 = vunpack.c.l.b16 %v302
    %v395 = vunpack.c.h.b16 %v302
    %v396 = vunpack.c.l.b16 %v303
    %v397 = vunpack.c.h.b16 %v303
    %v398 = vunpack.c.l.b16 %v304
    %v399 = vunpack.c.h.b16 %v304
    %v400 = vunpack.c.l.b16 %v305
    %v401 = vunpack.c.h.b16 %v305
    %v402 = vunpack.c.l.b16 %v306
    %v403 = vunpack.c.h.b16 %v306
    %v404 = vpack.c.b16 %v344, %v340
    %v405 = vpack.c.b16 %v345, %v341
    %v406 = vpack.c.b16 %v346, %v342
    %v407 = vpack.c.b16 %v347, %v343
    %v408 = vpack.c.b16 %v352, %v348
    %v409 = vpack.c.b16 %v353, %v349
    %v410 = vpack.c.b16 %v354, %v350
    %v411 = vpack.c.b16 %v355, %v351
    %v412 = vpack.c.b16 %v360, %v356
    %v413 = vpack.c.b16 %v361, %v357
    %v414 = vpack.c.b16 %v362, %v358
    %v415 = vpack.c.b16 %v363, %v359
    %v416 = vpack.c.b16 %v368, %v364
    %v417 = vpack.c.b16 %v369, %v365
    %v418 = vpack.c.b16 %v370, %v366
    %v419 = vpack.c.b16 %v371, %v367
    %v420 = vpack.c.b16 %v376, %v372
    %v421 = vpack.c.b16 %v377, %v373
    %v422 = vpack.c.b16 %v378, %v374
    %v423 = vpack.c.b16 %v379, %v375
    %v424 = vpack.c.b16 %v384, %v380
    %v425 = vpack.c.b16 %v385, %v381
    %v426 = vpack.c.b16 %v386, %v382
    %v427 = vpack.c.b16 %v387, %v383
    %v428 = vpack.c.b16 %v392, %v388
    %v429 = vpack.c.b16 %v393, %v389
    %v430 = vpack.c.b16 %v394, %v390
    %v431 = vpack.c.b16 %v395, %v391
    %v432 = vpack.c.b16 %v400, %v396
    %v433 = vpack.c.b16 %v401, %v397
    %v434 = vpack.c.b16 %v402, %v398
    %v435 = vpack.c.b16 %v403, %v399
    %468 = vmatpush.bf16.msra.mxu0 %v432
    %469 = vmatpush.bf16.msra.mxu0 %v428
    %470 = vmatpush.bf16.msra.mxu0 %v424
    %471 = vmatpush.bf16.msra.mxu0 %v420
    %472 = vmatpush.bf16.msra.mxu0 %v416
    %473 = vmatpush.bf16.msra.mxu0 %v412
    %474 = vmatpush.bf16.msra.mxu0 %v408
    %475 = vmatpush.bf16.msra.mxu0 %v404
    %476 = vmatmul.bf16.gmra.mxu0 0
    %v477 = vpop.f32.mrf.mxu0
    %v478 = vadd.f32 0.0, %v477
    %v479 = vpop.f32.mrf.mxu0
    %480 = vdwg.mxu0
    %481 = vmatpush.bf16.msra.mxu0 %v433
    %482 = vmatpush.bf16.msra.mxu0 %v429
    %483 = vmatpush.bf16.msra.mxu0 %v425
    %484 = vmatpush.bf16.msra.mxu0 %v421
    %485 = vmatpush.bf16.msra.mxu0 %v417
    %486 = vmatpush.bf16.msra.mxu0 %v413
    %487 = vmatpush.bf16.msra.mxu0 %v409
    %488 = vmatpush.bf16.msra.mxu0 %v405
    %489 = vmatmul.bf16.gmra.mxu0 0
    %v490 = vpop.f32.mrf.mxu0
    %v491 = vadd.f32 0.0, %v490
    %v492 = vpop.f32.mrf.mxu0
    %493 = vdwg.mxu0
    %494 = vmatpush.bf16.msra.mxu0 %v434
    %495 = vmatpush.bf16.msra.mxu0 %v430
    %496 = vmatpush.bf16.msra.mxu0 %v426
    %497 = vmatpush.bf16.msra.mxu0 %v422
    %498 = vmatpush.bf16.msra.mxu0 %v418
    %499 = vmatpush.bf16.msra.mxu0 %v414
    %500 = vmatpush.bf16.msra.mxu0 %v410
    %501 = vmatpush.bf16.msra.mxu0 %v406
    %502 = vmatmul.bf16.gmra.mxu0 0
    %v503 = vpop.f32.mrf.mxu0
    %v504 = vadd.f32 0.0, %v503
    %v505 = vpop.f32.mrf.mxu0
    %506 = vdwg.mxu0
    %507 = vmatpush.bf16.msra.mxu0 %v435
    %508 = vmatpush.bf16.msra.mxu0 %v431
    %509 = vmatpush.bf16.msra.mxu0 %v427
    %510 = vmatpush.bf16.msra.mxu0 %v423
    %511 = vmatpush.bf16.msra.mxu0 %v419
    %512 = vmatpush.bf16.msra.mxu0 %v415
    %513 = vmatpush.bf16.msra.mxu0 %v411
    %514 = vmatpush.bf16.msra.mxu0 %v407
    %515 = vmatmul.bf16.gmra.mxu0 0
    %v516 = vpop.f32.mrf.mxu0
    %v517 = vadd.f32 0.0, %v516
    %v518 = vpop.f32.mrf.mxu0
    %519 = vdwg.mxu0
    %v520 = vadd.f32 %v209, %v478
    %v521 = vadd.f32 %v228, %v491
    %v522 = vadd.f32 %v247, %v504
    %v523 = vadd.f32 %v266, %v517
    %v524 = vxor.u32 %v520, 2147483648
    %v525 = vmul.f32 %v524, 1.442695
    %v526 = vpow.pop %v525
    %v527 = vadd.f32 %v526, 1.0
    %v528 = vrcp.pop %v527
    %v529 = vmul.f32 %v527, %v528
    %v530 = vsub.f32 1.0, %v529
    %v531 = vmul.f32 %v528, %v530
    %v532 = vadd.f32 %v528, %v531
    %vm533 = vweird.f32 %v527
    %vm534 = vweird.f32 %v528
    %vm535 = vmor %vm533, %vm534
    %v536 = vsel %vm535, %v528, %v532
    %v537 = vand.u32 2147483647, %v527
    %vm538 = vcmp.eq.f32.partialorder %v537, 8.507059e+37
    %v539 = vand.u32 %v527, 2147483648
    %v540 = vor.u32 1.1754944e-38, %v539
    %v541 = vsel %vm538, %v540, %v536
    %v542 = vmul.f32 1.0, %v541
    %v543 = vxor.u32 %v521, 2147483648
    %v544 = vmul.f32 %v543, 1.442695
    %v545 = vpow.pop %v544
    %v546 = vadd.f32 %v545, 1.0
    %v547 = vrcp.pop %v546
    %v548 = vmul.f32 %v546, %v547
    %v549 = vsub.f32 1.0, %v548
    %v550 = vmul.f32 %v547, %v549
    %v551 = vadd.f32 %v547, %v550
    %vm552 = vweird.f32 %v546
    %vm553 = vweird.f32 %v547
    %vm554 = vmor %vm552, %vm553
    %v555 = vsel %vm554, %v547, %v551
    %v556 = vand.u32 2147483647, %v546
    %vm557 = vcmp.eq.f32.partialorder %v556, 8.507059e+37
    %v558 = vand.u32 %v546, 2147483648
    %v559 = vor.u32 1.1754944e-38, %v558
    %v560 = vsel %vm557, %v559, %v555
    %v561 = vmul.f32 1.0, %v560
    %v562 = vtanh.pop %v522
    %v563 = vxor.u32 %v523, 2147483648
    %v564 = vmul.f32 %v563, 1.442695
    %v565 = vpow.pop %v564
    %v566 = vadd.f32 %v565, 1.0
    %v567 = vrcp.pop %v566
    %v568 = vmul.f32 %v566, %v567
    %v569 = vsub.f32 1.0, %v568
    %v570 = vmul.f32 %v567, %v569
    %v571 = vadd.f32 %v567, %v570
    %vm572 = vweird.f32 %v566
    %vm573 = vweird.f32 %v567
    %vm574 = vmor %vm572, %vm573
    %v575 = vsel %vm574, %v567, %v571
    %v576 = vand.u32 2147483647, %v566
    %vm577 = vcmp.eq.f32.partialorder %v576, 8.507059e+37
    %v578 = vand.u32 %v566, 2147483648
    %v579 = vor.u32 1.1754944e-38, %v578
    %v580 = vsel %vm577, %v579, %v575
    %v581 = vmul.f32 1.0, %v580
    %v582 = vmul.f32 %v561, 0.0
    %v583 = vmul.f32 %v542, %v562
    %v584 = vadd.f32 %v582, %v583
    %v585 = vtanh.pop %v584
    %v586 = vmul.f32 %v581, %v585
    %vm587 = vcmp.gt.s32.totalorder %v307, 0
    %v588 = vsel %vm587, 1, 0
    %589 = vset.pattern.permute.xlu0 0
    %590 = vperm.xlu0 %589, %v588
    %v591 = vpop.permute.xlu0 %590
    %vm592 = vcmp.eq.s32.totalorder %v591, 1
    %v593 = vsel %vm592, %v584, 0.0
    %v594 = vsel %vm592, %v586, 0.0
    %v595 = vpack.c.bf16 %v594, %v594
    %596 = vmatpush.bf16.msra.mxu0 %v432
    %597 = vmatpush.bf16.msra.mxu0 %v428
    %598 = vmatpush.bf16.msra.mxu0 %v424
    %599 = vmatpush.bf16.msra.mxu0 %v420
    %600 = vmatpush.bf16.msra.mxu0 %v416
    %601 = vmatpush.bf16.msra.mxu0 %v412
    %602 = vmatpush.bf16.msra.mxu0 %v408
    %603 = vmatpush.bf16.msra.mxu0 %v404
    %604 = vmatmul.bf16.gmra.mxu0 %v595
    %v605 = vpop.f32.mrf.mxu0
    %v606 = vadd.f32 0.0, %v605
    %v607 = vpop.f32.mrf.mxu0
    %608 = vdwg.mxu0
    %609 = vmatpush.bf16.msra.mxu0 %v433
    %610 = vmatpush.bf16.msra.mxu0 %v429
    %611 = vmatpush.bf16.msra.mxu0 %v425
    %612 = vmatpush.bf16.msra.mxu0 %v421
    %613 = vmatpush.bf16.msra.mxu0 %v417
    %614 = vmatpush.bf16.msra.mxu0 %v413
    %615 = vmatpush.bf16.msra.mxu0 %v409
    %616 = vmatpush.bf16.msra.mxu0 %v405
    %617 = vmatmul.bf16.gmra.mxu0 %v595
    %v618 = vpop.f32.mrf.mxu0
    %v619 = vadd.f32 0.0, %v618
    %v620 = vpop.f32.mrf.mxu0
    %621 = vdwg.mxu0
    %622 = vmatpush.bf16.msra.mxu0 %v434
    %623 = vmatpush.bf16.msra.mxu0 %v430
    %624 = vmatpush.bf16.msra.mxu0 %v426
    %625 = vmatpush.bf16.msra.mxu0 %v422
    %626 = vmatpush.bf16.msra.mxu0 %v418
    %627 = vmatpush.bf16.msra.mxu0 %v414
    %628 = vmatpush.bf16.msra.mxu0 %v410
    %629 = vmatpush.bf16.msra.mxu0 %v406
    %630 = vmatmul.bf16.gmra.mxu0 %v595
    %v631 = vpop.f32.mrf.mxu0
    %v632 = vadd.f32 0.0, %v631
    %v633 = vpop.f32.mrf.mxu0
    %634 = vdwg.mxu0
    %635 = vmatpush.bf16.msra.mxu0 %v435
    %636 = vmatpush.bf16.msra.mxu0 %v431
    %637 = vmatpush.bf16.msra.mxu0 %v427
    %638 = vmatpush.bf16.msra.mxu0 %v423
    %639 = vmatpush.bf16.msra.mxu0 %v419
    %640 = vmatpush.bf16.msra.mxu0 %v415
    %641 = vmatpush.bf16.msra.mxu0 %v411
    %642 = vmatpush.bf16.msra.mxu0 %v407
    %643 = vmatmul.bf16.gmra.mxu0 %v595
    %v644 = vpop.f32.mrf.mxu0
    %v645 = vadd.f32 0.0, %v644
    %v646 = vpop.f32.mrf.mxu0
    %647 = vdwg.mxu0
    %v652 = vrot.slane %v606, 4
    %v653 = vrot.slane %v619, 4
    %v654 = vrot.slane %v632, 4
    %v655 = vrot.slane %v645, 4
    %v660 = vadd.f32 %v209, %v652
    %v661 = vadd.f32 %v228, %v653
    %v662 = vadd.f32 %v247, %v654
    %v663 = vadd.f32 %v266, %v655
    %v664 = vxor.u32 %v660, 2147483648
    %v665 = vmul.f32 %v664, 1.442695
    %v666 = vpow.pop %v665
    %v667 = vadd.f32 %v666, 1.0
    %v668 = vrcp.pop %v667
    %v669 = vmul.f32 %v667, %v668
    %v670 = vsub.f32 1.0, %v669
    %v671 = vmul.f32 %v668, %v670
    %v672 = vadd.f32 %v668, %v671
    %vm673 = vweird.f32 %v667
    %vm674 = vweird.f32 %v668
    %vm675 = vmor %vm673, %vm674
    %v676 = vsel %vm675, %v668, %v672
    %v677 = vand.u32 2147483647, %v667
    %vm678 = vcmp.eq.f32.partialorder %v677, 8.507059e+37
    %v679 = vand.u32 %v667, 2147483648
    %v680 = vor.u32 1.1754944e-38, %v679
    %v681 = vsel %vm678, %v680, %v676
    %v682 = vmul.f32 1.0, %v681
    %v683 = vxor.u32 %v661, 2147483648
    %v684 = vmul.f32 %v683, 1.442695
    %v685 = vpow.pop %v684
    %v686 = vadd.f32 %v685, 1.0
    %v687 = vrcp.pop %v686
    %v688 = vmul.f32 %v686, %v687
    %v689 = vsub.f32 1.0, %v688
    %v690 = vmul.f32 %v687, %v689
    %v691 = vadd.f32 %v687, %v690
    %vm692 = vweird.f32 %v686
    %vm693 = vweird.f32 %v687
    %vm694 = vmor %vm692, %vm693
    %v695 = vsel %vm694, %v687, %v691
    %v696 = vand.u32 2147483647, %v686
    %vm697 = vcmp.eq.f32.partialorder %v696, 8.507059e+37
    %v698 = vand.u32 %v686, 2147483648
    %v699 = vor.u32 1.1754944e-38, %v698
    %v700 = vsel %vm697, %v699, %v695
    %v701 = vmul.f32 1.0, %v700
    %v702 = vtanh.pop %v662
    %v703 = vxor.u32 %v663, 2147483648
    %v704 = vmul.f32 %v703, 1.442695
    %v705 = vpow.pop %v704
    %v706 = vadd.f32 %v705, 1.0
    %v707 = vrcp.pop %v706
    %v708 = vmul.f32 %v706, %v707
    %v709 = vsub.f32 1.0, %v708
    %v710 = vmul.f32 %v707, %v709
    %v711 = vadd.f32 %v707, %v710
    %vm712 = vweird.f32 %v706
    %vm713 = vweird.f32 %v707
    %vm714 = vmor %vm712, %vm713
    %v715 = vsel %vm714, %v707, %v711
    %v716 = vand.u32 2147483647, %v706
    %vm717 = vcmp.eq.f32.partialorder %v716, 8.507059e+37
    %v718 = vand.u32 %v706, 2147483648
    %v719 = vor.u32 1.1754944e-38, %v718
    %v720 = vsel %vm717, %v719, %v715
    %v721 = vmul.f32 1.0, %v720
    %v723 = vrot.slane %v593, 4
    %v725 = vmul.f32 %v701, %v723
    %v726 = vmul.f32 %v682, %v702
    %v727 = vadd.f32 %v725, %v726
    %v728 = vtanh.pop %v727
    %v729 = vmul.f32 %v721, %v728
    %vm730 = vcmp.gt.s32.totalorder %v307, 1
    %v731 = vsel %vm730, 1, 0
    %732 = vset.pattern.permute.xlu0 0
    %733 = vperm.xlu0 %732, %v731
    %v734 = vpop.permute.xlu0 %733
    %vm735 = vcmp.eq.s32.totalorder %v734, 1
    %v737 = vrot.slane %v727, 4
    %v739 = vsel %vm735, %v737, %v593
    %v741 = vrot.slane %v729, 4
    %v743 = vsel %vm735, %v741, %v594
    %v744 = vpack.c.bf16 %v743, %v743
    %745 = vmatpush.bf16.msra.mxu0 %v432
    %746 = vmatpush.bf16.msra.mxu0 %v428
    %747 = vmatpush.bf16.msra.mxu0 %v424
    %748 = vmatpush.bf16.msra.mxu0 %v420
    %749 = vmatpush.bf16.msra.mxu0 %v416
    %750 = vmatpush.bf16.msra.mxu0 %v412
    %751 = vmatpush.bf16.msra.mxu0 %v408
    %752 = vmatpush.bf16.msra.mxu0 %v404
    %753 = vmatmul.bf16.gmra.mxu0 %v744
    %v754 = vpop.f32.mrf.mxu0
    %v755 = vadd.f32 0.0, %v754
    %v756 = vpop.f32.mrf.mxu0
    %757 = vdwg.mxu0
    %758 = vmatpush.bf16.msra.mxu0 %v433
    %759 = vmatpush.bf16.msra.mxu0 %v429
    %760 = vmatpush.bf16.msra.mxu0 %v425
    %761 = vmatpush.bf16.msra.mxu0 %v421
    %762 = vmatpush.bf16.msra.mxu0 %v417
    %763 = vmatpush.bf16.msra.mxu0 %v413
    %764 = vmatpush.bf16.msra.mxu0 %v409
    %765 = vmatpush.bf16.msra.mxu0 %v405
    %766 = vmatmul.bf16.gmra.mxu0 %v744
    %v767 = vpop.f32.mrf.mxu0
    %v768 = vadd.f32 0.0, %v767
    %v769 = vpop.f32.mrf.mxu0
    %770 = vdwg.mxu0
    %771 = vmatpush.bf16.msra.mxu0 %v434
    %772 = vmatpush.bf16.msra.mxu0 %v430
    %773 = vmatpush.bf16.msra.mxu0 %v426
    %774 = vmatpush.bf16.msra.mxu0 %v422
    %775 = vmatpush.bf16.msra.mxu0 %v418
    %776 = vmatpush.bf16.msra.mxu0 %v414
    %777 = vmatpush.bf16.msra.mxu0 %v410
    %778 = vmatpush.bf16.msra.mxu0 %v406
    %779 = vmatmul.bf16.gmra.mxu0 %v744
    %v780 = vpop.f32.mrf.mxu0
    %v781 = vadd.f32 0.0, %v780
    %v782 = vpop.f32.mrf.mxu0
    %783 = vdwg.mxu0
    %784 = vmatpush.bf16.msra.mxu0 %v435
    %785 = vmatpush.bf16.msra.mxu0 %v431
    %786 = vmatpush.bf16.msra.mxu0 %v427
    %787 = vmatpush.bf16.msra.mxu0 %v423
    %788 = vmatpush.bf16.msra.mxu0 %v419
    %789 = vmatpush.bf16.msra.mxu0 %v415
    %790 = vmatpush.bf16.msra.mxu0 %v411
    %791 = vmatpush.bf16.msra.mxu0 %v407
    %792 = vmatmul.bf16.gmra.mxu0 %v744
    %v793 = vpop.f32.mrf.mxu0
    %v794 = vadd.f32 0.0, %v793
    %v795 = vpop.f32.mrf.mxu0
    %796 = vdwg.mxu0
    %v797 = vadd.f32 %v211, %v755
    %v798 = vadd.f32 %v230, %v768
    %v799 = vadd.f32 %v249, %v781
    %v800 = vadd.f32 %v268, %v794
    %v801 = vxor.u32 %v797, 2147483648
    %v802 = vmul.f32 %v801, 1.442695
    %v803 = vpow.pop %v802
    %v804 = vadd.f32 %v803, 1.0
    %v805 = vrcp.pop %v804
    %v806 = vmul.f32 %v804, %v805
    %v807 = vsub.f32 1.0, %v806
    %v808 = vmul.f32 %v805, %v807
    %v809 = vadd.f32 %v805, %v808
    %vm810 = vweird.f32 %v804
    %vm811 = vweird.f32 %v805
    %vm812 = vmor %vm810, %vm811
    %v813 = vsel %vm812, %v805, %v809
    %v814 = vand.u32 2147483647, %v804
    %vm815 = vcmp.eq.f32.partialorder %v814, 8.507059e+37
    %v816 = vand.u32 %v804, 2147483648
    %v817 = vor.u32 1.1754944e-38, %v816
    %v818 = vsel %vm815, %v817, %v813
    %v819 = vmul.f32 1.0, %v818
    %v820 = vxor.u32 %v798, 2147483648
    %v821 = vmul.f32 %v820, 1.442695
    %v822 = vpow.pop %v821
    %v823 = vadd.f32 %v822, 1.0
    %v824 = vrcp.pop %v823
    %v825 = vmul.f32 %v823, %v824
    %v826 = vsub.f32 1.0, %v825
    %v827 = vmul.f32 %v824, %v826
    %v828 = vadd.f32 %v824, %v827
    %vm829 = vweird.f32 %v823
    %vm830 = vweird.f32 %v824
    %vm831 = vmor %vm829, %vm830
    %v832 = vsel %vm831, %v824, %v828
    %v833 = vand.u32 2147483647, %v823
    %vm834 = vcmp.eq.f32.partialorder %v833, 8.507059e+37
    %v835 = vand.u32 %v823, 2147483648
    %v836 = vor.u32 1.1754944e-38, %v835
    %v837 = vsel %vm834, %v836, %v832
    %v838 = vmul.f32 1.0, %v837
    %v839 = vtanh.pop %v799
    %v840 = vxor.u32 %v800, 2147483648
    %v841 = vmul.f32 %v840, 1.442695
    %v842 = vpow.pop %v841
    %v843 = vadd.f32 %v842, 1.0
    %v844 = vrcp.pop %v843
    %v845 = vmul.f32 %v843, %v844
    %v846 = vsub.f32 1.0, %v845
    %v847 = vmul.f32 %v844, %v846
    %v848 = vadd.f32 %v844, %v847
    %vm849 = vweird.f32 %v843
    %vm850 = vweird.f32 %v844
    %vm851 = vmor %vm849, %vm850
    %v852 = vsel %vm851, %v844, %v848
    %v853 = vand.u32 2147483647, %v843
    %vm854 = vcmp.eq.f32.partialorder %v853, 8.507059e+37
    %v855 = vand.u32 %v843, 2147483648
    %v856 = vor.u32 1.1754944e-38, %v855
    %v857 = vsel %vm854, %v856, %v852
    %v858 = vmul.f32 1.0, %v857
    %v859 = vmul.f32 %v838, %v739
    %v860 = vmul.f32 %v819, %v839
    %v861 = vadd.f32 %v859, %v860
    %v862 = vtanh.pop %v861
    %v863 = vmul.f32 %v858, %v862
    %vm864 = vcmp.gt.s32.totalorder %v307, 2
    %v865 = vsel %vm864, 1, 0
    %866 = vset.pattern.permute.xlu0 0
    %867 = vperm.xlu0 %866, %v865
    %v868 = vpop.permute.xlu0 %867
    %vm869 = vcmp.eq.s32.totalorder %v868, 1
    %v870 = vsel %vm869, %v861, %v739
    %v871 = vsel %vm869, %v863, %v743
    %v872 = vpack.c.bf16 %v871, %v871
    %873 = vmatpush.bf16.msra.mxu0 %v432
    %874 = vmatpush.bf16.msra.mxu0 %v428
    %875 = vmatpush.bf16.msra.mxu0 %v424
    %876 = vmatpush.bf16.msra.mxu0 %v420
    %877 = vmatpush.bf16.msra.mxu0 %v416
    %878 = vmatpush.bf16.msra.mxu0 %v412
    %879 = vmatpush.bf16.msra.mxu0 %v408
    %880 = vmatpush.bf16.msra.mxu0 %v404
    %881 = vmatmul.bf16.gmra.mxu0 %v872
    %v882 = vpop.f32.mrf.mxu0
    %v883 = vadd.f32 0.0, %v882
    %v884 = vpop.f32.mrf.mxu0
    %885 = vdwg.mxu0
    %886 = vmatpush.bf16.msra.mxu0 %v433
    %887 = vmatpush.bf16.msra.mxu0 %v429
    %888 = vmatpush.bf16.msra.mxu0 %v425
    %889 = vmatpush.bf16.msra.mxu0 %v421
    %890 = vmatpush.bf16.msra.mxu0 %v417
    %891 = vmatpush.bf16.msra.mxu0 %v413
    %892 = vmatpush.bf16.msra.mxu0 %v409
    %893 = vmatpush.bf16.msra.mxu0 %v405
    %894 = vmatmul.bf16.gmra.mxu0 %v872
    %v895 = vpop.f32.mrf.mxu0
    %v896 = vadd.f32 0.0, %v895
    %v897 = vpop.f32.mrf.mxu0
    %898 = vdwg.mxu0
    %899 = vmatpush.bf16.msra.mxu0 %v434
    %900 = vmatpush.bf16.msra.mxu0 %v430
    %901 = vmatpush.bf16.msra.mxu0 %v426
    %902 = vmatpush.bf16.msra.mxu0 %v422
    %903 = vmatpush.bf16.msra.mxu0 %v418
    %904 = vmatpush.bf16.msra.mxu0 %v414
    %905 = vmatpush.bf16.msra.mxu0 %v410
    %906 = vmatpush.bf16.msra.mxu0 %v406
    %907 = vmatmul.bf16.gmra.mxu0 %v872
    %v908 = vpop.f32.mrf.mxu0
    %v909 = vadd.f32 0.0, %v908
    %v910 = vpop.f32.mrf.mxu0
    %911 = vdwg.mxu0
    %912 = vmatpush.bf16.msra.mxu0 %v435
    %913 = vmatpush.bf16.msra.mxu0 %v431
    %914 = vmatpush.bf16.msra.mxu0 %v427
    %915 = vmatpush.bf16.msra.mxu0 %v423
    %916 = vmatpush.bf16.msra.mxu0 %v419
    %917 = vmatpush.bf16.msra.mxu0 %v415
    %918 = vmatpush.bf16.msra.mxu0 %v411
    %919 = vmatpush.bf16.msra.mxu0 %v407
    %920 = vmatmul.bf16.gmra.mxu0 %v872
    %v921 = vpop.f32.mrf.mxu0
    %v922 = vadd.f32 0.0, %v921
    %v923 = vpop.f32.mrf.mxu0
    %924 = vdwg.mxu0
    %v929 = vrot.slane %v883, 4
    %v930 = vrot.slane %v896, 4
    %v931 = vrot.slane %v909, 4
    %v932 = vrot.slane %v922, 4
    %v937 = vadd.f32 %v211, %v929
    %v938 = vadd.f32 %v230, %v930
    %v939 = vadd.f32 %v249, %v931
    %v940 = vadd.f32 %v268, %v932
    %v941 = vxor.u32 %v937, 2147483648
    %v942 = vmul.f32 %v941, 1.442695
    %v943 = vpow.pop %v942
    %v944 = vadd.f32 %v943, 1.0
    %v945 = vrcp.pop %v944
    %v946 = vmul.f32 %v944, %v945
    %v947 = vsub.f32 1.0, %v946
    %v948 = vmul.f32 %v945, %v947
    %v949 = vadd.f32 %v945, %v948
    %vm950 = vweird.f32 %v944
    %vm951 = vweird.f32 %v945
    %vm952 = vmor %vm950, %vm951
    %v953 = vsel %vm952, %v945, %v949
    %v954 = vand.u32 2147483647, %v944
    %vm955 = vcmp.eq.f32.partialorder %v954, 8.507059e+37
    %v956 = vand.u32 %v944, 2147483648
    %v957 = vor.u32 1.1754944e-38, %v956
    %v958 = vsel %vm955, %v957, %v953
    %v959 = vmul.f32 1.0, %v958
    %v960 = vxor.u32 %v938, 2147483648
    %v961 = vmul.f32 %v960, 1.442695
    %v962 = vpow.pop %v961
    %v963 = vadd.f32 %v962, 1.0
    %v964 = vrcp.pop %v963
    %v965 = vmul.f32 %v963, %v964
    %v966 = vsub.f32 1.0, %v965
    %v967 = vmul.f32 %v964, %v966
    %v968 = vadd.f32 %v964, %v967
    %vm969 = vweird.f32 %v963
    %vm970 = vweird.f32 %v964
    %vm971 = vmor %vm969, %vm970
    %v972 = vsel %vm971, %v964, %v968
    %v973 = vand.u32 2147483647, %v963
    %vm974 = vcmp.eq.f32.partialorder %v973, 8.507059e+37
    %v975 = vand.u32 %v963, 2147483648
    %v976 = vor.u32 1.1754944e-38, %v975
    %v977 = vsel %vm974, %v976, %v972
    %v978 = vmul.f32 1.0, %v977
    %v979 = vtanh.pop %v939
    %v980 = vxor.u32 %v940, 2147483648
    %v981 = vmul.f32 %v980, 1.442695
    %v982 = vpow.pop %v981
    %v983 = vadd.f32 %v982, 1.0
    %v984 = vrcp.pop %v983
    %v985 = vmul.f32 %v983, %v984
    %v986 = vsub.f32 1.0, %v985
    %v987 = vmul.f32 %v984, %v986
    %v988 = vadd.f32 %v984, %v987
    %vm989 = vweird.f32 %v983
    %vm990 = vweird.f32 %v984
    %vm991 = vmor %vm989, %vm990
    %v992 = vsel %vm991, %v984, %v988
    %v993 = vand.u32 2147483647, %v983
    %vm994 = vcmp.eq.f32.partialorder %v993, 8.507059e+37
    %v995 = vand.u32 %v983, 2147483648
    %v996 = vor.u32 1.1754944e-38, %v995
    %v997 = vsel %vm994, %v996, %v992
    %v998 = vmul.f32 1.0, %v997
    %v1000 = vrot.slane %v870, 4
    %v1002 = vmul.f32 %v978, %v1000
    %v1003 = vmul.f32 %v959, %v979
    %v1004 = vadd.f32 %v1002, %v1003
    %v1005 = vtanh.pop %v1004
    %v1006 = vmul.f32 %v998, %v1005
    %vm1007 = vcmp.gt.s32.totalorder %v307, 3
    %v1008 = vsel %vm1007, 1, 0
    %1009 = vset.pattern.permute.xlu0 0
    %1010 = vperm.xlu0 %1009, %v1008
    %v1011 = vpop.permute.xlu0 %1010
    %vm1012 = vcmp.eq.s32.totalorder %v1011, 1
    %v1014 = vrot.slane %v1004, 4
    %v1016 = vsel %vm1012, %v1014, %v870
    %v1018 = vrot.slane %v1006, 4
    %v1020 = vsel %vm1012, %v1018, %v871
    %v1021 = vpack.c.bf16 %v1020, %v1020
    %1022 = vmatpush.bf16.msra.mxu0 %v432
    %1023 = vmatpush.bf16.msra.mxu0 %v428
    %1024 = vmatpush.bf16.msra.mxu0 %v424
    %1025 = vmatpush.bf16.msra.mxu0 %v420
    %1026 = vmatpush.bf16.msra.mxu0 %v416
    %1027 = vmatpush.bf16.msra.mxu0 %v412
    %1028 = vmatpush.bf16.msra.mxu0 %v408
    %1029 = vmatpush.bf16.msra.mxu0 %v404
    %1030 = vmatmul.bf16.gmra.mxu0 %v1021
    %v1031 = vpop.f32.mrf.mxu0
    %v1032 = vadd.f32 0.0, %v1031
    %v1033 = vpop.f32.mrf.mxu0
    %1034 = vdwg.mxu0
    %1035 = vmatpush.bf16.msra.mxu0 %v433
    %1036 = vmatpush.bf16.msra.mxu0 %v429
    %1037 = vmatpush.bf16.msra.mxu0 %v425
    %1038 = vmatpush.bf16.msra.mxu0 %v421
    %1039 = vmatpush.bf16.msra.mxu0 %v417
    %1040 = vmatpush.bf16.msra.mxu0 %v413
    %1041 = vmatpush.bf16.msra.mxu0 %v409
    %1042 = vmatpush.bf16.msra.mxu0 %v405
    %1043 = vmatmul.bf16.gmra.mxu0 %v1021
    %v1044 = vpop.f32.mrf.mxu0
    %v1045 = vadd.f32 0.0, %v1044
    %v1046 = vpop.f32.mrf.mxu0
    %1047 = vdwg.mxu0
    %1048 = vmatpush.bf16.msra.mxu0 %v434
    %1049 = vmatpush.bf16.msra.mxu0 %v430
    %1050 = vmatpush.bf16.msra.mxu0 %v426
    %1051 = vmatpush.bf16.msra.mxu0 %v422
    %1052 = vmatpush.bf16.msra.mxu0 %v418
    %1053 = vmatpush.bf16.msra.mxu0 %v414
    %1054 = vmatpush.bf16.msra.mxu0 %v410
    %1055 = vmatpush.bf16.msra.mxu0 %v406
    %1056 = vmatmul.bf16.gmra.mxu0 %v1021
    %v1057 = vpop.f32.mrf.mxu0
    %v1058 = vadd.f32 0.0, %v1057
    %v1059 = vpop.f32.mrf.mxu0
    %1060 = vdwg.mxu0
    %1061 = vmatpush.bf16.msra.mxu0 %v435
    %1062 = vmatpush.bf16.msra.mxu0 %v431
    %1063 = vmatpush.bf16.msra.mxu0 %v427
    %1064 = vmatpush.bf16.msra.mxu0 %v423
    %1065 = vmatpush.bf16.msra.mxu0 %v419
    %1066 = vmatpush.bf16.msra.mxu0 %v415
    %1067 = vmatpush.bf16.msra.mxu0 %v411
    %1068 = vmatpush.bf16.msra.mxu0 %v407
    %1069 = vmatmul.bf16.gmra.mxu0 %v1021
    %v1070 = vpop.f32.mrf.mxu0
    %v1071 = vadd.f32 0.0, %v1070
    %v1072 = vpop.f32.mrf.mxu0
    %1073 = vdwg.mxu0
    %v1074 = vadd.f32 %v214, %v1032
    %v1075 = vadd.f32 %v233, %v1045
    %v1076 = vadd.f32 %v252, %v1058
    %v1077 = vadd.f32 %v271, %v1071
    %v1078 = vxor.u32 %v1074, 2147483648
    %v1079 = vmul.f32 %v1078, 1.442695
    %v1080 = vpow.pop %v1079
    %v1081 = vadd.f32 %v1080, 1.0
    %v1082 = vrcp.pop %v1081
    %v1083 = vmul.f32 %v1081, %v1082
    %v1084 = vsub.f32 1.0, %v1083
    %v1085 = vmul.f32 %v1082, %v1084
    %v1086 = vadd.f32 %v1082, %v1085
    %vm1087 = vweird.f32 %v1081
    %vm1088 = vweird.f32 %v1082
    %vm1089 = vmor %vm1087, %vm1088
    %v1090 = vsel %vm1089, %v1082, %v1086
    %v1091 = vand.u32 2147483647, %v1081
    %vm1092 = vcmp.eq.f32.partialorder %v1091, 8.507059e+37
    %v1093 = vand.u32 %v1081, 2147483648
    %v1094 = vor.u32 1.1754944e-38, %v1093
    %v1095 = vsel %vm1092, %v1094, %v1090
    %v1096 = vmul.f32 1.0, %v1095
    %v1097 = vxor.u32 %v1075, 2147483648
    %v1098 = vmul.f32 %v1097, 1.442695
    %v1099 = vpow.pop %v1098
    %v1100 = vadd.f32 %v1099, 1.0
    %v1101 = vrcp.pop %v1100
    %v1102 = vmul.f32 %v1100, %v1101
    %v1103 = vsub.f32 1.0, %v1102
    %v1104 = vmul.f32 %v1101, %v1103
    %v1105 = vadd.f32 %v1101, %v1104
    %vm1106 = vweird.f32 %v1100
    %vm1107 = vweird.f32 %v1101
    %vm1108 = vmor %vm1106, %vm1107
    %v1109 = vsel %vm1108, %v1101, %v1105
    %v1110 = vand.u32 2147483647, %v1100
    %vm1111 = vcmp.eq.f32.partialorder %v1110, 8.507059e+37
    %v1112 = vand.u32 %v1100, 2147483648
    %v1113 = vor.u32 1.1754944e-38, %v1112
    %v1114 = vsel %vm1111, %v1113, %v1109
    %v1115 = vmul.f32 1.0, %v1114
    %v1116 = vtanh.pop %v1076
    %v1117 = vxor.u32 %v1077, 2147483648
    %v1118 = vmul.f32 %v1117, 1.442695
    %v1119 = vpow.pop %v1118
    %v1120 = vadd.f32 %v1119, 1.0
    %v1121 = vrcp.pop %v1120
    %v1122 = vmul.f32 %v1120, %v1121
    %v1123 = vsub.f32 1.0, %v1122
    %v1124 = vmul.f32 %v1121, %v1123
    %v1125 = vadd.f32 %v1121, %v1124
    %vm1126 = vweird.f32 %v1120
    %vm1127 = vweird.f32 %v1121
    %vm1128 = vmor %vm1126, %vm1127
    %v1129 = vsel %vm1128, %v1121, %v1125
    %v1130 = vand.u32 2147483647, %v1120
    %vm1131 = vcmp.eq.f32.partialorder %v1130, 8.507059e+37
    %v1132 = vand.u32 %v1120, 2147483648
    %v1133 = vor.u32 1.1754944e-38, %v1132
    %v1134 = vsel %vm1131, %v1133, %v1129
    %v1135 = vmul.f32 1.0, %v1134
    %v1136 = vmul.f32 %v1115, %v1016
    %v1137 = vmul.f32 %v1096, %v1116
    %v1138 = vadd.f32 %v1136, %v1137
    %v1139 = vtanh.pop %v1138
    %v1140 = vmul.f32 %v1135, %v1139
    %vm1141 = vcmp.gt.s32.totalorder %v307, 4
    %v1142 = vsel %vm1141, 1, 0
    %1143 = vset.pattern.permute.xlu0 0
    %1144 = vperm.xlu0 %1143, %v1142
    %v1145 = vpop.permute.xlu0 %1144
    %vm1146 = vcmp.eq.s32.totalorder %v1145, 1
    %v1147 = vsel %vm1146, %v1138, %v1016
    %v1148 = vsel %vm1146, %v1140, %v1020
    %v1149 = vpack.c.bf16 %v1148, %v1148
    %1150 = vmatpush.bf16.msra.mxu0 %v432
    %1151 = vmatpush.bf16.msra.mxu0 %v428
    %1152 = vmatpush.bf16.msra.mxu0 %v424
    %1153 = vmatpush.bf16.msra.mxu0 %v420
    %1154 = vmatpush.bf16.msra.mxu0 %v416
    %1155 = vmatpush.bf16.msra.mxu0 %v412
    %1156 = vmatpush.bf16.msra.mxu0 %v408
    %1157 = vmatpush.bf16.msra.mxu0 %v404
    %1158 = vmatmul.bf16.gmra.mxu0 %v1149
    %v1159 = vpop.f32.mrf.mxu0
    %v1160 = vadd.f32 0.0, %v1159
    %v1161 = vpop.f32.mrf.mxu0
    %1162 = vdwg.mxu0
    %1163 = vmatpush.bf16.msra.mxu0 %v433
    %1164 = vmatpush.bf16.msra.mxu0 %v429
    %1165 = vmatpush.bf16.msra.mxu0 %v425
    %1166 = vmatpush.bf16.msra.mxu0 %v421
    %1167 = vmatpush.bf16.msra.mxu0 %v417
    %1168 = vmatpush.bf16.msra.mxu0 %v413
    %1169 = vmatpush.bf16.msra.mxu0 %v409
    %1170 = vmatpush.bf16.msra.mxu0 %v405
    %1171 = vmatmul.bf16.gmra.mxu0 %v1149
    %v1172 = vpop.f32.mrf.mxu0
    %v1173 = vadd.f32 0.0, %v1172
    %v1174 = vpop.f32.mrf.mxu0
    %1175 = vdwg.mxu0
    %1176 = vmatpush.bf16.msra.mxu0 %v434
    %1177 = vmatpush.bf16.msra.mxu0 %v430
    %1178 = vmatpush.bf16.msra.mxu0 %v426
    %1179 = vmatpush.bf16.msra.mxu0 %v422
    %1180 = vmatpush.bf16.msra.mxu0 %v418
    %1181 = vmatpush.bf16.msra.mxu0 %v414
    %1182 = vmatpush.bf16.msra.mxu0 %v410
    %1183 = vmatpush.bf16.msra.mxu0 %v406
    %1184 = vmatmul.bf16.gmra.mxu0 %v1149
    %v1185 = vpop.f32.mrf.mxu0
    %v1186 = vadd.f32 0.0, %v1185
    %v1187 = vpop.f32.mrf.mxu0
    %1188 = vdwg.mxu0
    %1189 = vmatpush.bf16.msra.mxu0 %v435
    %1190 = vmatpush.bf16.msra.mxu0 %v431
    %1191 = vmatpush.bf16.msra.mxu0 %v427
    %1192 = vmatpush.bf16.msra.mxu0 %v423
    %1193 = vmatpush.bf16.msra.mxu0 %v419
    %1194 = vmatpush.bf16.msra.mxu0 %v415
    %1195 = vmatpush.bf16.msra.mxu0 %v411
    %1196 = vmatpush.bf16.msra.mxu0 %v407
    %1197 = vmatmul.bf16.gmra.mxu0 %v1149
    %v1198 = vpop.f32.mrf.mxu0
    %v1199 = vadd.f32 0.0, %v1198
    %v1200 = vpop.f32.mrf.mxu0
    %1201 = vdwg.mxu0
    %v1206 = vrot.slane %v1160, 4
    %v1207 = vrot.slane %v1173, 4
    %v1208 = vrot.slane %v1186, 4
    %v1209 = vrot.slane %v1199, 4
    %v1214 = vadd.f32 %v214, %v1206
    %v1215 = vadd.f32 %v233, %v1207
    %v1216 = vadd.f32 %v252, %v1208
    %v1217 = vadd.f32 %v271, %v1209
    %v1218 = vxor.u32 %v1214, 2147483648
    %v1219 = vmul.f32 %v1218, 1.442695
    %v1220 = vpow.pop %v1219
    %v1221 = vadd.f32 %v1220, 1.0
    %v1222 = vrcp.pop %v1221
    %v1223 = vmul.f32 %v1221, %v1222
    %v1224 = vsub.f32 1.0, %v1223
    %v1225 = vmul.f32 %v1222, %v1224
    %v1226 = vadd.f32 %v1222, %v1225
    %vm1227 = vweird.f32 %v1221
    %vm1228 = vweird.f32 %v1222
    %vm1229 = vmor %vm1227, %vm1228
    %v1230 = vsel %vm1229, %v1222, %v1226
    %v1231 = vand.u32 2147483647, %v1221
    %vm1232 = vcmp.eq.f32.partialorder %v1231, 8.507059e+37
    %v1233 = vand.u32 %v1221, 2147483648
    %v1234 = vor.u32 1.1754944e-38, %v1233
    %v1235 = vsel %vm1232, %v1234, %v1230
    %v1236 = vmul.f32 1.0, %v1235
    %v1237 = vxor.u32 %v1215, 2147483648
    %v1238 = vmul.f32 %v1237, 1.442695
    %v1239 = vpow.pop %v1238
    %v1240 = vadd.f32 %v1239, 1.0
    %v1241 = vrcp.pop %v1240
    %v1242 = vmul.f32 %v1240, %v1241
    %v1243 = vsub.f32 1.0, %v1242
    %v1244 = vmul.f32 %v1241, %v1243
    %v1245 = vadd.f32 %v1241, %v1244
    %vm1246 = vweird.f32 %v1240
    %vm1247 = vweird.f32 %v1241
    %vm1248 = vmor %vm1246, %vm1247
    %v1249 = vsel %vm1248, %v1241, %v1245
    %v1250 = vand.u32 2147483647, %v1240
    %vm1251 = vcmp.eq.f32.partialorder %v1250, 8.507059e+37
    %v1252 = vand.u32 %v1240, 2147483648
    %v1253 = vor.u32 1.1754944e-38, %v1252
    %v1254 = vsel %vm1251, %v1253, %v1249
    %v1255 = vmul.f32 1.0, %v1254
    %v1256 = vtanh.pop %v1216
    %v1257 = vxor.u32 %v1217, 2147483648
    %v1258 = vmul.f32 %v1257, 1.442695
    %v1259 = vpow.pop %v1258
    %v1260 = vadd.f32 %v1259, 1.0
    %v1261 = vrcp.pop %v1260
    %v1262 = vmul.f32 %v1260, %v1261
    %v1263 = vsub.f32 1.0, %v1262
    %v1264 = vmul.f32 %v1261, %v1263
    %v1265 = vadd.f32 %v1261, %v1264
    %vm1266 = vweird.f32 %v1260
    %vm1267 = vweird.f32 %v1261
    %vm1268 = vmor %vm1266, %vm1267
    %v1269 = vsel %vm1268, %v1261, %v1265
    %v1270 = vand.u32 2147483647, %v1260
    %vm1271 = vcmp.eq.f32.partialorder %v1270, 8.507059e+37
    %v1272 = vand.u32 %v1260, 2147483648
    %v1273 = vor.u32 1.1754944e-38, %v1272
    %v1274 = vsel %vm1271, %v1273, %v1269
    %v1275 = vmul.f32 1.0, %v1274
    %v1277 = vrot.slane %v1147, 4
    %v1279 = vmul.f32 %v1255, %v1277
    %v1280 = vmul.f32 %v1236, %v1256
    %v1281 = vadd.f32 %v1279, %v1280
    %v1282 = vtanh.pop %v1281
    %v1283 = vmul.f32 %v1275, %v1282
    %vm1284 = vcmp.gt.s32.totalorder %v307, 5
    %v1285 = vsel %vm1284, 1, 0
    %1286 = vset.pattern.permute.xlu0 0
    %1287 = vperm.xlu0 %1286, %v1285
    %v1288 = vpop.permute.xlu0 %1287
    %vm1289 = vcmp.eq.s32.totalorder %v1288, 1
    %v1291 = vrot.slane %v1281, 4
    %v1293 = vsel %vm1289, %v1291, %v1147
    %v1295 = vrot.slane %v1283, 4
    %v1297 = vsel %vm1289, %v1295, %v1148
    %v1298 = vpack.c.bf16 %v1297, %v1297
    %1299 = vmatpush.bf16.msra.mxu0 %v432
    %1300 = vmatpush.bf16.msra.mxu0 %v428
    %1301 = vmatpush.bf16.msra.mxu0 %v424
    %1302 = vmatpush.bf16.msra.mxu0 %v420
    %1303 = vmatpush.bf16.msra.mxu0 %v416
    %1304 = vmatpush.bf16.msra.mxu0 %v412
    %1305 = vmatpush.bf16.msra.mxu0 %v408
    %1306 = vmatpush.bf16.msra.mxu0 %v404
    %1307 = vmatmul.bf16.gmra.mxu0 %v1298
    %v1308 = vpop.f32.mrf.mxu0
    %v1309 = vadd.f32 0.0, %v1308
    %v1310 = vpop.f32.mrf.mxu0
    %1311 = vdwg.mxu0
    %1312 = vmatpush.bf16.msra.mxu0 %v433
    %1313 = vmatpush.bf16.msra.mxu0 %v429
    %1314 = vmatpush.bf16.msra.mxu0 %v425
    %1315 = vmatpush.bf16.msra.mxu0 %v421
    %1316 = vmatpush.bf16.msra.mxu0 %v417
    %1317 = vmatpush.bf16.msra.mxu0 %v413
    %1318 = vmatpush.bf16.msra.mxu0 %v409
    %1319 = vmatpush.bf16.msra.mxu0 %v405
    %1320 = vmatmul.bf16.gmra.mxu0 %v1298
    %v1321 = vpop.f32.mrf.mxu0
    %v1322 = vadd.f32 0.0, %v1321
    %v1323 = vpop.f32.mrf.mxu0
    %1324 = vdwg.mxu0
    %1325 = vmatpush.bf16.msra.mxu0 %v434
    %1326 = vmatpush.bf16.msra.mxu0 %v430
    %1327 = vmatpush.bf16.msra.mxu0 %v426
    %1328 = vmatpush.bf16.msra.mxu0 %v422
    %1329 = vmatpush.bf16.msra.mxu0 %v418
    %1330 = vmatpush.bf16.msra.mxu0 %v414
    %1331 = vmatpush.bf16.msra.mxu0 %v410
    %1332 = vmatpush.bf16.msra.mxu0 %v406
    %1333 = vmatmul.bf16.gmra.mxu0 %v1298
    %v1334 = vpop.f32.mrf.mxu0
    %v1335 = vadd.f32 0.0, %v1334
    %v1336 = vpop.f32.mrf.mxu0
    %1337 = vdwg.mxu0
    %1338 = vmatpush.bf16.msra.mxu0 %v435
    %1339 = vmatpush.bf16.msra.mxu0 %v431
    %1340 = vmatpush.bf16.msra.mxu0 %v427
    %1341 = vmatpush.bf16.msra.mxu0 %v423
    %1342 = vmatpush.bf16.msra.mxu0 %v419
    %1343 = vmatpush.bf16.msra.mxu0 %v415
    %1344 = vmatpush.bf16.msra.mxu0 %v411
    %1345 = vmatpush.bf16.msra.mxu0 %v407
    %1346 = vmatmul.bf16.gmra.mxu0 %v1298
    %v1347 = vpop.f32.mrf.mxu0
    %v1348 = vadd.f32 0.0, %v1347
    %v1349 = vpop.f32.mrf.mxu0
    %1350 = vdwg.mxu0
    %v1351 = vadd.f32 %v216, %v1309
    %v1352 = vadd.f32 %v235, %v1322
    %v1353 = vadd.f32 %v254, %v1335
    %v1354 = vadd.f32 %v273, %v1348
    %v1355 = vxor.u32 %v1351, 2147483648
    %v1356 = vmul.f32 %v1355, 1.442695
    %v1357 = vpow.pop %v1356
    %v1358 = vadd.f32 %v1357, 1.0
    %v1359 = vrcp.pop %v1358
    %v1360 = vmul.f32 %v1358, %v1359
    %v1361 = vsub.f32 1.0, %v1360
    %v1362 = vmul.f32 %v1359, %v1361
    %v1363 = vadd.f32 %v1359, %v1362
    %vm1364 = vweird.f32 %v1358
    %vm1365 = vweird.f32 %v1359
    %vm1366 = vmor %vm1364, %vm1365
    %v1367 = vsel %vm1366, %v1359, %v1363
    %v1368 = vand.u32 2147483647, %v1358
    %vm1369 = vcmp.eq.f32.partialorder %v1368, 8.507059e+37
    %v1370 = vand.u32 %v1358, 2147483648
    %v1371 = vor.u32 1.1754944e-38, %v1370
    %v1372 = vsel %vm1369, %v1371, %v1367
    %v1373 = vmul.f32 1.0, %v1372
    %v1374 = vxor.u32 %v1352, 2147483648
    %v1375 = vmul.f32 %v1374, 1.442695
    %v1376 = vpow.pop %v1375
    %v1377 = vadd.f32 %v1376, 1.0
    %v1378 = vrcp.pop %v1377
    %v1379 = vmul.f32 %v1377, %v1378
    %v1380 = vsub.f32 1.0, %v1379
    %v1381 = vmul.f32 %v1378, %v1380
    %v1382 = vadd.f32 %v1378, %v1381
    %vm1383 = vweird.f32 %v1377
    %vm1384 = vweird.f32 %v1378
    %vm1385 = vmor %vm1383, %vm1384
    %v1386 = vsel %vm1385, %v1378, %v1382
    %v1387 = vand.u32 2147483647, %v1377
    %vm1388 = vcmp.eq.f32.partialorder %v1387, 8.507059e+37
    %v1389 = vand.u32 %v1377, 2147483648
    %v1390 = vor.u32 1.1754944e-38, %v1389
    %v1391 = vsel %vm1388, %v1390, %v1386
    %v1392 = vmul.f32 1.0, %v1391
    %v1393 = vtanh.pop %v1353
    %v1394 = vxor.u32 %v1354, 2147483648
    %v1395 = vmul.f32 %v1394, 1.442695
    %v1396 = vpow.pop %v1395
    %v1397 = vadd.f32 %v1396, 1.0
    %v1398 = vrcp.pop %v1397
    %v1399 = vmul.f32 %v1397, %v1398
    %v1400 = vsub.f32 1.0, %v1399
    %v1401 = vmul.f32 %v1398, %v1400
    %v1402 = vadd.f32 %v1398, %v1401
    %vm1403 = vweird.f32 %v1397
    %vm1404 = vweird.f32 %v1398
    %vm1405 = vmor %vm1403, %vm1404
    %v1406 = vsel %vm1405, %v1398, %v1402
    %v1407 = vand.u32 2147483647, %v1397
    %vm1408 = vcmp.eq.f32.partialorder %v1407, 8.507059e+37
    %v1409 = vand.u32 %v1397, 2147483648
    %v1410 = vor.u32 1.1754944e-38, %v1409
    %v1411 = vsel %vm1408, %v1410, %v1406
    %v1412 = vmul.f32 1.0, %v1411
    %v1413 = vmul.f32 %v1392, %v1293
    %v1414 = vmul.f32 %v1373, %v1393
    %v1415 = vadd.f32 %v1413, %v1414
    %v1416 = vtanh.pop %v1415
    %v1417 = vmul.f32 %v1412, %v1416
    %vm1418 = vcmp.gt.s32.totalorder %v307, 6
    %v1419 = vsel %vm1418, 1, 0
    %1420 = vset.pattern.permute.xlu0 0
    %1421 = vperm.xlu0 %1420, %v1419
    %v1422 = vpop.permute.xlu0 %1421
    %vm1423 = vcmp.eq.s32.totalorder %v1422, 1
    %v1424 = vsel %vm1423, %v1415, %v1293
    %v1425 = vsel %vm1423, %v1417, %v1297
    %v1426 = vpack.c.bf16 %v1425, %v1425
    %1427 = vmatpush.bf16.msra.mxu0 %v432
    %1428 = vmatpush.bf16.msra.mxu0 %v428
    %1429 = vmatpush.bf16.msra.mxu0 %v424
    %1430 = vmatpush.bf16.msra.mxu0 %v420
    %1431 = vmatpush.bf16.msra.mxu0 %v416
    %1432 = vmatpush.bf16.msra.mxu0 %v412
    %1433 = vmatpush.bf16.msra.mxu0 %v408
    %1434 = vmatpush.bf16.msra.mxu0 %v404
    %1435 = vmatmul.bf16.gmra.mxu0 %v1426
    %v1436 = vpop.f32.mrf.mxu0
    %v1437 = vadd.f32 0.0, %v1436
    %v1438 = vpop.f32.mrf.mxu0
    %1439 = vdwg.mxu0
    %1440 = vmatpush.bf16.msra.mxu0 %v433
    %1441 = vmatpush.bf16.msra.mxu0 %v429
    %1442 = vmatpush.bf16.msra.mxu0 %v425
    %1443 = vmatpush.bf16.msra.mxu0 %v421
    %1444 = vmatpush.bf16.msra.mxu0 %v417
    %1445 = vmatpush.bf16.msra.mxu0 %v413
    %1446 = vmatpush.bf16.msra.mxu0 %v409
    %1447 = vmatpush.bf16.msra.mxu0 %v405
    %1448 = vmatmul.bf16.gmra.mxu0 %v1426
    %v1449 = vpop.f32.mrf.mxu0
    %v1450 = vadd.f32 0.0, %v1449
    %v1451 = vpop.f32.mrf.mxu0
    %1452 = vdwg.mxu0
    %1453 = vmatpush.bf16.msra.mxu0 %v434
    %1454 = vmatpush.bf16.msra.mxu0 %v430
    %1455 = vmatpush.bf16.msra.mxu0 %v426
    %1456 = vmatpush.bf16.msra.mxu0 %v422
    %1457 = vmatpush.bf16.msra.mxu0 %v418
    %1458 = vmatpush.bf16.msra.mxu0 %v414
    %1459 = vmatpush.bf16.msra.mxu0 %v410
    %1460 = vmatpush.bf16.msra.mxu0 %v406
    %1461 = vmatmul.bf16.gmra.mxu0 %v1426
    %v1462 = vpop.f32.mrf.mxu0
    %v1463 = vadd.f32 0.0, %v1462
    %v1464 = vpop.f32.mrf.mxu0
    %1465 = vdwg.mxu0
    %v1469 = vrot.slane %v1437, 4
    %v1470 = vrot.slane %v1450, 4
    %v1471 = vrot.slane %v1463, 4
    %v1475 = vadd.f32 %v216, %v1469
    %v1476 = vadd.f32 %v235, %v1470
    %v1477 = vadd.f32 %v254, %v1471
    %v1478 = vxor.u32 %v1475, 2147483648
    %v1479 = vmul.f32 %v1478, 1.442695
    %v1480 = vpow.pop %v1479
    %v1481 = vadd.f32 %v1480, 1.0
    %v1482 = vrcp.pop %v1481
    %v1483 = vmul.f32 %v1481, %v1482
    %v1484 = vsub.f32 1.0, %v1483
    %v1485 = vmul.f32 %v1482, %v1484
    %v1486 = vadd.f32 %v1482, %v1485
    %vm1487 = vweird.f32 %v1481
    %vm1488 = vweird.f32 %v1482
    %vm1489 = vmor %vm1487, %vm1488
    %v1490 = vsel %vm1489, %v1482, %v1486
    %v1491 = vand.u32 2147483647, %v1481
    %vm1492 = vcmp.eq.f32.partialorder %v1491, 8.507059e+37
    %v1493 = vand.u32 %v1481, 2147483648
    %v1494 = vor.u32 1.1754944e-38, %v1493
    %v1495 = vsel %vm1492, %v1494, %v1490
    %v1496 = vmul.f32 1.0, %v1495
    %v1497 = vxor.u32 %v1476, 2147483648
    %v1498 = vmul.f32 %v1497, 1.442695
    %v1499 = vpow.pop %v1498
    %v1500 = vadd.f32 %v1499, 1.0
    %v1501 = vrcp.pop %v1500
    %v1502 = vmul.f32 %v1500, %v1501
    %v1503 = vsub.f32 1.0, %v1502
    %v1504 = vmul.f32 %v1501, %v1503
    %v1505 = vadd.f32 %v1501, %v1504
    %vm1506 = vweird.f32 %v1500
    %vm1507 = vweird.f32 %v1501
    %vm1508 = vmor %vm1506, %vm1507
    %v1509 = vsel %vm1508, %v1501, %v1505
    %v1510 = vand.u32 2147483647, %v1500
    %vm1511 = vcmp.eq.f32.partialorder %v1510, 8.507059e+37
    %v1512 = vand.u32 %v1500, 2147483648
    %v1513 = vor.u32 1.1754944e-38, %v1512
    %v1514 = vsel %vm1511, %v1513, %v1509
    %v1515 = vmul.f32 1.0, %v1514
    %v1516 = vtanh.pop %v1477
    %v1518 = vrot.slane %v1424, 4
    %v1520 = vmul.f32 %v1515, %v1518
    %v1521 = vmul.f32 %v1496, %v1516
    %v1522 = vadd.f32 %v1520, %v1521
    %vm1523 = vcmp.gt.s32.totalorder %v307, 7
    %v1524 = vsel %vm1523, 1, 0
    %1525 = vset.pattern.permute.xlu0 0
    %1526 = vperm.xlu0 %1525, %v1524
    %v1527 = vpop.permute.xlu0 %1526
    %vm1528 = vcmp.eq.s32.totalorder %v1527, 1
    %v1530 = vrot.slane %v1522, 4
    %v1532 = vsel %vm1528, %v1530, %v1424
    %v1533 = vld [vmem:[%s6] sm:$0x1]
    %v1535 = vperm.slane %v1533, 0
    %v1537 = vmul.f32 %v1532, %v1535
    %v1538 = vld [vmem:[%s7] sm:$0x1]
    %v1540 = vperm.slane %v1538, 0
    %v1542 = vadd.f32 %v1537, %v1540
    %v1543 = vpack.c.bf16 %v1542, %v1542
    %v1544 = vld [vmem:[#allocation5] sm:$0xff]
    %v1545 = vld [vmem:[#allocation5 + $0x8] sm:$0xff]
    %v1546 = vld [vmem:[#allocation5 + $0x10] sm:$0xff]
    %v1547 = vld [vmem:[#allocation5 + $0x18] sm:$0xff]
    %v1548 = vld [vmem:[#allocation5 + $0x20] sm:$0xff]
    %v1549 = vld [vmem:[#allocation5 + $0x28] sm:$0xff]
    %v1550 = vld [vmem:[#allocation5 + $0x30] sm:$0xff]
    %v1551 = vld [vmem:[#allocation5 + $0x38] sm:$0xff]
    %v1552 = vld [vmem:[#allocation5 + $0x40] sm:$0xff]
    %v1553 = vld [vmem:[#allocation5 + $0x48] sm:$0xff]
    %v1554 = vld [vmem:[#allocation5 + $0x50] sm:$0xff]
    %v1555 = vld [vmem:[#allocation5 + $0x58] sm:$0xff]
    %v1556 = vld [vmem:[#allocation5 + $0x60] sm:$0xff]
    %v1557 = vld [vmem:[#allocation5 + $0x68] sm:$0xff]
    %v1558 = vld [vmem:[#allocation5 + $0x70] sm:$0xff]
    %v1559 = vld [vmem:[#allocation5 + $0x78] sm:$0xff]
    %v1560 = vld [vmem:[#allocation5 + $0x80] sm:$0xff]
    %v1561 = vld [vmem:[#allocation5 + $0x88] sm:$0xff]
    %v1562 = vld [vmem:[#allocation5 + $0x90] sm:$0xff]
    %v1563 = vld [vmem:[#allocation5 + $0x98] sm:$0xff]
    %v1564 = vld [vmem:[#allocation5 + $0xa0] sm:$0xff]
    %v1565 = vld [vmem:[#allocation5 + $0xa8] sm:$0xff]
    %v1566 = vld [vmem:[#allocation5 + $0xb0] sm:$0xff]
    %v1567 = vld [vmem:[#allocation5 + $0xb8] sm:$0xff]
    %v1568 = vld [vmem:[#allocation5 + $0xc0] sm:$0xff]
    %v1569 = vld [vmem:[#allocation5 + $0xc8] sm:$0xff]
    %v1570 = vld [vmem:[#allocation5 + $0xd0] sm:$0xff]
    %v1571 = vld [vmem:[#allocation5 + $0xd8] sm:$0xff]
    %v1572 = vld [vmem:[#allocation5 + $0xe0] sm:$0xff]
    %v1573 = vld [vmem:[#allocation5 + $0xe8] sm:$0xff]
    %v1574 = vld [vmem:[#allocation5 + $0xf0] sm:$0xff]
    %v1575 = vld [vmem:[#allocation5 + $0xf8] sm:$0xff]
    %v1576 = vld [vmem:[%s2] sm:$0xf]
    %v1577 = vpack.c.bf16 %v1576, %v1576
    %v1578 = vld [vmem:[%s9] sm:$0xff]
    %v1579 = vld [vmem:[%s9 + $0x8] sm:$0xff]
    %v1580 = vld [vmem:[%s9 + $0x10] sm:$0xff]
    %v1581 = vld [vmem:[%s9 + $0x18] sm:$0xff]
    %v1582 = vld [vmem:[%s9 + $0x20] sm:$0xff]
    %v1583 = vld [vmem:[%s9 + $0x28] sm:$0xff]
    %v1584 = vld [vmem:[%s9 + $0x30] sm:$0xff]
    %v1585 = vld [vmem:[%s9 + $0x38] sm:$0xff]
    %v1594 = vunpack.c.l.b16 %v1578
    %v1595 = vunpack.c.h.b16 %v1578
    %v1596 = vunpack.c.l.b16 %v1579
    %v1597 = vunpack.c.h.b16 %v1579
    %v1598 = vunpack.c.l.b16 %v1580
    %v1599 = vunpack.c.h.b16 %v1580
    %v1600 = vunpack.c.l.b16 %v1581
    %v1601 = vunpack.c.h.b16 %v1581
    %v1602 = vunpack.c.l.b16 %v1582
    %v1603 = vunpack.c.h.b16 %v1582
    %v1604 = vunpack.c.l.b16 %v1583
    %v1605 = vunpack.c.h.b16 %v1583
    %v1606 = vunpack.c.l.b16 %v1584
    %v1607 = vunpack.c.h.b16 %v1584
    %v1608 = vunpack.c.l.b16 %v1585
    %v1609 = vunpack.c.h.b16 %v1585
    %v1610 = vpack.c.b16 %v1598, %v1594
    %v1611 = vpack.c.b16 %v1599, %v1595
    %v1612 = vpack.c.b16 %v1600, %v1596
    %v1613 = vpack.c.b16 %v1601, %v1597
    %v1614 = vpack.c.b16 %v1606, %v1602
    %v1615 = vpack.c.b16 %v1607, %v1603
    %v1616 = vpack.c.b16 %v1608, %v1604
    %v1617 = vpack.c.b16 %v1609, %v1605
    %vm1622 = vcmask 252928
    %v1624 = vsel %vm1622, %v1577, 0
    %vm1626 = vcmask 1046528
    %vm1627 = vcmask 1047552
    %v1628 = vsel %vm1626, 4294967295, 65535
    %v1629 = vsel %vm1627, %v1628, 0
    %v1631 = vand.u32 %v1614, %v1629
    %v1634 = vand.u32 %v1615, %v1629
    %v1637 = vand.u32 %v1616, %v1629
    %v1640 = vand.u32 %v1617, %v1629
    %1642 = vmatpush.bf16.msra.mxu0 0
    %1643 = vmatpush.bf16.msra.mxu0 0
    %1644 = vmatpush.bf16.msra.mxu0 0
    %1645 = vmatpush.bf16.msra.mxu0 0
    %1646 = vmatpush.bf16.msra.mxu0 0
    %1647 = vmatpush.bf16.msra.mxu0 0
    %1648 = vmatpush.bf16.msra.mxu0 %v1631
    %1649 = vmatpush.bf16.msra.mxu0 %v1610
    %1650 = vmatmul.bf16.gmra.mxu0 %v1624
    %v1651 = vpop.f32.mrf.mxu0
    %v1652 = vadd.f32 0.0, %v1651
    %v1653 = vpop.f32.mrf.mxu0
    %1654 = vdwg.mxu0
    %1655 = vmatpush.bf16.msra.mxu0 0
    %1656 = vmatpush.bf16.msra.mxu0 0
    %1657 = vmatpush.bf16.msra.mxu0 0
    %1658 = vmatpush.bf16.msra.mxu0 0
    %1659 = vmatpush.bf16.msra.mxu0 0
    %1660 = vmatpush.bf16.msra.mxu0 0
    %1661 = vmatpush.bf16.msra.mxu0 %v1634
    %1662 = vmatpush.bf16.msra.mxu0 %v1611
    %1663 = vmatmul.bf16.gmra.mxu0 %v1624
    %v1664 = vpop.f32.mrf.mxu0
    %v1665 = vadd.f32 0.0, %v1664
    %v1666 = vpop.f32.mrf.mxu0
    %1667 = vdwg.mxu0
    %1668 = vmatpush.bf16.msra.mxu0 0
    %1669 = vmatpush.bf16.msra.mxu0 0
    %1670 = vmatpush.bf16.msra.mxu0 0
    %1671 = vmatpush.bf16.msra.mxu0 0
    %1672 = vmatpush.bf16.msra.mxu0 0
    %1673 = vmatpush.bf16.msra.mxu0 0
    %1674 = vmatpush.bf16.msra.mxu0 %v1637
    %1675 = vmatpush.bf16.msra.mxu0 %v1612
    %1676 = vmatmul.bf16.gmra.mxu0 %v1624
    %v1677 = vpop.f32.mrf.mxu0
    %v1678 = vadd.f32 0.0, %v1677
    %v1679 = vpop.f32.mrf.mxu0
    %1680 = vdwg.mxu0
    %1681 = vmatpush.bf16.msra.mxu0 0
    %1682 = vmatpush.bf16.msra.mxu0 0
    %1683 = vmatpush.bf16.msra.mxu0 0
    %1684 = vmatpush.bf16.msra.mxu0 0
    %1685 = vmatpush.bf16.msra.mxu0 0
    %1686 = vmatpush.bf16.msra.mxu0 0
    %1687 = vmatpush.bf16.msra.mxu0 %v1640
    %1688 = vmatpush.bf16.msra.mxu0 %v1613
    %1689 = vmatmul.bf16.gmra.mxu0 %v1624
    %v1690 = vpop.f32.mrf.mxu0
    %v1691 = vadd.f32 0.0, %v1690
    %v1692 = vpop.f32.mrf.mxu0
    %1693 = vdwg.mxu0
    %v1726 = vunpack.c.l.b16 %v1544
    %v1727 = vunpack.c.h.b16 %v1544
    %v1728 = vunpack.c.l.b16 %v1545
    %v1729 = vunpack.c.h.b16 %v1545
    %v1730 = vunpack.c.l.b16 %v1546
    %v1731 = vunpack.c.h.b16 %v1546
    %v1732 = vunpack.c.l.b16 %v1547
    %v1733 = vunpack.c.h.b16 %v1547
    %v1734 = vunpack.c.l.b16 %v1548
    %v1735 = vunpack.c.h.b16 %v1548
    %v1736 = vunpack.c.l.b16 %v1549
    %v1737 = vunpack.c.h.b16 %v1549
    %v1738 = vunpack.c.l.b16 %v1550
    %v1739 = vunpack.c.h.b16 %v1550
    %v1740 = vunpack.c.l.b16 %v1551
    %v1741 = vunpack.c.h.b16 %v1551
    %v1742 = vunpack.c.l.b16 %v1552
    %v1743 = vunpack.c.h.b16 %v1552
    %v1744 = vunpack.c.l.b16 %v1553
    %v1745 = vunpack.c.h.b16 %v1553
    %v1746 = vunpack.c.l.b16 %v1554
    %v1747 = vunpack.c.h.b16 %v1554
    %v1748 = vunpack.c.l.b16 %v1555
    %v1749 = vunpack.c.h.b16 %v1555
    %v1750 = vunpack.c.l.b16 %v1556
    %v1751 = vunpack.c.h.b16 %v1556
    %v1752 = vunpack.c.l.b16 %v1557
    %v1753 = vunpack.c.h.b16 %v1557
    %v1754 = vunpack.c.l.b16 %v1558
    %v1755 = vunpack.c.h.b16 %v1558
    %v1756 = vunpack.c.l.b16 %v1559
    %v1757 = vunpack.c.h.b16 %v1559
    %v1758 = vunpack.c.l.b16 %v1560
    %v1759 = vunpack.c.h.b16 %v1560
    %v1760 = vunpack.c.l.b16 %v1561
    %v1761 = vunpack.c.h.b16 %v1561
    %v1762 = vunpack.c.l.b16 %v1562
    %v1763 = vunpack.c.h.b16 %v1562
    %v1764 = vunpack.c.l.b16 %v1563
    %v1765 = vunpack.c.h.b16 %v1563
    %v1766 = vunpack.c.l.b16 %v1564
    %v1767 = vunpack.c.h.b16 %v1564
    %v1768 = vunpack.c.l.b16 %v1565
    %v1769 = vunpack.c.h.b16 %v1565
    %v1770 = vunpack.c.l.b16 %v1566
    %v1771 = vunpack.c.h.b16 %v1566
    %v1772 = vunpack.c.l.b16 %v1567
    %v1773 = vunpack.c.h.b16 %v1567
    %v1774 = vunpack.c.l.b16 %v1568
    %v1775 = vunpack.c.h.b16 %v1568
    %v1776 = vunpack.c.l.b16 %v1569
    %v1777 = vunpack.c.h.b16 %v1569
    %v1778 = vunpack.c.l.b16 %v1570
    %v1779 = vunpack.c.h.b16 %v1570
    %v1780 = vunpack.c.l.b16 %v1571
    %v1781 = vunpack.c.h.b16 %v1571
    %v1782 = vunpack.c.l.b16 %v1572
    %v1783 = vunpack.c.h.b16 %v1572
    %v1784 = vunpack.c.l.b16 %v1573
    %v1785 = vunpack.c.h.b16 %v1573
    %v1786 = vunpack.c.l.b16 %v1574
    %v1787 = vunpack.c.h.b16 %v1574
    %v1788 = vunpack.c.l.b16 %v1575
    %v1789 = vunpack.c.h.b16 %v1575
    %v1790 = vpack.c.b16 %v1730, %v1726
    %v1791 = vpack.c.b16 %v1731, %v1727
    %v1792 = vpack.c.b16 %v1732, %v1728
    %v1793 = vpack.c.b16 %v1733, %v1729
    %v1794 = vpack.c.b16 %v1738, %v1734
    %v1795 = vpack.c.b16 %v1739, %v1735
    %v1796 = vpack.c.b16 %v1740, %v1736
    %v1797 = vpack.c.b16 %v1741, %v1737
    %v1798 = vpack.c.b16 %v1746, %v1742
    %v1799 = vpack.c.b16 %v1747, %v1743
    %v1800 = vpack.c.b16 %v1748, %v1744
    %v1801 = vpack.c.b16 %v1749, %v1745
    %v1802 = vpack.c.b16 %v1754, %v1750
    %v1803 = vpack.c.b16 %v1755, %v1751
    %v1804 = vpack.c.b16 %v1756, %v1752
    %v1805 = vpack.c.b16 %v1757, %v1753
    %v1806 = vpack.c.b16 %v1762, %v1758
    %v1807 = vpack.c.b16 %v1763, %v1759
    %v1808 = vpack.c.b16 %v1764, %v1760
    %v1809 = vpack.c.b16 %v1765, %v1761
    %v1810 = vpack.c.b16 %v1770, %v1766
    %v1811 = vpack.c.b16 %v1771, %v1767
    %v1812 = vpack.c.b16 %v1772, %v1768
    %v1813 = vpack.c.b16 %v1773, %v1769
    %v1814 = vpack.c.b16 %v1778, %v1774
    %v1815 = vpack.c.b16 %v1779, %v1775
    %v1816 = vpack.c.b16 %v1780, %v1776
    %v1817 = vpack.c.b16 %v1781, %v1777
    %v1818 = vpack.c.b16 %v1786, %v1782
    %v1819 = vpack.c.b16 %v1787, %v1783
    %v1820 = vpack.c.b16 %v1788, %v1784
    %v1821 = vpack.c.b16 %v1789, %v1785
    %1854 = vmatpush.bf16.msra.mxu0 %v1818
    %1855 = vmatpush.bf16.msra.mxu0 %v1814
    %1856 = vmatpush.bf16.msra.mxu0 %v1810
    %1857 = vmatpush.bf16.msra.mxu0 %v1806
    %1858 = vmatpush.bf16.msra.mxu0 %v1802
    %1859 = vmatpush.bf16.msra.mxu0 %v1798
    %1860 = vmatpush.bf16.msra.mxu0 %v1794
    %1861 = vmatpush.bf16.msra.mxu0 %v1790
    %1862 = vmatmul.bf16.gmra.mxu0 %v1543
    %v1863 = vpop.f32.mrf.mxu0
    %v1864 = vadd.f32 %v1652, %v1863
    %v1865 = vpop.f32.mrf.mxu0
    %1866 = vdwg.mxu0
    %1867 = vmatpush.bf16.msra.mxu0 %v1819
    %1868 = vmatpush.bf16.msra.mxu0 %v1815
    %1869 = vmatpush.bf16.msra.mxu0 %v1811
    %1870 = vmatpush.bf16.msra.mxu0 %v1807
    %1871 = vmatpush.bf16.msra.mxu0 %v1803
    %1872 = vmatpush.bf16.msra.mxu0 %v1799
    %1873 = vmatpush.bf16.msra.mxu0 %v1795
    %1874 = vmatpush.bf16.msra.mxu0 %v1791
    %1875 = vmatmul.bf16.gmra.mxu0 %v1543
    %v1876 = vpop.f32.mrf.mxu0
    %v1877 = vadd.f32 %v1665, %v1876
    %v1878 = vpop.f32.mrf.mxu0
    %1879 = vdwg.mxu0
    %1880 = vmatpush.bf16.msra.mxu0 %v1820
    %1881 = vmatpush.bf16.msra.mxu0 %v1816
    %1882 = vmatpush.bf16.msra.mxu0 %v1812
    %1883 = vmatpush.bf16.msra.mxu0 %v1808
    %1884 = vmatpush.bf16.msra.mxu0 %v1804
    %1885 = vmatpush.bf16.msra.mxu0 %v1800
    %1886 = vmatpush.bf16.msra.mxu0 %v1796
    %1887 = vmatpush.bf16.msra.mxu0 %v1792
    %1888 = vmatmul.bf16.gmra.mxu0 %v1543
    %v1889 = vpop.f32.mrf.mxu0
    %v1890 = vadd.f32 %v1678, %v1889
    %v1891 = vpop.f32.mrf.mxu0
    %1892 = vdwg.mxu0
    %1893 = vmatpush.bf16.msra.mxu0 %v1821
    %1894 = vmatpush.bf16.msra.mxu0 %v1817
    %1895 = vmatpush.bf16.msra.mxu0 %v1813
    %1896 = vmatpush.bf16.msra.mxu0 %v1809
    %1897 = vmatpush.bf16.msra.mxu0 %v1805
    %1898 = vmatpush.bf16.msra.mxu0 %v1801
    %1899 = vmatpush.bf16.msra.mxu0 %v1797
    %1900 = vmatpush.bf16.msra.mxu0 %v1793
    %1901 = vmatmul.bf16.gmra.mxu0 %v1543
    %v1902 = vpop.f32.mrf.mxu0
    %v1903 = vadd.f32 %v1691, %v1902
    %v1904 = vpop.f32.mrf.mxu0
    %1905 = vdwg.mxu0
    %v1906 = vld [vmem:[%s10] sm:$0xf]
    %v1908 = vperm.slane %v1906, 0
    %v1909 = vperm.slane %v1906, 1
    %v1910 = vperm.slane %v1906, 2
    %v1911 = vperm.slane %v1906, 3
    %v1916 = vadd.f32 %v1864, %v1908
    %v1917 = vadd.f32 %v1877, %v1909
    %v1918 = vadd.f32 %v1890, %v1910
    %v1919 = vadd.f32 %v1903, %v1911
    %v1920 = vmax.f32 %v1916, 0.0
    %v1921 = vmax.f32 %v1917, 0.0
    %v1922 = vmax.f32 %v1918, 0.0
    %v1923 = vmax.f32 %v1919, 0.0
    %v1924 = vld [vmem:[%s11] sm:$0xf]
    %v1926 = vperm.slane %v1924, 0
    %v1927 = vperm.slane %v1924, 1
    %v1928 = vperm.slane %v1924, 2
    %v1929 = vperm.slane %v1924, 3
    %v1934 = vmul.f32 %v1920, %v1926
    %v1935 = vmul.f32 %v1921, %v1927
    %v1936 = vmul.f32 %v1922, %v1928
    %v1937 = vmul.f32 %v1923, %v1929
    %v1938 = vld [vmem:[%s12] sm:$0xf]
    %v1940 = vperm.slane %v1938, 0
    %v1941 = vperm.slane %v1938, 1
    %v1942 = vperm.slane %v1938, 2
    %v1943 = vperm.slane %v1938, 3
    %v1948 = vadd.f32 %v1934, %v1940
    %v1949 = vadd.f32 %v1935, %v1941
    %v1950 = vadd.f32 %v1936, %v1942
    %v1951 = vadd.f32 %v1937, %v1943
    %v1952 = vpack.c.bf16 %v1948, %v1948
    %v1953 = vpack.c.bf16 %v1949, %v1949
    %v1954 = vpack.c.bf16 %v1950, %v1950
    %v1955 = vpack.c.bf16 %v1951, %v1951
    %v1956 = vld [vmem:[#allocation7] sm:$0xff]
    %v1957 = vld [vmem:[#allocation7 + $0x8] sm:$0xff]
    %v1958 = vld [vmem:[#allocation7 + $0x10] sm:$0xff]
    %v1959 = vld [vmem:[#allocation7 + $0x18] sm:$0xff]
    %v1960 = vld [vmem:[#allocation7 + $0x20] sm:$0xff]
    %v1961 = vld [vmem:[#allocation7 + $0x28] sm:$0xff]
    %v1962 = vld [vmem:[#allocation7 + $0x30] sm:$0xff]
    %v1963 = vld [vmem:[#allocation7 + $0x38] sm:$0xff]
    %v1964 = vld [vmem:[#allocation7 + $0x40] sm:$0xff]
    %v1965 = vld [vmem:[#allocation7 + $0x48] sm:$0xff]
    %v1966 = vld [vmem:[#allocation7 + $0x50] sm:$0xff]
    %v1967 = vld [vmem:[#allocation7 + $0x58] sm:$0xff]
    %v1968 = vld [vmem:[#allocation7 + $0x60] sm:$0xff]
    %v1969 = vld [vmem:[#allocation7 + $0x68] sm:$0xff]
    %v1970 = vld [vmem:[#allocation7 + $0x70] sm:$0xff]
    %v1971 = vld [vmem:[#allocation7 + $0x78] sm:$0xff]
    %v1972 = vld [vmem:[#allocation7 + $0x80] sm:$0xff]
    %v1973 = vld [vmem:[#allocation7 + $0x88] sm:$0xff]
    %v1974 = vld [vmem:[#allocation7 + $0x90] sm:$0xff]
    %v1975 = vld [vmem:[#allocation7 + $0x98] sm:$0xff]
    %v1976 = vld [vmem:[#allocation7 + $0xa0] sm:$0xff]
    %v1977 = vld [vmem:[#allocation7 + $0xa8] sm:$0xff]
    %v1978 = vld [vmem:[#allocation7 + $0xb0] sm:$0xff]
    %v1979 = vld [vmem:[#allocation7 + $0xb8] sm:$0xff]
    %v1980 = vld [vmem:[#allocation7 + $0xc0] sm:$0xff]
    %v1981 = vld [vmem:[#allocation7 + $0xc8] sm:$0xff]
    %v1982 = vld [vmem:[#allocation7 + $0xd0] sm:$0xff]
    %v1983 = vld [vmem:[#allocation7 + $0xd8] sm:$0xff]
    %v1984 = vld [vmem:[#allocation7 + $0xe0] sm:$0xff]
    %v1985 = vld [vmem:[#allocation7 + $0xe8] sm:$0xff]
    %v1986 = vld [vmem:[#allocation7 + $0xf0] sm:$0xff]
    %v1987 = vld [vmem:[#allocation7 + $0xf8] sm:$0xff]
    %v1988 = vld [vmem:[#allocation7 + $0x100] sm:$0xff]
    %v1989 = vld [vmem:[#allocation7 + $0x108] sm:$0xff]
    %v1990 = vld [vmem:[#allocation7 + $0x110] sm:$0xff]
    %v1991 = vld [vmem:[#allocation7 + $0x118] sm:$0xff]
    %v1992 = vld [vmem:[#allocation7 + $0x120] sm:$0xff]
    %v1993 = vld [vmem:[#allocation7 + $0x128] sm:$0xff]
    %v1994 = vld [vmem:[#allocation7 + $0x130] sm:$0xff]
    %v1995 = vld [vmem:[#allocation7 + $0x138] sm:$0xff]
    %v1996 = vld [vmem:[#allocation7 + $0x140] sm:$0xff]
    %v1997 = vld [vmem:[#allocation7 + $0x148] sm:$0xff]
    %v1998 = vld [vmem:[#allocation7 + $0x150] sm:$0xff]
    %v1999 = vld [vmem:[#allocation7 + $0x158] sm:$0xff]
    %v2000 = vld [vmem:[#allocation7 + $0x160] sm:$0xff]
    %v2001 = vld [vmem:[#allocation7 + $0x168] sm:$0xff]
    %v2002 = vld [vmem:[#allocation7 + $0x170] sm:$0xff]
    %v2003 = vld [vmem:[#allocation7 + $0x178] sm:$0xff]
    %v2004 = vld [vmem:[#allocation7 + $0x180] sm:$0xff]
    %v2005 = vld [vmem:[#allocation7 + $0x188] sm:$0xff]
    %v2006 = vld [vmem:[#allocation7 + $0x190] sm:$0xff]
    %v2007 = vld [vmem:[#allocation7 + $0x198] sm:$0xff]
    %v2008 = vld [vmem:[#allocation7 + $0x1a0] sm:$0xff]
    %v2009 = vld [vmem:[#allocation7 + $0x1a8] sm:$0xff]
    %v2010 = vld [vmem:[#allocation7 + $0x1b0] sm:$0xff]
    %v2011 = vld [vmem:[#allocation7 + $0x1b8] sm:$0xff]
    %v2012 = vld [vmem:[#allocation7 + $0x1c0] sm:$0xff]
    %v2013 = vld [vmem:[#allocation7 + $0x1c8] sm:$0xff]
    %v2014 = vld [vmem:[#allocation7 + $0x1d0] sm:$0xff]
    %v2015 = vld [vmem:[#allocation7 + $0x1d8] sm:$0xff]
    %v2016 = vld [vmem:[#allocation7 + $0x1e0] sm:$0xff]
    %v2017 = vld [vmem:[#allocation7 + $0x1e8] sm:$0xff]
    %v2018 = vld [vmem:[#allocation7 + $0x1f0] sm:$0xff]
    %v2019 = vld [vmem:[#allocation7 + $0x1f8] sm:$0xff]
    %v2020 = vld [vmem:[%s14] sm:$0x3]
    %v2022 = vperm.slane %v2020, 0
    %v2023 = vperm.slane %v2020, 1
    %v2090 = vunpack.c.l.b16 %v1956
    %v2091 = vunpack.c.h.b16 %v1956
    %v2092 = vunpack.c.l.b16 %v1957
    %v2093 = vunpack.c.h.b16 %v1957
    %v2094 = vunpack.c.l.b16 %v1958
    %v2095 = vunpack.c.h.b16 %v1958
    %v2096 = vunpack.c.l.b16 %v1959
    %v2097 = vunpack.c.h.b16 %v1959
    %v2098 = vunpack.c.l.b16 %v1960
    %v2099 = vunpack.c.h.b16 %v1960
    %v2100 = vunpack.c.l.b16 %v1961
    %v2101 = vunpack.c.h.b16 %v1961
    %v2102 = vunpack.c.l.b16 %v1962
    %v2103 = vunpack.c.h.b16 %v1962
    %v2104 = vunpack.c.l.b16 %v1963
    %v2105 = vunpack.c.h.b16 %v1963
    %v2106 = vunpack.c.l.b16 %v1964
    %v2107 = vunpack.c.h.b16 %v1964
    %v2108 = vunpack.c.l.b16 %v1965
    %v2109 = vunpack.c.h.b16 %v1965
    %v2110 = vunpack.c.l.b16 %v1966
    %v2111 = vunpack.c.h.b16 %v1966
    %v2112 = vunpack.c.l.b16 %v1967
    %v2113 = vunpack.c.h.b16 %v1967
    %v2114 = vunpack.c.l.b16 %v1968
    %v2115 = vunpack.c.h.b16 %v1968
    %v2116 = vunpack.c.l.b16 %v1969
    %v2117 = vunpack.c.h.b16 %v1969
    %v2118 = vunpack.c.l.b16 %v1970
    %v2119 = vunpack.c.h.b16 %v1970
    %v2120 = vunpack.c.l.b16 %v1971
    %v2121 = vunpack.c.h.b16 %v1971
    %v2122 = vunpack.c.l.b16 %v1972
    %v2123 = vunpack.c.h.b16 %v1972
    %v2124 = vunpack.c.l.b16 %v1973
    %v2125 = vunpack.c.h.b16 %v1973
    %v2126 = vunpack.c.l.b16 %v1974
    %v2127 = vunpack.c.h.b16 %v1974
    %v2128 = vunpack.c.l.b16 %v1975
    %v2129 = vunpack.c.h.b16 %v1975
    %v2130 = vunpack.c.l.b16 %v1976
    %v2131 = vunpack.c.h.b16 %v1976
    %v2132 = vunpack.c.l.b16 %v1977
    %v2133 = vunpack.c.h.b16 %v1977
    %v2134 = vunpack.c.l.b16 %v1978
    %v2135 = vunpack.c.h.b16 %v1978
    %v2136 = vunpack.c.l.b16 %v1979
    %v2137 = vunpack.c.h.b16 %v1979
    %v2138 = vunpack.c.l.b16 %v1980
    %v2139 = vunpack.c.h.b16 %v1980
    %v2140 = vunpack.c.l.b16 %v1981
    %v2141 = vunpack.c.h.b16 %v1981
    %v2142 = vunpack.c.l.b16 %v1982
    %v2143 = vunpack.c.h.b16 %v1982
    %v2144 = vunpack.c.l.b16 %v1983
    %v2145 = vunpack.c.h.b16 %v1983
    %v2146 = vunpack.c.l.b16 %v1984
    %v2147 = vunpack.c.h.b16 %v1984
    %v2148 = vunpack.c.l.b16 %v1985
    %v2149 = vunpack.c.h.b16 %v1985
    %v2150 = vunpack.c.l.b16 %v1986
    %v2151 = vunpack.c.h.b16 %v1986
    %v2152 = vunpack.c.l.b16 %v1987
    %v2153 = vunpack.c.h.b16 %v1987
    %v2154 = vunpack.c.l.b16 %v1988
    %v2155 = vunpack.c.h.b16 %v1988
    %v2156 = vunpack.c.l.b16 %v1989
    %v2157 = vunpack.c.h.b16 %v1989
    %v2158 = vunpack.c.l.b16 %v1990
    %v2159 = vunpack.c.h.b16 %v1990
    %v2160 = vunpack.c.l.b16 %v1991
    %v2161 = vunpack.c.h.b16 %v1991
    %v2162 = vunpack.c.l.b16 %v1992
    %v2163 = vunpack.c.h.b16 %v1992
    %v2164 = vunpack.c.l.b16 %v1993
    %v2165 = vunpack.c.h.b16 %v1993
    %v2166 = vunpack.c.l.b16 %v1994
    %v2167 = vunpack.c.h.b16 %v1994
    %v2168 = vunpack.c.l.b16 %v1995
    %v2169 = vunpack.c.h.b16 %v1995
    %v2170 = vunpack.c.l.b16 %v1996
    %v2171 = vunpack.c.h.b16 %v1996
    %v2172 = vunpack.c.l.b16 %v1997
    %v2173 = vunpack.c.h.b16 %v1997
    %v2174 = vunpack.c.l.b16 %v1998
    %v2175 = vunpack.c.h.b16 %v1998
    %v2176 = vunpack.c.l.b16 %v1999
    %v2177 = vunpack.c.h.b16 %v1999
    %v2178 = vunpack.c.l.b16 %v2000
    %v2179 = vunpack.c.h.b16 %v2000
    %v2180 = vunpack.c.l.b16 %v2001
    %v2181 = vunpack.c.h.b16 %v2001
    %v2182 = vunpack.c.l.b16 %v2002
    %v2183 = vunpack.c.h.b16 %v2002
    %v2184 = vunpack.c.l.b16 %v2003
    %v2185 = vunpack.c.h.b16 %v2003
    %v2186 = vunpack.c.l.b16 %v2004
    %v2187 = vunpack.c.h.b16 %v2004
    %v2188 = vunpack.c.l.b16 %v2005
    %v2189 = vunpack.c.h.b16 %v2005
    %v2190 = vunpack.c.l.b16 %v2006
    %v2191 = vunpack.c.h.b16 %v2006
    %v2192 = vunpack.c.l.b16 %v2007
    %v2193 = vunpack.c.h.b16 %v2007
    %v2194 = vunpack.c.l.b16 %v2008
    %v2195 = vunpack.c.h.b16 %v2008
    %v2196 = vunpack.c.l.b16 %v2009
    %v2197 = vunpack.c.h.b16 %v2009
    %v2198 = vunpack.c.l.b16 %v2010
    %v2199 = vunpack.c.h.b16 %v2010
    %v2200 = vunpack.c.l.b16 %v2011
    %v2201 = vunpack.c.h.b16 %v2011
    %v2202 = vunpack.c.l.b16 %v2012
    %v2203 = vunpack.c.h.b16 %v2012
    %v2204 = vunpack.c.l.b16 %v2013
    %v2205 = vunpack.c.h.b16 %v2013
    %v2206 = vunpack.c.l.b16 %v2014
    %v2207 = vunpack.c.h.b16 %v2014
    %v2208 = vunpack.c.l.b16 %v2015
    %v2209 = vunpack.c.h.b16 %v2015
    %v2210 = vunpack.c.l.b16 %v2016
    %v2211 = vunpack.c.h.b16 %v2016
    %v2212 = vunpack.c.l.b16 %v2017
    %v2213 = vunpack.c.h.b16 %v2017
    %v2214 = vunpack.c.l.b16 %v2018
    %v2215 = vunpack.c.h.b16 %v2018
    %v2216 = vunpack.c.l.b16 %v2019
    %v2217 = vunpack.c.h.b16 %v2019
    %v2218 = vpack.c.b16 %v2092, %v2090
    %v2219 = vpack.c.b16 %v2093, %v2091
    %v2220 = vpack.c.b16 %v2096, %v2094
    %v2221 = vpack.c.b16 %v2097, %v2095
    %v2222 = vpack.c.b16 %v2100, %v2098
    %v2223 = vpack.c.b16 %v2101, %v2099
    %v2224 = vpack.c.b16 %v2104, %v2102
    %v2225 = vpack.c.b16 %v2105, %v2103
    %v2226 = vpack.c.b16 %v2108, %v2106
    %v2227 = vpack.c.b16 %v2109, %v2107
    %v2228 = vpack.c.b16 %v2112, %v2110
    %v2229 = vpack.c.b16 %v2113, %v2111
    %v2230 = vpack.c.b16 %v2116, %v2114
    %v2231 = vpack.c.b16 %v2117, %v2115
    %v2232 = vpack.c.b16 %v2120, %v2118
    %v2233 = vpack.c.b16 %v2121, %v2119
    %v2234 = vpack.c.b16 %v2124, %v2122
    %v2235 = vpack.c.b16 %v2125, %v2123
    %v2236 = vpack.c.b16 %v2128, %v2126
    %v2237 = vpack.c.b16 %v2129, %v2127
    %v2238 = vpack.c.b16 %v2132, %v2130
    %v2239 = vpack.c.b16 %v2133, %v2131
    %v2240 = vpack.c.b16 %v2136, %v2134
    %v2241 = vpack.c.b16 %v2137, %v2135
    %v2242 = vpack.c.b16 %v2140, %v2138
    %v2243 = vpack.c.b16 %v2141, %v2139
    %v2244 = vpack.c.b16 %v2144, %v2142
    %v2245 = vpack.c.b16 %v2145, %v2143
    %v2246 = vpack.c.b16 %v2148, %v2146
    %v2247 = vpack.c.b16 %v2149, %v2147
    %v2248 = vpack.c.b16 %v2152, %v2150
    %v2249 = vpack.c.b16 %v2153, %v2151
    %v2250 = vpack.c.b16 %v2156, %v2154
    %v2251 = vpack.c.b16 %v2157, %v2155
    %v2252 = vpack.c.b16 %v2160, %v2158
    %v2253 = vpack.c.b16 %v2161, %v2159
    %v2254 = vpack.c.b16 %v2164, %v2162
    %v2255 = vpack.c.b16 %v2165, %v2163
    %v2256 = vpack.c.b16 %v2168, %v2166
    %v2257 = vpack.c.b16 %v2169, %v2167
    %v2258 = vpack.c.b16 %v2172, %v2170
    %v2259 = vpack.c.b16 %v2173, %v2171
    %v2260 = vpack.c.b16 %v2176, %v2174
    %v2261 = vpack.c.b16 %v2177, %v2175
    %v2262 = vpack.c.b16 %v2180, %v2178
    %v2263 = vpack.c.b16 %v2181, %v2179
    %v2264 = vpack.c.b16 %v2184, %v2182
    %v2265 = vpack.c.b16 %v2185, %v2183
    %v2266 = vpack.c.b16 %v2188, %v2186
    %v2267 = vpack.c.b16 %v2189, %v2187
    %v2268 = vpack.c.b16 %v2192, %v2190
    %v2269 = vpack.c.b16 %v2193, %v2191
    %v2270 = vpack.c.b16 %v2196, %v2194
    %v2271 = vpack.c.b16 %v2197, %v2195
    %v2272 = vpack.c.b16 %v2200, %v2198
    %v2273 = vpack.c.b16 %v2201, %v2199
    %v2274 = vpack.c.b16 %v2204, %v2202
    %v2275 = vpack.c.b16 %v2205, %v2203
    %v2276 = vpack.c.b16 %v2208, %v2206
    %v2277 = vpack.c.b16 %v2209, %v2207
    %v2278 = vpack.c.b16 %v2212, %v2210
    %v2279 = vpack.c.b16 %v2213, %v2211
    %v2280 = vpack.c.b16 %v2216, %v2214
    %v2281 = vpack.c.b16 %v2217, %v2215
    %2346 = vmatpush.bf16.msra.mxu0 %v2232
    %2347 = vmatpush.bf16.msra.mxu0 %v2230
    %2348 = vmatpush.bf16.msra.mxu0 %v2228
    %2349 = vmatpush.bf16.msra.mxu0 %v2226
    %2350 = vmatpush.bf16.msra.mxu0 %v2224
    %2351 = vmatpush.bf16.msra.mxu0 %v2222
    %2352 = vmatpush.bf16.msra.mxu0 %v2220
    %2353 = vmatpush.bf16.msra.mxu0 %v2218
    %2354 = vmatmul.bf16.gmra.mxu0 %v1952
    %v2355 = vpop.f32.mrf.mxu0
    %v2356 = vadd.f32 %v2022, %v2355
    %v2357 = vpop.f32.mrf.mxu0
    %2358 = vdwg.mxu0
    %2359 = vmatpush.bf16.msra.mxu0 %v2248
    %2360 = vmatpush.bf16.msra.mxu0 %v2246
    %2361 = vmatpush.bf16.msra.mxu0 %v2244
    %2362 = vmatpush.bf16.msra.mxu0 %v2242
    %2363 = vmatpush.bf16.msra.mxu0 %v2240
    %2364 = vmatpush.bf16.msra.mxu0 %v2238
    %2365 = vmatpush.bf16.msra.mxu0 %v2236
    %2366 = vmatpush.bf16.msra.mxu0 %v2234
    %2367 = vmatmul.bf16.gmra.mxu0 %v1953
    %v2368 = vpop.f32.mrf.mxu0
    %v2369 = vadd.f32 %v2356, %v2368
    %v2370 = vpop.f32.mrf.mxu0
    %2371 = vdwg.mxu0
    %2372 = vmatpush.bf16.msra.mxu0 %v2264
    %2373 = vmatpush.bf16.msra.mxu0 %v2262
    %2374 = vmatpush.bf16.msra.mxu0 %v2260
    %2375 = vmatpush.bf16.msra.mxu0 %v2258
    %2376 = vmatpush.bf16.msra.mxu0 %v2256
    %2377 = vmatpush.bf16.msra.mxu0 %v2254
    %2378 = vmatpush.bf16.msra.mxu0 %v2252
    %2379 = vmatpush.bf16.msra.mxu0 %v2250
    %2380 = vmatmul.bf16.gmra.mxu0 %v1954
    %v2381 = vpop.f32.mrf.mxu0
    %v2382 = vadd.f32 %v2369, %v2381
    %v2383 = vpop.f32.mrf.mxu0
    %2384 = vdwg.mxu0
    %2385 = vmatpush.bf16.msra.mxu0 %v2280
    %2386 = vmatpush.bf16.msra.mxu0 %v2278
    %2387 = vmatpush.bf16.msra.mxu0 %v2276
    %2388 = vmatpush.bf16.msra.mxu0 %v2274
    %2389 = vmatpush.bf16.msra.mxu0 %v2272
    %2390 = vmatpush.bf16.msra.mxu0 %v2270
    %2391 = vmatpush.bf16.msra.mxu0 %v2268
    %2392 = vmatpush.bf16.msra.mxu0 %v2266
    %2393 = vmatmul.bf16.gmra.mxu0 %v1955
    %v2394 = vpop.f32.mrf.mxu0
    %v2395 = vadd.f32 %v2382, %v2394
    %v2396 = vpop.f32.mrf.mxu0
    %2397 = vdwg.mxu0
    %2398 = vmatpush.bf16.msra.mxu0 %v2233
    %2399 = vmatpush.bf16.msra.mxu0 %v2231
    %2400 = vmatpush.bf16.msra.mxu0 %v2229
    %2401 = vmatpush.bf16.msra.mxu0 %v2227
    %2402 = vmatpush.bf16.msra.mxu0 %v2225
    %2403 = vmatpush.bf16.msra.mxu0 %v2223
    %2404 = vmatpush.bf16.msra.mxu0 %v2221
    %2405 = vmatpush.bf16.msra.mxu0 %v2219
    %2406 = vmatmul.bf16.gmra.mxu0 %v1952
    %v2407 = vpop.f32.mrf.mxu0
    %v2408 = vadd.f32 %v2023, %v2407
    %v2409 = vpop.f32.mrf.mxu0
    %2410 = vdwg.mxu0
    %2411 = vmatpush.bf16.msra.mxu0 %v2249
    %2412 = vmatpush.bf16.msra.mxu0 %v2247
    %2413 = vmatpush.bf16.msra.mxu0 %v2245
    %2414 = vmatpush.bf16.msra.mxu0 %v2243
    %2415 = vmatpush.bf16.msra.mxu0 %v2241
    %2416 = vmatpush.bf16.msra.mxu0 %v2239
    %2417 = vmatpush.bf16.msra.mxu0 %v2237
    %2418 = vmatpush.bf16.msra.mxu0 %v2235
    %2419 = vmatmul.bf16.gmra.mxu0 %v1953
    %v2420 = vpop.f32.mrf.mxu0
    %v2421 = vadd.f32 %v2408, %v2420
    %v2422 = vpop.f32.mrf.mxu0
    %2423 = vdwg.mxu0
    %2424 = vmatpush.bf16.msra.mxu0 %v2265
    %2425 = vmatpush.bf16.msra.mxu0 %v2263
    %2426 = vmatpush.bf16.msra.mxu0 %v2261
    %2427 = vmatpush.bf16.msra.mxu0 %v2259
    %2428 = vmatpush.bf16.msra.mxu0 %v2257
    %2429 = vmatpush.bf16.msra.mxu0 %v2255
    %2430 = vmatpush.bf16.msra.mxu0 %v2253
    %2431 = vmatpush.bf16.msra.mxu0 %v2251
    %2432 = vmatmul.bf16.gmra.mxu0 %v1954
    %v2433 = vpop.f32.mrf.mxu0
    %v2434 = vadd.f32 %v2421, %v2433
    %v2435 = vpop.f32.mrf.mxu0
    %2436 = vdwg.mxu0
    %2437 = vmatpush.bf16.msra.mxu0 %v2281
    %2438 = vmatpush.bf16.msra.mxu0 %v2279
    %2439 = vmatpush.bf16.msra.mxu0 %v2277
    %2440 = vmatpush.bf16.msra.mxu0 %v2275
    %2441 = vmatpush.bf16.msra.mxu0 %v2273
    %2442 = vmatpush.bf16.msra.mxu0 %v2271
    %2443 = vmatpush.bf16.msra.mxu0 %v2269
    %2444 = vmatpush.bf16.msra.mxu0 %v2267
    %2445 = vmatmul.bf16.gmra.mxu0 %v1955
    %v2446 = vpop.f32.mrf.mxu0
    %v2447 = vadd.f32 %v2434, %v2446
    %v2448 = vpop.f32.mrf.mxu0
    %2449 = vdwg.mxu0
    %v2450 = vmax.f32 %v2395, 0.0
    %v2451 = vmax.f32 %v2447, 0.0
    %v2452 = vld [vmem:[%s15] sm:$0x3]
    %v2454 = vperm.slane %v2452, 0
    %v2455 = vperm.slane %v2452, 1
    %v2458 = vmul.f32 %v2450, %v2454
    %v2459 = vmul.f32 %v2451, %v2455
    %v2460 = vld [vmem:[%s16] sm:$0x3]
    %v2462 = vperm.slane %v2460, 0
    %v2463 = vperm.slane %v2460, 1
    %v2466 = vadd.f32 %v2458, %v2462
    %v2467 = vadd.f32 %v2459, %v2463
    %v2468 = vpack.c.bf16 %v2466, %v2466
    %v2469 = vpack.c.bf16 %v2467, %v2467
    %v2470 = vld [vmem:[#allocation8] sm:$0xf]
    %v2471 = vld [vmem:[#allocation8 + $0x4] sm:$0xf]
    %v2472 = vld [vmem:[#allocation8 + $0x8] sm:$0xf]
    %v2473 = vld [vmem:[#allocation8 + $0xc] sm:$0xf]
    %v2474 = vld [vmem:[#allocation8 + $0x10] sm:$0xf]
    %v2475 = vld [vmem:[#allocation8 + $0x14] sm:$0xf]
    %v2476 = vld [vmem:[#allocation8 + $0x18] sm:$0xf]
    %v2477 = vld [vmem:[#allocation8 + $0x1c] sm:$0xf]
    %v2478 = vld [vmem:[#allocation8 + $0x20] sm:$0xf]
    %v2479 = vld [vmem:[#allocation8 + $0x24] sm:$0xf]
    %v2480 = vld [vmem:[#allocation8 + $0x28] sm:$0xf]
    %v2481 = vld [vmem:[#allocation8 + $0x2c] sm:$0xf]
    %v2482 = vld [vmem:[#allocation8 + $0x30] sm:$0xf]
    %v2483 = vld [vmem:[#allocation8 + $0x34] sm:$0xf]
    %v2484 = vld [vmem:[#allocation8 + $0x38] sm:$0xf]
    %v2485 = vld [vmem:[#allocation8 + $0x3c] sm:$0xf]
    %v2486 = vld [vmem:[#allocation8 + $0x40] sm:$0xf]
    %v2487 = vld [vmem:[#allocation8 + $0x44] sm:$0xf]
    %v2488 = vld [vmem:[#allocation8 + $0x48] sm:$0xf]
    %v2489 = vld [vmem:[#allocation8 + $0x4c] sm:$0xf]
    %v2490 = vld [vmem:[#allocation8 + $0x50] sm:$0xf]
    %v2491 = vld [vmem:[#allocation8 + $0x54] sm:$0xf]
    %v2492 = vld [vmem:[#allocation8 + $0x58] sm:$0xf]
    %v2493 = vld [vmem:[#allocation8 + $0x5c] sm:$0xf]
    %v2494 = vld [vmem:[#allocation8 + $0x60] sm:$0xf]
    %v2495 = vld [vmem:[#allocation8 + $0x64] sm:$0xf]
    %v2496 = vld [vmem:[#allocation8 + $0x68] sm:$0xf]
    %v2497 = vld [vmem:[#allocation8 + $0x6c] sm:$0xf]
    %v2498 = vld [vmem:[#allocation8 + $0x70] sm:$0xf]
    %v2499 = vld [vmem:[#allocation8 + $0x74] sm:$0xf]
    %v2500 = vld [vmem:[#allocation8 + $0x78] sm:$0xf]
    %v2501 = vld [vmem:[#allocation8 + $0x7c] sm:$0xf]
    %v2502 = vld [vmem:[%s18] sm:$0x1]
    %v2504 = vperm.slane %v2502, 0
    %v2538 = vunpack.c.l.b16 %v2470
    %v2539 = vunpack.c.l.b16 %v2471
    %v2540 = vunpack.c.l.b16 %v2472
    %v2541 = vunpack.c.l.b16 %v2473
    %v2542 = vunpack.c.l.b16 %v2474
    %v2543 = vunpack.c.l.b16 %v2475
    %v2544 = vunpack.c.l.b16 %v2476
    %v2545 = vunpack.c.l.b16 %v2477
    %v2546 = vunpack.c.l.b16 %v2478
    %v2547 = vunpack.c.l.b16 %v2479
    %v2548 = vunpack.c.l.b16 %v2480
    %v2549 = vunpack.c.l.b16 %v2481
    %v2550 = vunpack.c.l.b16 %v2482
    %v2551 = vunpack.c.l.b16 %v2483
    %v2552 = vunpack.c.l.b16 %v2484
    %v2553 = vunpack.c.l.b16 %v2485
    %v2554 = vunpack.c.l.b16 %v2486
    %v2555 = vunpack.c.l.b16 %v2487
    %v2556 = vunpack.c.l.b16 %v2488
    %v2557 = vunpack.c.l.b16 %v2489
    %v2558 = vunpack.c.l.b16 %v2490
    %v2559 = vunpack.c.l.b16 %v2491
    %v2560 = vunpack.c.l.b16 %v2492
    %v2561 = vunpack.c.l.b16 %v2493
    %v2562 = vunpack.c.l.b16 %v2494
    %v2563 = vunpack.c.l.b16 %v2495
    %v2564 = vunpack.c.l.b16 %v2496
    %v2565 = vunpack.c.l.b16 %v2497
    %v2566 = vunpack.c.l.b16 %v2498
    %v2567 = vunpack.c.l.b16 %v2499
    %v2568 = vunpack.c.l.b16 %v2500
    %v2569 = vunpack.c.l.b16 %v2501
    %v2570 = vpack.c.b16 %v2539, %v2538
    %v2571 = vpack.c.b16 %v2541, %v2540
    %v2572 = vpack.c.b16 %v2543, %v2542
    %v2573 = vpack.c.b16 %v2545, %v2544
    %v2574 = vpack.c.b16 %v2547, %v2546
    %v2575 = vpack.c.b16 %v2549, %v2548
    %v2576 = vpack.c.b16 %v2551, %v2550
    %v2577 = vpack.c.b16 %v2553, %v2552
    %v2578 = vpack.c.b16 %v2555, %v2554
    %v2579 = vpack.c.b16 %v2557, %v2556
    %v2580 = vpack.c.b16 %v2559, %v2558
    %v2581 = vpack.c.b16 %v2561, %v2560
    %v2582 = vpack.c.b16 %v2563, %v2562
    %v2583 = vpack.c.b16 %v2565, %v2564
    %v2584 = vpack.c.b16 %v2567, %v2566
    %v2585 = vpack.c.b16 %v2569, %v2568
    %2602 = vmatpush.bf16.msra.mxu0 %v2577
    %2603 = vmatpush.bf16.msra.mxu0 %v2576
    %2604 = vmatpush.bf16.msra.mxu0 %v2575
    %2605 = vmatpush.bf16.msra.mxu0 %v2574
    %2606 = vmatpush.bf16.msra.mxu0 %v2573
    %2607 = vmatpush.bf16.msra.mxu0 %v2572
    %2608 = vmatpush.bf16.msra.mxu0 %v2571
    %2609 = vmatpush.bf16.msra.mxu0 %v2570
    %2610 = vmatmul.bf16.gmra.mxu0 %v2468
    %v2611 = vpop.f32.mrf.mxu0
    %v2612 = vadd.f32 %v2504, %v2611
    %v2613 = vpop.f32.mrf.mxu0
    %2614 = vdwg.mxu0
    %2615 = vmatpush.bf16.msra.mxu0 %v2585
    %2616 = vmatpush.bf16.msra.mxu0 %v2584
    %2617 = vmatpush.bf16.msra.mxu0 %v2583
    %2618 = vmatpush.bf16.msra.mxu0 %v2582
    %2619 = vmatpush.bf16.msra.mxu0 %v2581
    %2620 = vmatpush.bf16.msra.mxu0 %v2580
    %2621 = vmatpush.bf16.msra.mxu0 %v2579
    %2622 = vmatpush.bf16.msra.mxu0 %v2578
    %2623 = vmatmul.bf16.gmra.mxu0 %v2469
    %v2624 = vpop.f32.mrf.mxu0
    %v2625 = vadd.f32 %v2612, %v2624
    %v2626 = vpop.f32.mrf.mxu0
    %2627 = vdwg.mxu0
    %v2628 = vmax.f32 %v2625, 0.0
    %v2629 = vld [vmem:[%s19] sm:$0x1]
    %v2631 = vperm.slane %v2629, 0
    %v2633 = vmul.f32 %v2628, %v2631
    %v2634 = vld [vmem:[%s20] sm:$0x1]
    %v2636 = vperm.slane %v2634, 0
    %v2638 = vadd.f32 %v2633, %v2636
    %v2639 = vpack.c.bf16 %v2638, %v2638
    %v2640 = vld [vmem:[%s21] sm:$0xf]
    %v2641 = vld [vmem:[%s21 + $0x4] sm:$0xf]
    %v2642 = vld [vmem:[%s21 + $0x8] sm:$0xf]
    %v2643 = vld [vmem:[%s21 + $0xc] sm:$0xf]
    %v2644 = vld [vmem:[%s21 + $0x10] sm:$0xf]
    %v2645 = vld [vmem:[%s21 + $0x14] sm:$0xf]
    %v2646 = vld [vmem:[%s21 + $0x18] sm:$0xf]
    %v2647 = vld [vmem:[%s21 + $0x1c] sm:$0xf]
    %v2648 = vld [vmem:[%s21 + $0x20] sm:$0xf]
    %v2649 = vld [vmem:[%s21 + $0x24] sm:$0xf]
    %v2650 = vld [vmem:[%s21 + $0x28] sm:$0xf]
    %v2651 = vld [vmem:[%s21 + $0x2c] sm:$0xf]
    %v2652 = vld [vmem:[%s21 + $0x30] sm:$0xf]
    %v2653 = vld [vmem:[%s21 + $0x34] sm:$0xf]
    %v2654 = vld [vmem:[%s21 + $0x38] sm:$0xf]
    %v2655 = vld [vmem:[%s21 + $0x3c] sm:$0xf]
    %v2656 = vld [vmem:[%s22] sm:$0x1]
    %v2658 = vperm.slane %v2656, 0
    %v2676 = vunpack.c.l.b16 %v2640
    %v2677 = vunpack.c.l.b16 %v2641
    %v2678 = vunpack.c.l.b16 %v2642
    %v2679 = vunpack.c.l.b16 %v2643
    %v2680 = vunpack.c.l.b16 %v2644
    %v2681 = vunpack.c.l.b16 %v2645
    %v2682 = vunpack.c.l.b16 %v2646
    %v2683 = vunpack.c.l.b16 %v2647
    %v2684 = vunpack.c.l.b16 %v2648
    %v2685 = vunpack.c.l.b16 %v2649
    %v2686 = vunpack.c.l.b16 %v2650
    %v2687 = vunpack.c.l.b16 %v2651
    %v2688 = vunpack.c.l.b16 %v2652
    %v2689 = vunpack.c.l.b16 %v2653
    %v2690 = vunpack.c.l.b16 %v2654
    %v2691 = vunpack.c.l.b16 %v2655
    %v2692 = vpack.c.b16 %v2677, %v2676
    %v2693 = vpack.c.b16 %v2679, %v2678
    %v2694 = vpack.c.b16 %v2681, %v2680
    %v2695 = vpack.c.b16 %v2683, %v2682
    %v2696 = vpack.c.b16 %v2685, %v2684
    %v2697 = vpack.c.b16 %v2687, %v2686
    %v2698 = vpack.c.b16 %v2689, %v2688
    %v2699 = vpack.c.b16 %v2691, %v2690
    %2708 = vmatpush.bf16.msra.mxu0 %v2699
    %2709 = vmatpush.bf16.msra.mxu0 %v2698
    %2710 = vmatpush.bf16.msra.mxu0 %v2697
    %2711 = vmatpush.bf16.msra.mxu0 %v2696
    %2712 = vmatpush.bf16.msra.mxu0 %v2695
    %2713 = vmatpush.bf16.msra.mxu0 %v2694
    %2714 = vmatpush.bf16.msra.mxu0 %v2693
    %2715 = vmatpush.bf16.msra.mxu0 %v2692
    %2716 = vmatmul.bf16.gmra.mxu0 %v2639
    %v2717 = vpop.f32.mrf.mxu0
    %v2718 = vadd.f32 %v2658, %v2717
    %v2719 = vpop.f32.mrf.mxu0
    %2720 = vdwg.mxu0
    %v2721 = vmax.f32 %v2718, 0.0
    %v2722 = vld [vmem:[%s23] sm:$0x1]
    %v2724 = vperm.slane %v2722, 0
    %v2726 = vmul.f32 %v2721, %v2724
    %v2727 = vld [vmem:[%s24] sm:$0x1]
    %v2729 = vperm.slane %v2727, 0
    %v2731 = vadd.f32 %v2726, %v2729
    %v2732 = vpack.c.bf16 %v2731, %v2731
    %v2733 = vld [vmem:[%s25] sm:$0xf]
    %v2734 = vld [vmem:[%s25 + $0x4] sm:$0xf]
    %v2735 = vld [vmem:[%s25 + $0x8] sm:$0xf]
    %v2736 = vld [vmem:[%s25 + $0xc] sm:$0xf]
    %v2737 = vld [vmem:[%s25 + $0x10] sm:$0xf]
    %v2738 = vld [vmem:[%s25 + $0x14] sm:$0xf]
    %v2739 = vld [vmem:[%s25 + $0x18] sm:$0xf]
    %v2740 = vld [vmem:[%s25 + $0x1c] sm:$0xf]
    %v2741 = vld [vmem:[%s26] sm:$0x1]
    %v2743 = vperm.slane %v2741, 0
    %v2753 = vunpack.c.l.b16 %v2733
    %v2754 = vunpack.c.l.b16 %v2734
    %v2755 = vunpack.c.l.b16 %v2735
    %v2756 = vunpack.c.l.b16 %v2736
    %v2757 = vunpack.c.l.b16 %v2737
    %v2758 = vunpack.c.l.b16 %v2738
    %v2759 = vunpack.c.l.b16 %v2739
    %v2760 = vunpack.c.l.b16 %v2740
    %v2761 = vpack.c.b16 %v2754, %v2753
    %v2762 = vpack.c.b16 %v2756, %v2755
    %v2763 = vpack.c.b16 %v2758, %v2757
    %v2764 = vpack.c.b16 %v2760, %v2759
    %vm2769 = vcmask 523264
    %v2771 = vsel %vm2769, %v2732, 0
    %2773 = vmatpush.bf16.msra.mxu0 0
    %2774 = vmatpush.bf16.msra.mxu0 0
    %2775 = vmatpush.bf16.msra.mxu0 0
    %2776 = vmatpush.bf16.msra.mxu0 0
    %2777 = vmatpush.bf16.msra.mxu0 %v2764
    %2778 = vmatpush.bf16.msra.mxu0 %v2763
    %2779 = vmatpush.bf16.msra.mxu0 %v2762
    %2780 = vmatpush.bf16.msra.mxu0 %v2761
    %2781 = vmatmul.bf16.gmra.mxu0 %v2771
    %v2782 = vpop.f32.mrf.mxu0
    %v2783 = vadd.f32 %v2743, %v2782
    %v2784 = vpop.f32.mrf.mxu0
    %2785 = vdwg.mxu0
    %vm2786 = vcmask 109568
    %v2787 = vsel %vm2786, %v2783, -inf
    %2788 = vmax.xlane.f32.xlu0 %v2787
    %v2789 = vpop.xlane.xlu0 %2788
    %v2790 = vsub.f32 %v2783, %v2789
    %v2791 = vmul.f32 %v2790, 1.442695
    %v2792 = vpow.pop %v2791
    %v2793 = vsel %vm2786, %v2792, 0.0
    %2794 = vadd.xlane.f32.xlu0 %v2793
    %v2795 = vpop.xlane.xlu0 %2794
    %v2796 = vrcp.pop %v2795
    %v2797 = vmul.f32 %v2792, %v2796
    %2798 = vst.msk [vmem:[#allocation10] sm:$0xf] %vm2786, %v2797
    // Predicated region
    $region126: #{net_forward.1} parent=1 // pred_check
      _
    $region127: #{net_forward.1} parent=1 // pred_check_branch
      %2800 = sbr.rel (0) target = $region129
    $region128: #{net_forward.1} parent=1 // pred_region
      %2802 = vsyncadd [#allocation4], 0
      %s2804 = sshll.u32 [#allocation10], 4
      %s2805 = int_to_ptr.vmem [resolvable:$true] %s2804
      %s2806 = sshll.u32 %s27, 4
      %s2807 = int_to_ptr.hbm [resolvable:$true] %s2806
      %2809 = dma.vmem_to_hbm [thread:$0]  %s2805, 64, %s2807, [#allocation4]
    $region129: #{net_forward.1} parent=1 // pred_fallthru
      _
    // Predicated region
    $region130: #{net_forward.1} parent=1 // pred_check
      _
    $region131: #{net_forward.1} parent=1 // pred_check_branch
      %2811 = sbr.rel (0) target = $region133
    $region132: #{net_forward.1} parent=1 // pred_region
      %2813 = dma.done [#allocation4], 64
    $region133: #{net_forward.1} parent=1 // pred_fallthru
      _
    %2814 = vsyncpa [#allocation3], 1
    %2815 = vsyncpa [#allocation6], 1
    %2816 = vsyncpa [#allocation9], 1
    %2817 = vsyncpa [#allocation4], 1

</llo_original>
